<compile_context>
chip_gen: v7x
topology: tpu7x:2x2x1
jax: 0.10.0
libtpu: 0.0.40
codegen_flags: <defaults>
</compile_context>

<pallas_src>
import jax
import jax.numpy as jnp
from jax.experimental import pallas as pl
from jax.experimental.pallas import tpu as pltpu


TILE_M = 256  # multiple of 8; bf16 patch tile + f32 out tile fit easily in VMEM


def _round_up(x, m):
    return (x + m - 1) // m * m


# ---------------------------------------------------------------------------
# Pallas kernels
# ---------------------------------------------------------------------------

def _conv_bn_relu_kernel(p_ref, w_ref, scale_ref, shift_ref, o_ref):
    """One (TILE_M, Kp) x (Kp, N) MXU tile of im2col conv + BN(affine) + ReLU.

    p_ref:     (TILE_M, Kp)  bf16 im2col patches tile (M = B*OH*OW, K padded to 128)
    w_ref:     (Kp, N)       bf16 reshaped conv weights (N = Cout)
    scale_ref: (1, N)        f32  gamma / sqrt(running_var + eps)
    shift_ref: (1, N)        f32  beta + (conv_bias - running_mean) * scale
    o_ref:     (TILE_M, N)   f32
    """
    y = jnp.dot(p_ref[...], w_ref[...], preferred_element_type=jnp.float32)
    y = y * scale_ref[...] + shift_ref[...]
    o_ref[...] = jnp.maximum(y, 0.0)


def _conv3_head_kernel(p_ref, w_ref, scale_ref, shift_ref, pool_ref,
                       hw_ref, hb_ref, o_ref, pooled_acc):
    """conv3 + BN + ReLU fused with AdaptiveAvgPool2d(1) + Flatten +
    Dropout(eval = identity) + Linear.

    Each grid step computes a (TILE_M, C) tile of conv3 activations and folds
    it into a (B, C) pooled accumulator with an MXU matmul against a
    (B, TILE_M) pooling-matrix tile (1/S on this batch's valid rows, 0 on the
    M-padding rows).  The last grid step applies the (C, O) linear head.
    """
    i = pl.program_id(0)

    @pl.when(i == 0)
    def _():
        pooled_acc[...] = jnp.zeros_like(pooled_acc)

    y = jnp.dot(p_ref[...], w_ref[...], preferred_element_type=jnp.float32)
    y = jnp.maximum(y * scale_ref[...] + shift_ref[...], 0.0)
    pooled_acc[...] += jnp.dot(pool_ref[...], y,
                               preferred_element_type=jnp.float32)

    @pl.when(i == pl.num_programs(0) - 1)
    def _():
        o_ref[...] = (jnp.dot(pooled_acc[...], hw_ref[...],
                              preferred_element_type=jnp.float32)
                      + hb_ref[...])


# ---------------------------------------------------------------------------
# pallas_call wrappers
# ---------------------------------------------------------------------------

def conv_bn_relu(patches, w2d, scale, shift, *, tile_m=TILE_M):
    Mp, Kp = patches.shape
    _, N = w2d.shape
    grid_m = Mp // tile_m
    cost = pl.CostEstimate(
        flops=2 * Mp * Kp * N,
        transcendentals=0,
        bytes_accessed=patches.size * 2 + w2d.size * 2 + Mp * N * 4,
    )
    return pl.pallas_call(
        _conv_bn_relu_kernel,
        out_shape=jax.ShapeDtypeStruct((Mp, N), jnp.float32),
        grid=(grid_m,),
        in_specs=[
            pl.BlockSpec((tile_m, Kp), lambda i: (i, 0)),
            pl.BlockSpec((Kp, N), lambda i: (0, 0)),
            pl.BlockSpec((1, N), lambda i: (0, 0)),
            pl.BlockSpec((1, N), lambda i: (0, 0)),
        ],
        out_specs=pl.BlockSpec((tile_m, N), lambda i: (i, 0)),
        compiler_params=pltpu.CompilerParams(
            dimension_semantics=("parallel",)),
        cost_estimate=cost,
    )(patches, w2d, scale, shift)


def conv3_head(patches, w2d, scale, shift, pool_mat, head_w, head_b,
               *, tile_m=TILE_M):
    Mp, Kp = patches.shape
    _, N = w2d.shape
    B = pool_mat.shape[0]
    O = head_w.shape[1]
    grid_m = Mp // tile_m
    cost = pl.CostEstimate(
        flops=2 * Mp * Kp * N + 2 * B * Mp * N + 2 * B * N * O,
        transcendentals=0,
        bytes_accessed=patches.size * 2 + w2d.size * 2
        + pool_mat.size * 4 + B * O * 4,
    )
    return pl.pallas_call(
        _conv3_head_kernel,
        out_shape=jax.ShapeDtypeStruct((B, O), jnp.float32),
        grid=(grid_m,),
        in_specs=[
            pl.BlockSpec((tile_m, Kp), lambda i: (i, 0)),
            pl.BlockSpec((Kp, N), lambda i: (0, 0)),
            pl.BlockSpec((1, N), lambda i: (0, 0)),
            pl.BlockSpec((1, N), lambda i: (0, 0)),
            pl.BlockSpec((B, tile_m), lambda i: (0, i)),
            pl.BlockSpec((N, O), lambda i: (0, 0)),
            pl.BlockSpec((1, O), lambda i: (0, 0)),
        ],
        out_specs=pl.BlockSpec((B, O), lambda i: (0, 0)),
        scratch_shapes=[pltpu.VMEM((B, N), jnp.float32)],
        compiler_params=pltpu.CompilerParams(
            dimension_semantics=("arbitrary",)),  # head accumulator is sequential
        cost_estimate=cost,
    )(patches, w2d, scale, shift, pool_mat, head_w, head_b)


# ---------------------------------------------------------------------------
# Glue: im2col, padding, parameter folding, full forward
# ---------------------------------------------------------------------------

def im2col(x_nhwc, kh, kw, stride):
    """x_nhwc: (B, H, W, C) -> patches (B*OH*OW, kh*kw*C), plus (OH, OW)."""
    B, H, W, C = x_nhwc.shape
    oh = (H - kh) // stride + 1
    ow = (W - kw) // stride + 1
    cols = []
    for i in range(kh):
        for j in range(kw):
            cols.append(x_nhwc[:, i:i + stride * oh:stride,
                               j:j + stride * ow:stride, :])
    p = jnp.stack(cols, axis=3)                     # (B, OH, OW, kh*kw, C)
    return p.reshape(B * oh * ow, kh * kw * C), oh, ow


def _pad2d(x, rows, cols):
    r, c = rows - x.shape[0], cols - x.shape[1]
    if r or c:
        x = jnp.pad(x, ((0, r), (0, c)))
    return x


def fold_bn(conv_bias, gamma, beta, running_mean, running_var, eps=1e-5):
    scale = gamma / jnp.sqrt(running_var + eps)
    shift = beta + (conv_bias - running_mean) * scale
    return scale.reshape(1, -1), shift.reshape(1, -1)


def _prep_conv_operands(x_nhwc, p, stride, tile_m):
    """Shared glue: im2col + explicit M/K padding + bf16 cast + BN folding."""
    w_oihw = p["w"]
    cout, cin, kh, kw = w_oihw.shape
    patches, oh, ow = im2col(x_nhwc, kh, kw, stride)
    M, K = patches.shape
    Mp = _round_up(M, tile_m)          # sublane/tile-aligned M
    Kp = _round_up(K, 128)             # lane-aligned K (explicit, zero-padded)
    patches = _pad2d(patches, Mp, Kp).astype(jnp.bfloat16)
    # (Cout, Cin, kh, kw) -> (kh, kw, Cin, Cout) -> (kh*kw*Cin, Cout)
    w2d = jnp.transpose(w_oihw, (2, 3, 1, 0)).reshape(K, cout)
    w2d = _pad2d(w2d, Kp, cout).astype(jnp.bfloat16)
    scale, shift = fold_bn(p["b"], p["gamma"], p["beta"],
                           p["rmean"], p["rvar"])
    return patches, w2d, scale, shift, M, Mp, oh, ow, cout


def conv_block(x_nhwc, p, stride, tile_m=TILE_M):
    patches, w2d, scale, shift, M, _, oh, ow, cout = _prep_conv_operands(
        x_nhwc, p, stride, tile_m)
    y = conv_bn_relu(patches, w2d, scale, shift, tile_m=tile_m)
    B = x_nhwc.shape[0]
    return y[:M].reshape(B, oh, ow, cout)


def conv3_head_block(x_nhwc, p, head_w, head_b, tile_m=TILE_M):
    patches, w2d, scale, shift, M, Mp, oh, ow, _ = _prep_conv_operands(
        x_nhwc, p, stride=1, tile_m=tile_m)
    B = x_nhwc.shape[0]
    S = oh * ow
    # Pooling matrix: row b has 1/S on batch b's OH*OW rows, 0 on padded rows
    # (padded patch rows produce relu(shift) != 0, so they must be excluded).
    row_batch = jnp.arange(Mp) // S
    valid = jnp.arange(Mp) < M
    pool_mat = ((row_batch[None, :] == jnp.arange(B)[:, None])
                & valid[None, :]).astype(jnp.float32) / float(S)
    return conv3_head(patches, w2d, scale, shift, pool_mat,
                      head_w, head_b.reshape(1, -1), tile_m=tile_m)


def init_params(key):
    def conv_params(k, cin, cout, ksize):
        kw, kb, kg, kbe, km, kv = jax.random.split(k, 6)
        fan_in = cin * ksize * ksize
        return dict(
            w=jax.random.normal(kw, (cout, cin, ksize, ksize), jnp.float32)
            / jnp.sqrt(float(fan_in)),
            b=0.05 * jax.random.normal(kb, (cout,), jnp.float32),
            gamma=1.0 + 0.1 * jax.random.normal(kg, (cout,), jnp.float32),
            beta=0.1 * jax.random.normal(kbe, (cout,), jnp.float32),
            rmean=0.05 * jax.random.normal(km, (cout,), jnp.float32),
            rvar=1.0 + 0.1 * jnp.abs(jax.random.normal(kv, (cout,),
                                                       jnp.float32)),
        )

    k1, k2, k3, kw, kb = jax.random.split(key, 5)
    return {
        "conv1": conv_params(k1, 3, 32, 3),
        "conv2": conv_params(k2, 32, 64, 5),
        "conv3": conv_params(k3, 64, 128, 5),
        "head_w": jax.random.normal(kw, (128, 2), jnp.float32)
        / jnp.sqrt(128.0),
        "head_b": 0.05 * jax.random.normal(kb, (2,), jnp.float32),
    }


def bcnn_forward(x_nchw, params):
    # NCHW -> NHWC
    x = jnp.transpose(x_nchw, (0, 2, 3, 1)).astype(jnp.float32)
    x = conv_block(x, params["conv1"], stride=2)
    x = conv_block(x, params["conv2"], stride=1)
    # conv3 + avgpool(1) + flatten + dropout(eval = id) + linear, fused.
    return conv3_head_block(x, params["conv3"],
                            params["head_w"], params["head_b"])


if __name__ == "__main__":
    key = jax.random.PRNGKey(0)
    k_in, k_par = jax.random.split(key)

    # Shapes consistent with the module: 3 input channels, 32x32 spatial
    # (32 -> conv1(s2,k3) 15 -> conv2(k5) 11 -> conv3(k5) 7 -> avgpool 1).
    x = jax.random.normal(k_in, (2, 3, 32, 32), jnp.float32)
    params = init_params(k_par)

    fwd = jax.jit(bcnn_forward)
    out = jax.block_until_ready(fwd(x, params))
    assert out.shape == (2, 2), out.shape
    print("KERNEL_OK")
</pallas_src>

<mosaic_0001>
module attributes {stable_mosaic.version = 11 : i64} {
  func.func @_conv_bn_relu_kernel(%arg0: i32, %arg1: memref<256x128xbf16, #tpu.memory_space<vmem>>, %arg2: memref<128x32xbf16, #tpu.memory_space<vmem>>, %arg3: memref<1x32xf32, #tpu.memory_space<vmem>>, %arg4: memref<1x32xf32, #tpu.memory_space<vmem>>, %arg5: memref<256x32xf32, #tpu.memory_space<vmem>>) attributes {dimension_semantics = [#tpu.dimension_semantics<parallel>], iteration_bounds = array<i64: 2>, scalar_prefetch = 0 : i64, scratch_operands = 0 : i64, tpu.core_type = #tpu.core_type<tc>, window_params = [{transform_indices = @transform_0, window_bounds = array<i64: 256, 128>}, {pipeline_mode = #tpu.pipeline_mode<synchronous>, transform_indices = @transform_1, window_bounds = array<i64: 128, 32>}, {pipeline_mode = #tpu.pipeline_mode<synchronous>, transform_indices = @transform_2, window_bounds = array<i64: 1, 32>}, {pipeline_mode = #tpu.pipeline_mode<synchronous>, transform_indices = @transform_3, window_bounds = array<i64: 1, 32>}, {transform_indices = @transform_4, window_bounds = array<i64: 256, 32>}]} {
    %c0 = arith.constant 0 : index
    %c0_0 = arith.constant 0 : index
    %0 = vector.load %arg1[%c0, %c0_0] : memref<256x128xbf16, #tpu.memory_space<vmem>>, vector<256x128xbf16>
    %c0_1 = arith.constant 0 : index
    %c0_2 = arith.constant 0 : index
    %1 = vector.load %arg2[%c0_1, %c0_2] : memref<128x32xbf16, #tpu.memory_space<vmem>>, vector<128x32xbf16>
    %cst = arith.constant dense<0.000000e+00> : vector<256x32xf32>
    %2 = tpu.matmul %0, %1, %cst {dimension_numbers = #tpu.dot_dimension_numbers<[1], [0], [0], [1], [0, 0, 1, 1], [], []>} : vector<256x128xbf16>, vector<128x32xbf16>, vector<256x32xf32> -> vector<256x32xf32>
    %c0_3 = arith.constant 0 : index
    %c0_4 = arith.constant 0 : index
    %3 = vector.load %arg3[%c0_3, %c0_4] : memref<1x32xf32, #tpu.memory_space<vmem>>, vector<1x32xf32>
    %4 = vector.broadcast %3 : vector<1x32xf32> to vector<256x32xf32>
    %5 = arith.mulf %2, %4 : vector<256x32xf32>
    %c0_5 = arith.constant 0 : index
    %c0_6 = arith.constant 0 : index
    %6 = vector.load %arg4[%c0_5, %c0_6] : memref<1x32xf32, #tpu.memory_space<vmem>>, vector<1x32xf32>
    %7 = vector.broadcast %6 : vector<1x32xf32> to vector<256x32xf32>
    %8 = arith.addf %5, %7 : vector<256x32xf32>
    %cst_7 = arith.constant 0.000000e+00 : f32
    %9 = vector.broadcast %cst_7 : f32 to vector<256x32xf32>
    %10 = arith.maximumf %8, %9 : vector<256x32xf32>
    %c0_8 = arith.constant 0 : index
    %c0_9 = arith.constant 0 : index
    %11 = vector.load %arg5[%c0_8, %c0_9] : memref<256x32xf32, #tpu.memory_space<vmem>>, vector<256x32xf32>
    tpu.vector_store %arg5[%c0_8, %c0_9], %10 {strides = array<i32>} : memref<256x32xf32, #tpu.memory_space<vmem>>, vector<256x32xf32>,
    return
  }
  func.func @transform_0(%arg0: i32) -> (i32, i32) {
    %c0_i32 = arith.constant 0 : i32
    %c0_i32_0 = arith.constant 0 : i32
    return %arg0, %c0_i32 : i32, i32
  }
  func.func @transform_1(%arg0: i32) -> (i32, i32) {
    %c0_i32 = arith.constant 0 : i32
    %c0_i32_0 = arith.constant 0 : i32
    %c0_i32_1 = arith.constant 0 : i32
    return %c0_i32, %c0_i32_0 : i32, i32
  }
  func.func @transform_2(%arg0: i32) -> (i32, i32) {
    %c0_i32 = arith.constant 0 : i32
    %c0_i32_0 = arith.constant 0 : i32
    %c0_i32_1 = arith.constant 0 : i32
    return %c0_i32, %c0_i32_0 : i32, i32
  }
  func.func @transform_3(%arg0: i32) -> (i32, i32) {
    %c0_i32 = arith.constant 0 : i32
    %c0_i32_0 = arith.constant 0 : i32
    %c0_i32_1 = arith.constant 0 : i32
    return %c0_i32, %c0_i32_0 : i32, i32
  }
  func.func @transform_4(%arg0: i32) -> (i32, i32) {
    %c0_i32 = arith.constant 0 : i32
    %c0_i32_0 = arith.constant 0 : i32
    return %arg0, %c0_i32 : i32, i32
  }
}

module attributes {stable_mosaic.version = 11 : i64} {
  func.func @_conv_bn_relu_kernel(%arg0: i32, %arg1: memref<256x896xbf16, #tpu.memory_space<vmem>>, %arg2: memref<896x64xbf16, #tpu.memory_space<vmem>>, %arg3: memref<1x64xf32, #tpu.memory_space<vmem>>, %arg4: memref<1x64xf32, #tpu.memory_space<vmem>>, %arg5: memref<256x64xf32, #tpu.memory_space<vmem>>) attributes {dimension_semantics = [#tpu.dimension_semantics<parallel>], iteration_bounds = array<i64: 1>, scalar_prefetch = 0 : i64, scratch_operands = 0 : i64, tpu.core_type = #tpu.core_type<tc>, window_params = [{transform_indices = @transform_0, window_bounds = array<i64: 256, 896>}, {pipeline_mode = #tpu.pipeline_mode<synchronous>, transform_indices = @transform_1, window_bounds = array<i64: 896, 64>}, {pipeline_mode = #tpu.pipeline_mode<synchronous>, transform_indices = @transform_2, window_bounds = array<i64: 1, 64>}, {pipeline_mode = #tpu.pipeline_mode<synchronous>, transform_indices = @transform_3, window_bounds = array<i64: 1, 64>}, {transform_indices = @transform_4, window_bounds = array<i64: 256, 64>}]} {
    %c0 = arith.constant 0 : index
    %c0_0 = arith.constant 0 : index
    %0 = vector.load %arg1[%c0, %c0_0] : memref<256x896xbf16, #tpu.memory_space<vmem>>, vector<256x896xbf16>
    %c0_1 = arith.constant 0 : index
    %c0_2 = arith.constant 0 : index
    %1 = vector.load %arg2[%c0_1, %c0_2] : memref<896x64xbf16, #tpu.memory_space<vmem>>, vector<896x64xbf16>
    %cst = arith.constant dense<0.000000e+00> : vector<256x64xf32>
    %2 = tpu.matmul %0, %1, %cst {dimension_numbers = #tpu.dot_dimension_numbers<[1], [0], [0], [1], [0, 0, 1, 1], [], []>} : vector<256x896xbf16>, vector<896x64xbf16>, vector<256x64xf32> -> vector<256x64xf32>
    %c0_3 = arith.constant 0 : index
    %c0_4 = arith.constant 0 : index
    %3 = vector.load %arg3[%c0_3, %c0_4] : memref<1x64xf32, #tpu.memory_space<vmem>>, vector<1x64xf32>
    %4 = vector.broadcast %3 : vector<1x64xf32> to vector<256x64xf32>
    %5 = arith.mulf %2, %4 : vector<256x64xf32>
    %c0_5 = arith.constant 0 : index
    %c0_6 = arith.constant 0 : index
    %6 = vector.load %arg4[%c0_5, %c0_6] : memref<1x64xf32, #tpu.memory_space<vmem>>, vector<1x64xf32>
    %7 = vector.broadcast %6 : vector<1x64xf32> to vector<256x64xf32>
    %8 = arith.addf %5, %7 : vector<256x64xf32>
    %cst_7 = arith.constant 0.000000e+00 : f32
    %9 = vector.broadcast %cst_7 : f32 to vector<256x64xf32>
    %10 = arith.maximumf %8, %9 : vector<256x64xf32>
    %c0_8 = arith.constant 0 : index
    %c0_9 = arith.constant 0 : index
    %11 = vector.load %arg5[%c0_8, %c0_9] : memref<256x64xf32, #tpu.memory_space<vmem>>, vector<256x64xf32>
    tpu.vector_store %arg5[%c0_8, %c0_9], %10 {strides = array<i32>} : memref<256x64xf32, #tpu.memory_space<vmem>>, vector<256x64xf32>,
    return
  }
  func.func @transform_0(%arg0: i32) -> (i32, i32) {
    %c0_i32 = arith.constant 0 : i32
    %c0_i32_0 = arith.constant 0 : i32
    return %arg0, %c0_i32 : i32, i32
  }
  func.func @transform_1(%arg0: i32) -> (i32, i32) {
    %c0_i32 = arith.constant 0 : i32
    %c0_i32_0 = arith.constant 0 : i32
    %c0_i32_1 = arith.constant 0 : i32
    return %c0_i32, %c0_i32_0 : i32, i32
  }
  func.func @transform_2(%arg0: i32) -> (i32, i32) {
    %c0_i32 = arith.constant 0 : i32
    %c0_i32_0 = arith.constant 0 : i32
    %c0_i32_1 = arith.constant 0 : i32
    return %c0_i32, %c0_i32_0 : i32, i32
  }
  func.func @transform_3(%arg0: i32) -> (i32, i32) {
    %c0_i32 = arith.constant 0 : i32
    %c0_i32_0 = arith.constant 0 : i32
    %c0_i32_1 = arith.constant 0 : i32
    return %c0_i32, %c0_i32_0 : i32, i32
  }
  func.func @transform_4(%arg0: i32) -> (i32, i32) {
    %c0_i32 = arith.constant 0 : i32
    %c0_i32_0 = arith.constant 0 : i32
    return %arg0, %c0_i32 : i32, i32
  }
}

module attributes {stable_mosaic.version = 11 : i64} {
  func.func @_conv3_head_kernel(%arg0: i32, %arg1: memref<256x1664xbf16, #tpu.memory_space<vmem>>, %arg2: memref<1664x128xbf16, #tpu.memory_space<vmem>>, %arg3: memref<1x128xf32, #tpu.memory_space<vmem>>, %arg4: memref<1x128xf32, #tpu.memory_space<vmem>>, %arg5: memref<2x256xf32, #tpu.memory_space<vmem>>, %arg6: memref<128x2xf32, #tpu.memory_space<vmem>>, %arg7: memref<1x2xf32, #tpu.memory_space<vmem>>, %arg8: memref<2x2xf32, #tpu.memory_space<vmem>>, %arg9: memref<2x128xf32, #tpu.memory_space<vmem>>) attributes {dimension_semantics = [#tpu.dimension_semantics<arbitrary>], iteration_bounds = array<i64: 1>, scalar_prefetch = 0 : i64, scratch_operands = 1 : i64, tpu.core_type = #tpu.core_type<tc>, window_params = [{transform_indices = @transform_0, window_bounds = array<i64: 256, 1664>}, {pipeline_mode = #tpu.pipeline_mode<synchronous>, transform_indices = @transform_1, window_bounds = array<i64: 1664, 128>}, {pipeline_mode = #tpu.pipeline_mode<synchronous>, transform_indices = @transform_2, window_bounds = array<i64: 1, 128>}, {pipeline_mode = #tpu.pipeline_mode<synchronous>, transform_indices = @transform_3, window_bounds = array<i64: 1, 128>}, {transform_indices = @transform_4, window_bounds = array<i64: 2, 256>}, {pipeline_mode = #tpu.pipeline_mode<synchronous>, transform_indices = @transform_5, window_bounds = array<i64: 128, 2>}, {pipeline_mode = #tpu.pipeline_mode<synchronous>, transform_indices = @transform_6, window_bounds = array<i64: 1, 2>}, {pipeline_mode = #tpu.pipeline_mode<synchronous>, transform_indices = @transform_7, window_bounds = array<i64: 2, 2>}]} {
    %c0_i32 = arith.constant 0 : i32
    %0 = arith.cmpi eq, %arg0, %c0_i32 : i32
    %1 = arith.extui %0 : i1 to i32
    %c0_i32_0 = arith.constant 0 : i32
    %2 = arith.cmpi ne, %1, %c0_i32_0 : i32
    scf.if %2 {
      %cst_18 = arith.constant 0.000000e+00 : f32
      %22 = vector.broadcast %cst_18 : f32 to vector<2x128xf32>
      %c0_19 = arith.constant 0 : index
      %c0_20 = arith.constant 0 : index
      %23 = vector.load %arg9[%c0_19, %c0_20] : memref<2x128xf32, #tpu.memory_space<vmem>>, vector<2x128xf32>
      tpu.vector_store %arg9[%c0_19, %c0_20], %22 {strides = array<i32>} : memref<2x128xf32, #tpu.memory_space<vmem>>, vector<2x128xf32>,
    } else {
    }
    %c0 = arith.constant 0 : index
    %c0_1 = arith.constant 0 : index
    %3 = vector.load %arg1[%c0, %c0_1] : memref<256x1664xbf16, #tpu.memory_space<vmem>>, vector<256x1664xbf16>
    %c0_2 = arith.constant 0 : index
    %c0_3 = arith.constant 0 : index
    %4 = vector.load %arg2[%c0_2, %c0_3] : memref<1664x128xbf16, #tpu.memory_space<vmem>>, vector<1664x128xbf16>
    %cst = arith.constant dense<0.000000e+00> : vector<256x128xf32>
    %5 = tpu.matmul %3, %4, %cst {dimension_numbers = #tpu.dot_dimension_numbers<[1], [0], [0], [1], [0, 0, 1, 1], [], []>} : vector<256x1664xbf16>, vector<1664x128xbf16>, vector<256x128xf32> -> vector<256x128xf32>
    %c0_4 = arith.constant 0 : index
    %c0_5 = arith.constant 0 : index
    %6 = vector.load %arg3[%c0_4, %c0_5] : memref<1x128xf32, #tpu.memory_space<vmem>>, vector<1x128xf32>
    %7 = vector.broadcast %6 : vector<1x128xf32> to vector<256x128xf32>
    %8 = arith.mulf %5, %7 : vector<256x128xf32>
    %c0_6 = arith.constant 0 : index
    %c0_7 = arith.constant 0 : index
    %9 = vector.load %arg4[%c0_6, %c0_7] : memref<1x128xf32, #tpu.memory_space<vmem>>, vector<1x128xf32>
    %10 = vector.broadcast %9 : vector<1x128xf32> to vector<256x128xf32>
    %11 = arith.addf %8, %10 : vector<256x128xf32>
    %cst_8 = arith.constant 0.000000e+00 : f32
    %12 = vector.broadcast %cst_8 : f32 to vector<256x128xf32>
    %13 = arith.maximumf %11, %12 : vector<256x128xf32>
    %c0_9 = arith.constant 0 : index
    %c0_10 = arith.constant 0 : index
    %14 = vector.load %arg9[%c0_9, %c0_10] : memref<2x128xf32, #tpu.memory_space<vmem>>, vector<2x128xf32>
    %c0_11 = arith.constant 0 : index
    %c0_12 = arith.constant 0 : index
    %15 = vector.load %arg5[%c0_11, %c0_12] : memref<2x256xf32, #tpu.memory_space<vmem>>, vector<2x256xf32>
    %cst_13 = arith.constant dense<0.000000e+00> : vector<2x128xf32>
    %16 = tpu.matmul %15, %13, %cst_13 {dimension_numbers = #tpu.dot_dimension_numbers<[1], [0], [0], [1], [0, 0, 1, 1], [], []>} : vector<2x256xf32>, vector<256x128xf32>, vector<2x128xf32> -> vector<2x128xf32>
    %17 = arith.addf %14, %16 : vector<2x128xf32>
    %c0_14 = arith.constant 0 : index
    %c0_15 = arith.constant 0 : index
    %18 = vector.load %arg9[%c0_14, %c0_15] : memref<2x128xf32, #tpu.memory_space<vmem>>, vector<2x128xf32>
    tpu.vector_store %arg9[%c0_14, %c0_15], %17 {strides = array<i32>} : memref<2x128xf32, #tpu.memory_space<vmem>>, vector<2x128xf32>,
    %c0_i32_16 = arith.constant 0 : i32
    %19 = arith.cmpi eq, %arg0, %c0_i32_16 : i32
    %20 = arith.extui %19 : i1 to i32
    %c0_i32_17 = arith.constant 0 : i32
    %21 = arith.cmpi ne, %20, %c0_i32_17 : i32
    scf.if %21 {
      %c0_18 = arith.constant 0 : index
      %c0_19 = arith.constant 0 : index
      %22 = vector.load %arg9[%c0_18, %c0_19] : memref<2x128xf32, #tpu.memory_space<vmem>>, vector<2x128xf32>
      %c0_20 = arith.constant 0 : index
      %c0_21 = arith.constant 0 : index
      %23 = vector.load %arg6[%c0_20, %c0_21] : memref<128x2xf32, #tpu.memory_space<vmem>>, vector<128x2xf32>
      %cst_22 = arith.constant dense<0.000000e+00> : vector<2x2xf32>
      %24 = tpu.matmul %22, %23, %cst_22 {dimension_numbers = #tpu.dot_dimension_numbers<[1], [0], [0], [1], [0, 0, 1, 1], [], []>} : vector<2x128xf32>, vector<128x2xf32>, vector<2x2xf32> -> vector<2x2xf32>
      %c0_23 = arith.constant 0 : index
      %c0_24 = arith.constant 0 : index
      %25 = vector.load %arg7[%c0_23, %c0_24] : memref<1x2xf32, #tpu.memory_space<vmem>>, vector<1x2xf32>
      %26 = vector.broadcast %25 : vector<1x2xf32> to vector<2x2xf32>
      %27 = arith.addf %24, %26 : vector<2x2xf32>
      %c0_25 = arith.constant 0 : index
      %c0_26 = arith.constant 0 : index
      %28 = vector.load %arg8[%c0_25, %c0_26] : memref<2x2xf32, #tpu.memory_space<vmem>>, vector<2x2xf32>
      tpu.vector_store %arg8[%c0_25, %c0_26], %27 {strides = array<i32>} : memref<2x2xf32, #tpu.memory_space<vmem>>, vector<2x2xf32>,
    } else {
    }
    return
  }
  func.func @transform_0(%arg0: i32) -> (i32, i32) {
    %c0_i32 = arith.constant 0 : i32
    %c0_i32_0 = arith.constant 0 : i32
    return %arg0, %c0_i32 : i32, i32
  }
  func.func @transform_1(%arg0: i32) -> (i32, i32) {
    %c0_i32 = arith.constant 0 : i32
    %c0_i32_0 = arith.constant 0 : i32
    %c0_i32_1 = arith.constant 0 : i32
    return %c0_i32, %c0_i32_0 : i32, i32
  }
  func.func @transform_2(%arg0: i32) -> (i32, i32) {
    %c0_i32 = arith.constant 0 : i32
    %c0_i32_0 = arith.constant 0 : i32
    %c0_i32_1 = arith.constant 0 : i32
    return %c0_i32, %c0_i32_0 : i32, i32
  }
  func.func @transform_3(%arg0: i32) -> (i32, i32) {
    %c0_i32 = arith.constant 0 : i32
    %c0_i32_0 = arith.constant 0 : i32
    %c0_i32_1 = arith.constant 0 : i32
    return %c0_i32, %c0_i32_0 : i32, i32
  }
  func.func @transform_4(%arg0: i32) -> (i32, i32) {
    %c0_i32 = arith.constant 0 : i32
    %c0_i32_0 = arith.constant 0 : i32
    return %c0_i32, %arg0 : i32, i32
  }
  func.func @transform_5(%arg0: i32) -> (i32, i32) {
    %c0_i32 = arith.constant 0 : i32
    %c0_i32_0 = arith.constant 0 : i32
    %c0_i32_1 = arith.constant 0 : i32
    return %c0_i32, %c0_i32_0 : i32, i32
  }
  func.func @transform_6(%arg0: i32) -> (i32, i32) {
    %c0_i32 = arith.constant 0 : i32
    %c0_i32_0 = arith.constant 0 : i32
    %c0_i32_1 = arith.constant 0 : i32
    return %c0_i32, %c0_i32_0 : i32, i32
  }
  func.func @transform_7(%arg0: i32) -> (i32, i32) {
    %c0_i32 = arith.constant 0 : i32
    %c0_i32_0 = arith.constant 0 : i32
    %c0_i32_1 = arith.constant 0 : i32
    return %c0_i32, %c0_i32_0 : i32, i32
  }
}

</mosaic_0001>

<llo_original>
// kernel: bcnn_forward.3
$region0: #{bcnn_forward.3}
  #allocation0 [shape = 'u32[]', space=smem, size = 0x4, offset = 0x4, fixed_abs, tag = 'smem constant byte address 0x4 - core index']
  #allocation1 [shape = 'u32[144,128]{1,0:T(1,128)}', space=vmem, size = 0x12000, scoped, tag = 'internal scratch']
  %s0 = inlined_call_operand.vmem [shape: bf16[512,128], index: 0, kind: input, shape index: {}]
  %s1 = inlined_call_operand.vmem [shape: bf16[128,32], index: 1, kind: input, shape index: {}]
  %s2 = inlined_call_operand.vmem [shape: f32[1,32], index: 2, kind: input, shape index: {}]
  %s3 = inlined_call_operand.vmem [shape: f32[1,32], index: 3, kind: input, shape index: {}]
  %s4 = inlined_call_operand.vmem [shape: f32[512,32], index: 4, kind: output, shape index: {}]
  %s5 = sld [smem:[#allocation0]]
  $region49: #{bcnn_forward.3} parent=0
    _
  %s7 = ssub.s32 1, %s5
  %s8 = scalar_select 0, %s7, %s5
  loop: start=0, step=1, limit=4
  $region2: #{bcnn_forward.3} parent=0 // loop_pre_header
    _
  $region3: #{bcnn_forward.3} parent=0 // loop_header
    %s10 = sphi 0, %s14
    %p11 = scmp.ge.s32.totalorder %s10, 4
    %s20 = sphi 0, %s22
    %s23 = sphi 0, %s20
    %s24 = sphi 0, %s23
    %s40 = sphi 0, %s24
    %s44 = sphi 0, %s44
    %s46 = sphi 0, %s44
    %s47 = sphi 0, %s46
    %s61 = sphi 0, %s47
    %s65 = sphi 0, %s65
    %s67 = sphi 0, %s65
    %s68 = sphi 0, %s67
    %s82 = sphi 0, %s68
    %s86 = sphi 0, %s86
    %s88 = sphi 0, %s86
    %s89 = sphi 0, %s88
    %s103 = sphi 0, %s89
    %s109 = sphi 0, %s111
    %s112 = sphi 0, %s109
    %s113 = sphi 0, %s112
    %s129 = sphi 0, %s113
  $region4: #{bcnn_forward.3} parent=0 // loop_header_branch
    %13 = sbr.rel (%p11) target = $region8
  $region5: #{bcnn_forward.3} parent=0 // loop_body
    %s15 = ssub.s32 %s10, 1
    %s16 = ssub.s32 %s10, 2
    %s17 = sadd.s32 %s10, 1
    %s18 = ssub.s32 %s10, %s17
    %p19 = scmp.eq.s32.totalorder %s18, 0
    %s21 = sadd.s32 %s20, 1
    %s22 = scalar_select %p19, %s20, %s21
    %p25 = pneg %p19
    %p26 = scmp.eq.s32.totalorder %s10, 1
    %p27 = por %p25, %p26
    %p28 = scmp.ne.s32.totalorder %s20, %s23
    %p29 = scmp.eq.s32.totalorder %s10, 0
    %p30 = por %p28, %p29
    %p31 = scmp.ne.s32.totalorder %s20, %s23
    %p32 = scmp.eq.s32.totalorder %s15, 1
    %p33 = por %p31, %p32
    %p34 = scmp.ne.s32.totalorder %s23, %s24
    %p35 = scmp.eq.s32.totalorder %s15, 0
    %p36 = por %p34, %p35
    %p37 = scmp.ne.s32.totalorder %s23, %s24
    %p38 = scmp.eq.s32.totalorder %s16, 1
    %p39 = por %p37, %p38
    %p41 = scmp.ne.s32.totalorder %s24, %s40
    %p42 = scmp.eq.s32.totalorder %s16, 0
    %p43 = por %p41, %p42
    %s45 = sadd.s32 %s44, 1
    %p48 = scmp.eq.s32.totalorder %s10, 1
    %p49 = scmp.ne.s32.totalorder %s44, %s46
    %p50 = scmp.eq.s32.totalorder %s10, 0
    %p51 = por %p49, %p50
    %p52 = scmp.ne.s32.totalorder %s44, %s46
    %p53 = scmp.eq.s32.totalorder %s15, 1
    %p54 = por %p52, %p53
    %p55 = scmp.ne.s32.totalorder %s46, %s47
    %p56 = scmp.eq.s32.totalorder %s15, 0
    %p57 = por %p55, %p56
    %p58 = scmp.ne.s32.totalorder %s46, %s47
    %p59 = scmp.eq.s32.totalorder %s16, 1
    %p60 = por %p58, %p59
    %p62 = scmp.ne.s32.totalorder %s47, %s61
    %p63 = scmp.eq.s32.totalorder %s16, 0
    %p64 = por %p62, %p63
    %s66 = sadd.s32 %s65, 1
    %p69 = scmp.eq.s32.totalorder %s10, 1
    %p70 = scmp.ne.s32.totalorder %s65, %s67
    %p71 = scmp.eq.s32.totalorder %s10, 0
    %p72 = por %p70, %p71
    %p73 = scmp.ne.s32.totalorder %s65, %s67
    %p74 = scmp.eq.s32.totalorder %s15, 1
    %p75 = por %p73, %p74
    %p76 = scmp.ne.s32.totalorder %s67, %s68
    %p77 = scmp.eq.s32.totalorder %s15, 0
    %p78 = por %p76, %p77
    %p79 = scmp.ne.s32.totalorder %s67, %s68
    %p80 = scmp.eq.s32.totalorder %s16, 1
    %p81 = por %p79, %p80
    %p83 = scmp.ne.s32.totalorder %s68, %s82
    %p84 = scmp.eq.s32.totalorder %s16, 0
    %p85 = por %p83, %p84
    %s87 = sadd.s32 %s86, 1
    %p90 = scmp.eq.s32.totalorder %s10, 1
    %p91 = scmp.ne.s32.totalorder %s86, %s88
    %p92 = scmp.eq.s32.totalorder %s10, 0
    %p93 = por %p91, %p92
    %p94 = scmp.ne.s32.totalorder %s86, %s88
    %p95 = scmp.eq.s32.totalorder %s15, 1
    %p96 = por %p94, %p95
    %p97 = scmp.ne.s32.totalorder %s88, %s89
    %p98 = scmp.eq.s32.totalorder %s15, 0
    %p99 = por %p97, %p98
    %p100 = scmp.ne.s32.totalorder %s88, %s89
    %p101 = scmp.eq.s32.totalorder %s16, 1
    %p102 = por %p100, %p101
    %p104 = scmp.ne.s32.totalorder %s89, %s103
    %p105 = scmp.eq.s32.totalorder %s16, 0
    %p106 = por %p104, %p105
    %s107 = ssub.s32 %s10, %s17
    %p108 = scmp.eq.s32.totalorder %s107, 0
    %s110 = sadd.s32 %s109, 1
    %s111 = scalar_select %p108, %s109, %s110
    %p114 = pneg %p108
    %p115 = scmp.eq.s32.totalorder %s10, 1
    %p116 = por %p114, %p115
    %p117 = scmp.ne.s32.totalorder %s109, %s112
    %p118 = scmp.eq.s32.totalorder %s10, 0
    %p119 = por %p117, %p118
    %p120 = scmp.ne.s32.totalorder %s109, %s112
    %p121 = scmp.eq.s32.totalorder %s15, 1
    %p122 = por %p120, %p121
    %p123 = scmp.ne.s32.totalorder %s112, %s113
    %p124 = scmp.eq.s32.totalorder %s15, 0
    %p125 = por %p123, %p124
    %p126 = scmp.ne.s32.totalorder %s112, %s113
    %p127 = scmp.eq.s32.totalorder %s16, 1
    %p128 = por %p126, %p127
    %p130 = scmp.ne.s32.totalorder %s113, %s129
    %p131 = scmp.eq.s32.totalorder %s16, 0
    %p132 = por %p130, %p131
    %p133 = scmp.le.s32.totalorder 1, %s10
    %p134 = scmp.lt.s32.totalorder %s10, 3
    %p135 = pnand %p133, %p134
    %p136 = pneg %p135
    // Predicated region
    $region9: #{bcnn_forward.3} parent=5 // pred_check
      _
    $region10: #{bcnn_forward.3} parent=5 // pred_check_branch
      %138 = sbr.rel (%p135) target = $region12
    $region11: #{bcnn_forward.3} parent=5 // pred_region
      %s139 = ssub.s32 %s10, 1
      // Predicated region
      $region13: #{bcnn_forward.3} parent=11 // pred_check
        %p140 = pneg %p57
      $region14: #{bcnn_forward.3} parent=11 // pred_check_branch
        %142 = sbr.rel (%p140) target = $region16
      $region15: #{bcnn_forward.3} parent=11 // pred_region
        _
      $region16: #{bcnn_forward.3} parent=11 // pred_fallthru
        _
      // Predicated region
      $region17: #{bcnn_forward.3} parent=11 // pred_check
        %p143 = pneg %p78
      $region18: #{bcnn_forward.3} parent=11 // pred_check_branch
        %145 = sbr.rel (%p143) target = $region20
      $region19: #{bcnn_forward.3} parent=11 // pred_region
        _
      $region20: #{bcnn_forward.3} parent=11 // pred_fallthru
        _
      // Predicated region
      $region21: #{bcnn_forward.3} parent=11 // pred_check
        %p146 = pneg %p99
      $region22: #{bcnn_forward.3} parent=11 // pred_check_branch
        %148 = sbr.rel (%p146) target = $region24
      $region23: #{bcnn_forward.3} parent=11 // pred_region
        _
      $region24: #{bcnn_forward.3} parent=11 // pred_fallthru
        _
    $region12: #{bcnn_forward.3} parent=5 // pred_fallthru
      _
    %p149 = scmp.lt.s32.totalorder %s10, 2
    // Predicated region
    $region25: #{bcnn_forward.3} parent=5 // pred_check
      %p150 = pneg %p149
    $region26: #{bcnn_forward.3} parent=5 // pred_check_branch
      %152 = sbr.rel (%p150) target = $region28
    $region27: #{bcnn_forward.3} parent=5 // pred_region
      // Predicated region
      $region29: #{bcnn_forward.3} parent=27 // pred_check
        %p153 = pneg %p30
      $region30: #{bcnn_forward.3} parent=27 // pred_check_branch
        %155 = sbr.rel (%p153) target = $region32
      $region31: #{bcnn_forward.3} parent=27 // pred_region
        %s156 = smul.u32 32, %s10
        %p157 = scmp.lt.s32.totalorder %s156, 63
        %s158 = scalar_select %p157, %s156, 63
        %s159 = smul.addr %s158, 4
        %s160 = scalar_lea.vmem %s0, %s159
        %s161 = smul.u32 32, %s10
      $region32: #{bcnn_forward.3} parent=27 // pred_fallthru
        _
    $region28: #{bcnn_forward.3} parent=5 // pred_fallthru
      _
    %p162 = scmp.le.s32.totalorder 1, %s10
    %p163 = scmp.lt.s32.totalorder %s10, 3
    %p164 = pnand %p162, %p163
    %p165 = pneg %p164
    // Predicated region
    $region33: #{bcnn_forward.3} parent=5 // pred_check
      _
    $region34: #{bcnn_forward.3} parent=5 // pred_check_branch
      %167 = sbr.rel (%p164) target = $region36
    $region35: #{bcnn_forward.3} parent=5 // pred_region
      %s168 = ssub.s32 %s10, 1
      %s169 = smul.u32 32, %s15
      %p170 = scmp.lt.s32.totalorder %s169, 63
      %s171 = scalar_select %p170, %s169, 63
      %s172 = smul.addr %s171, 4
      %s173 = scalar_lea.vmem %s0, %s172
      %p174 = pneg %p36
      %p175 = pneg %p33
      %p176 = pneg %p57
      %p177 = pneg %p54
      %p178 = pneg %p78
      %p179 = pneg %p75
      %p180 = pneg %p99
      %p181 = pneg %p96
      %p182 = pneg %p125
      %p183 = pneg %p122
      %s184 = smul.u32 32, %s15
      %p185 = scmp.lt.s32.totalorder %s184, 63
      %s186 = scalar_select %p185, %s184, 63
      %s187 = smul.addr %s186, 8
      %s188 = scalar_lea.vmem %s4, %s187
      %s189 = smul.u32 32, %s15
      %p190 = scmp.lt.s32.totalorder %s189, 63
      %s191 = scalar_select %p190, %s189, 63
      %s192 = smul.addr %s191, 4
      %s193 = scalar_lea.vmem %s0, %s192
      %s194 = smul.u32 32, %s15
      %s195 = smul.u32 32, %s15
      %p196 = scmp.lt.s32.totalorder %s195, 63
      %s197 = scalar_select %p196, %s195, 63
      %s198 = smul.addr %s197, 8
      %s199 = scalar_lea.vmem %s4, %s198
      %s200 = smul.u32 32, %s15
      %v202 = vld [vmem:[%s193] sm:$0xf]
      %v203 = vld [vmem:[%s193 + $0x4] sm:$0xf]
      %v204 = vld [vmem:[%s193 + $0x8] sm:$0xf]
      %v205 = vld [vmem:[%s193 + $0xc] sm:$0xf]
      %v206 = vld [vmem:[%s193 + $0x10] sm:$0xf]
      %v207 = vld [vmem:[%s193 + $0x14] sm:$0xf]
      %v208 = vld [vmem:[%s193 + $0x18] sm:$0xf]
      %v209 = vld [vmem:[%s193 + $0x1c] sm:$0xf]
      %v210 = vld [vmem:[%s193 + $0x20] sm:$0xf]
      %v211 = vld [vmem:[%s193 + $0x24] sm:$0xf]
      %v212 = vld [vmem:[%s193 + $0x28] sm:$0xf]
      %v213 = vld [vmem:[%s193 + $0x2c] sm:$0xf]
      %v214 = vld [vmem:[%s193 + $0x30] sm:$0xf]
      %v215 = vld [vmem:[%s193 + $0x34] sm:$0xf]
      %v216 = vld [vmem:[%s193 + $0x38] sm:$0xf]
      %v217 = vld [vmem:[%s193 + $0x3c] sm:$0xf]
      %v218 = vld [vmem:[%s193 + $0x40] sm:$0xf]
      %v219 = vld [vmem:[%s193 + $0x44] sm:$0xf]
      %v220 = vld [vmem:[%s193 + $0x48] sm:$0xf]
      %v221 = vld [vmem:[%s193 + $0x4c] sm:$0xf]
      %v222 = vld [vmem:[%s193 + $0x50] sm:$0xf]
      %v223 = vld [vmem:[%s193 + $0x54] sm:$0xf]
      %v224 = vld [vmem:[%s193 + $0x58] sm:$0xf]
      %v225 = vld [vmem:[%s193 + $0x5c] sm:$0xf]
      %v226 = vld [vmem:[%s193 + $0x60] sm:$0xf]
      %v227 = vld [vmem:[%s193 + $0x64] sm:$0xf]
      %v228 = vld [vmem:[%s193 + $0x68] sm:$0xf]
      %v229 = vld [vmem:[%s193 + $0x6c] sm:$0xf]
      %v230 = vld [vmem:[%s193 + $0x70] sm:$0xf]
      %v231 = vld [vmem:[%s193 + $0x74] sm:$0xf]
      %v232 = vld [vmem:[%s193 + $0x78] sm:$0xf]
      %v233 = vld [vmem:[%s193 + $0x7c] sm:$0xf]
      %v234 = vld [vmem:[%s1] sm:$0xf]
      %v235 = vld [vmem:[%s1 + $0x4] sm:$0xf]
      %v236 = vld [vmem:[%s1 + $0x8] sm:$0xf]
      %v237 = vld [vmem:[%s1 + $0xc] sm:$0xf]
      %v238 = vld [vmem:[%s1 + $0x10] sm:$0xf]
      %v239 = vld [vmem:[%s1 + $0x14] sm:$0xf]
      %v240 = vld [vmem:[%s1 + $0x18] sm:$0xf]
      %v241 = vld [vmem:[%s1 + $0x1c] sm:$0xf]
      %v242 = vld [vmem:[%s1 + $0x20] sm:$0xf]
      %v243 = vld [vmem:[%s1 + $0x24] sm:$0xf]
      %v244 = vld [vmem:[%s1 + $0x28] sm:$0xf]
      %v245 = vld [vmem:[%s1 + $0x2c] sm:$0xf]
      %v246 = vld [vmem:[%s1 + $0x30] sm:$0xf]
      %v247 = vld [vmem:[%s1 + $0x34] sm:$0xf]
      %v248 = vld [vmem:[%s1 + $0x38] sm:$0xf]
      %v249 = vld [vmem:[%s1 + $0x3c] sm:$0xf]
      %v282 = vunpack.c.l.b16 %v202
      %v283 = vunpack.c.l.b16 %v203
      %v284 = vunpack.c.l.b16 %v204
      %v285 = vunpack.c.l.b16 %v205
      %v286 = vunpack.c.l.b16 %v206
      %v287 = vunpack.c.l.b16 %v207
      %v288 = vunpack.c.l.b16 %v208
      %v289 = vunpack.c.l.b16 %v209
      %v290 = vunpack.c.l.b16 %v210
      %v291 = vunpack.c.l.b16 %v211
      %v292 = vunpack.c.l.b16 %v212
      %v293 = vunpack.c.l.b16 %v213
      %v294 = vunpack.c.l.b16 %v214
      %v295 = vunpack.c.l.b16 %v215
      %v296 = vunpack.c.l.b16 %v216
      %v297 = vunpack.c.l.b16 %v217
      %v298 = vunpack.c.l.b16 %v218
      %v299 = vunpack.c.l.b16 %v219
      %v300 = vunpack.c.l.b16 %v220
      %v301 = vunpack.c.l.b16 %v221
      %v302 = vunpack.c.l.b16 %v222
      %v303 = vunpack.c.l.b16 %v223
      %v304 = vunpack.c.l.b16 %v224
      %v305 = vunpack.c.l.b16 %v225
      %v306 = vunpack.c.l.b16 %v226
      %v307 = vunpack.c.l.b16 %v227
      %v308 = vunpack.c.l.b16 %v228
      %v309 = vunpack.c.l.b16 %v229
      %v310 = vunpack.c.l.b16 %v230
      %v311 = vunpack.c.l.b16 %v231
      %v312 = vunpack.c.l.b16 %v232
      %v313 = vunpack.c.l.b16 %v233
      %v314 = vpack.c.b16 %v283, %v282
      %v315 = vpack.c.b16 %v285, %v284
      %v316 = vpack.c.b16 %v287, %v286
      %v317 = vpack.c.b16 %v289, %v288
      %v318 = vpack.c.b16 %v291, %v290
      %v319 = vpack.c.b16 %v293, %v292
      %v320 = vpack.c.b16 %v295, %v294
      %v321 = vpack.c.b16 %v297, %v296
      %v322 = vpack.c.b16 %v299, %v298
      %v323 = vpack.c.b16 %v301, %v300
      %v324 = vpack.c.b16 %v303, %v302
      %v325 = vpack.c.b16 %v305, %v304
      %v326 = vpack.c.b16 %v307, %v306
      %v327 = vpack.c.b16 %v309, %v308
      %v328 = vpack.c.b16 %v311, %v310
      %v329 = vpack.c.b16 %v313, %v312
      %v362 = vunpack.c.l.b16 %v234
      %v363 = vunpack.c.l.b16 %v235
      %v364 = vunpack.c.l.b16 %v236
      %v365 = vunpack.c.l.b16 %v237
      %v366 = vunpack.c.l.b16 %v238
      %v367 = vunpack.c.l.b16 %v239
      %v368 = vunpack.c.l.b16 %v240
      %v369 = vunpack.c.l.b16 %v241
      %v370 = vunpack.c.l.b16 %v242
      %v371 = vunpack.c.l.b16 %v243
      %v372 = vunpack.c.l.b16 %v244
      %v373 = vunpack.c.l.b16 %v245
      %v374 = vunpack.c.l.b16 %v246
      %v375 = vunpack.c.l.b16 %v247
      %v376 = vunpack.c.l.b16 %v248
      %v377 = vunpack.c.l.b16 %v249
      %v378 = vpack.c.b16 %v363, %v362
      %v379 = vpack.c.b16 %v365, %v364
      %v380 = vpack.c.b16 %v367, %v366
      %v381 = vpack.c.b16 %v369, %v368
      %v382 = vpack.c.b16 %v371, %v370
      %v383 = vpack.c.b16 %v373, %v372
      %v384 = vpack.c.b16 %v375, %v374
      %v385 = vpack.c.b16 %v377, %v376
      %394 = vmatprep.subr.bf16.mxu0 0
      %395 = vmatpush1.bf16.msra.mxu0 %v378
      %396 = vmatprep.subr.bf16.mxu0 0
      %397 = vmatpush1.bf16.msra.mxu0 %v379
      %398 = vmatprep.subr.bf16.mxu0 0
      %399 = vmatpush1.bf16.msra.mxu0 %v380
      %400 = vmatprep.subr.bf16.mxu0 0
      %401 = vmatpush1.bf16.msra.mxu0 %v381
      %402 = vmatprep.subr.bf16.mxu0 0
      %403 = vmatpush1.bf16.msra.mxu0 %v382
      %404 = vmatprep.subr.bf16.mxu0 0
      %405 = vmatpush1.bf16.msra.mxu0 %v383
      %406 = vmatprep.subr.bf16.mxu0 0
      %407 = vmatpush1.bf16.msra.mxu0 %v384
      %408 = vmatprep.subr.bf16.mxu0 0
      %409 = vmatpush1.bf16.msra.mxu0 %v385
      %410 = vmatprep.subr.bf16.mxu0 0
      %411 = vmatpush1.bf16.msra.mxu0 0
      %412 = vmatprep.subr.bf16.mxu0 0
      %413 = vmatpush1.bf16.msra.mxu0 0
      %414 = vmatprep.subr.bf16.mxu0 0
      %415 = vmatpush1.bf16.msra.mxu0 0
      %416 = vmatprep.subr.bf16.mxu0 0
      %417 = vmatpush1.bf16.msra.mxu0 0
      %418 = vmatprep.subr.bf16.mxu0 0
      %419 = vmatpush1.bf16.msra.mxu0 0
      %420 = vmatprep.subr.bf16.mxu0 0
      %421 = vmatpush1.bf16.msra.mxu0 0
      %422 = vmatprep.subr.bf16.mxu0 0
      %423 = vmatpush1.bf16.msra.mxu0 0
      %424 = vmatprep.subr.bf16.mxu0 0
      %425 = vmatpush1.bf16.msra.mxu0 0
      %426 = vmatprep.mubr.bf16.mxu0 0
      %427 = vmatmul.mubr.bf16.gmra.mrb[0].mxu0 %v314
      %v428 = vpop.f32.mrb[0].mxu0
      %v429 = vadd.f32 0.0, %v428
      %v430 = vpop.f32.mrb[0].mxu0
      %v431 = vpop.f32.mrb[0].mxu0
      %v432 = vadd.f32 0.0, %v431
      %v433 = vpop.f32.mrb[0].mxu0
      %434 = vmatprep.mubr.bf16.mxu0 0
      %435 = vmatmul.mubr.bf16.gmra.mrb[0].mxu0 %v315
      %v436 = vpop.f32.mrb[0].mxu0
      %v437 = vadd.f32 0.0, %v436
      %v438 = vpop.f32.mrb[0].mxu0
      %v439 = vpop.f32.mrb[0].mxu0
      %v440 = vadd.f32 0.0, %v439
      %v441 = vpop.f32.mrb[0].mxu0
      %442 = vmatprep.mubr.bf16.mxu0 0
      %443 = vmatmul.mubr.bf16.gmra.mrb[0].mxu0 %v316
      %v444 = vpop.f32.mrb[0].mxu0
      %v445 = vadd.f32 0.0, %v444
      %v446 = vpop.f32.mrb[0].mxu0
      %v447 = vpop.f32.mrb[0].mxu0
      %v448 = vadd.f32 0.0, %v447
      %v449 = vpop.f32.mrb[0].mxu0
      %450 = vmatprep.mubr.bf16.mxu0 0
      %451 = vmatmul.mubr.bf16.gmra.mrb[0].mxu0 %v317
      %v452 = vpop.f32.mrb[0].mxu0
      %v453 = vadd.f32 0.0, %v452
      %v454 = vpop.f32.mrb[0].mxu0
      %v455 = vpop.f32.mrb[0].mxu0
      %v456 = vadd.f32 0.0, %v455
      %v457 = vpop.f32.mrb[0].mxu0
      %458 = vmatprep.mubr.bf16.mxu0 0
      %459 = vmatmul.mubr.bf16.gmra.mrb[0].mxu0 %v318
      %v460 = vpop.f32.mrb[0].mxu0
      %v461 = vadd.f32 0.0, %v460
      %v462 = vpop.f32.mrb[0].mxu0
      %v463 = vpop.f32.mrb[0].mxu0
      %v464 = vadd.f32 0.0, %v463
      %v465 = vpop.f32.mrb[0].mxu0
      %466 = vmatprep.mubr.bf16.mxu0 0
      %467 = vmatmul.mubr.bf16.gmra.mrb[0].mxu0 %v319
      %v468 = vpop.f32.mrb[0].mxu0
      %v469 = vadd.f32 0.0, %v468
      %v470 = vpop.f32.mrb[0].mxu0
      %v471 = vpop.f32.mrb[0].mxu0
      %v472 = vadd.f32 0.0, %v471
      %v473 = vpop.f32.mrb[0].mxu0
      %474 = vmatprep.mubr.bf16.mxu0 0
      %475 = vmatmul.mubr.bf16.gmra.mrb[0].mxu0 %v320
      %v476 = vpop.f32.mrb[0].mxu0
      %v477 = vadd.f32 0.0, %v476
      %v478 = vpop.f32.mrb[0].mxu0
      %v479 = vpop.f32.mrb[0].mxu0
      %v480 = vadd.f32 0.0, %v479
      %v481 = vpop.f32.mrb[0].mxu0
      %482 = vmatprep.mubr.bf16.mxu0 0
      %483 = vmatmul.mubr.bf16.gmra.mrb[0].mxu0 %v321
      %v484 = vpop.f32.mrb[0].mxu0
      %v485 = vadd.f32 0.0, %v484
      %v486 = vpop.f32.mrb[0].mxu0
      %v487 = vpop.f32.mrb[0].mxu0
      %v488 = vadd.f32 0.0, %v487
      %v489 = vpop.f32.mrb[0].mxu0
      %490 = vmatprep.mubr.bf16.mxu0 0
      %491 = vmatmul.mubr.bf16.gmra.mrb[0].mxu0 %v322
      %v492 = vpop.f32.mrb[0].mxu0
      %v493 = vadd.f32 0.0, %v492
      %v494 = vpop.f32.mrb[0].mxu0
      %v495 = vpop.f32.mrb[0].mxu0
      %v496 = vadd.f32 0.0, %v495
      %v497 = vpop.f32.mrb[0].mxu0
      %498 = vmatprep.mubr.bf16.mxu0 0
      %499 = vmatmul.mubr.bf16.gmra.mrb[0].mxu0 %v323
      %v500 = vpop.f32.mrb[0].mxu0
      %v501 = vadd.f32 0.0, %v500
      %v502 = vpop.f32.mrb[0].mxu0
      %v503 = vpop.f32.mrb[0].mxu0
      %v504 = vadd.f32 0.0, %v503
      %v505 = vpop.f32.mrb[0].mxu0
      %506 = vmatprep.mubr.bf16.mxu0 0
      %507 = vmatmul.mubr.bf16.gmra.mrb[0].mxu0 %v324
      %v508 = vpop.f32.mrb[0].mxu0
      %v509 = vadd.f32 0.0, %v508
      %v510 = vpop.f32.mrb[0].mxu0
      %v511 = vpop.f32.mrb[0].mxu0
      %v512 = vadd.f32 0.0, %v511
      %v513 = vpop.f32.mrb[0].mxu0
      %514 = vmatprep.mubr.bf16.mxu0 0
      %515 = vmatmul.mubr.bf16.gmra.mrb[0].mxu0 %v325
      %v516 = vpop.f32.mrb[0].mxu0
      %v517 = vadd.f32 0.0, %v516
      %v518 = vpop.f32.mrb[0].mxu0
      %v519 = vpop.f32.mrb[0].mxu0
      %v520 = vadd.f32 0.0, %v519
      %v521 = vpop.f32.mrb[0].mxu0
      %522 = vmatprep.mubr.bf16.mxu0 0
      %523 = vmatmul.mubr.bf16.gmra.mrb[0].mxu0 %v326
      %v524 = vpop.f32.mrb[0].mxu0
      %v525 = vadd.f32 0.0, %v524
      %v526 = vpop.f32.mrb[0].mxu0
      %v527 = vpop.f32.mrb[0].mxu0
      %v528 = vadd.f32 0.0, %v527
      %v529 = vpop.f32.mrb[0].mxu0
      %530 = vmatprep.mubr.bf16.mxu0 0
      %531 = vmatmul.mubr.bf16.gmra.mrb[0].mxu0 %v327
      %v532 = vpop.f32.mrb[0].mxu0
      %v533 = vadd.f32 0.0, %v532
      %v534 = vpop.f32.mrb[0].mxu0
      %v535 = vpop.f32.mrb[0].mxu0
      %v536 = vadd.f32 0.0, %v535
      %v537 = vpop.f32.mrb[0].mxu0
      %538 = vmatprep.mubr.bf16.mxu0 0
      %539 = vmatmul.mubr.bf16.gmra.mrb[0].mxu0 %v328
      %v540 = vpop.f32.mrb[0].mxu0
      %v541 = vadd.f32 0.0, %v540
      %v542 = vpop.f32.mrb[0].mxu0
      %v543 = vpop.f32.mrb[0].mxu0
      %v544 = vadd.f32 0.0, %v543
      %v545 = vpop.f32.mrb[0].mxu0
      %546 = vmatprep.mubr.bf16.mxu0 0
      %547 = vmatmul.mubr.bf16.gmra.mrb[0].mxu0 %v329
      %v548 = vpop.f32.mrb[0].mxu0
      %v549 = vadd.f32 0.0, %v548
      %v550 = vpop.f32.mrb[0].mxu0
      %v551 = vpop.f32.mrb[0].mxu0
      %v552 = vadd.f32 0.0, %v551
      %v553 = vpop.f32.mrb[0].mxu0
      %554 = vdwg.mxu0
      %v555 = vld [vmem:[%s2] sm:$0x1]
      %v557 = vlaneseq
      %v558 = vshrl.u32 %v557, 7
      %v559 = vsub.s32 0, %v558
      %v560 = vrot.slane %v555, %v559
      %v562 = vmul.f32 %v429, %v560
      %v563 = vmul.f32 %v432, %v560
      %v564 = vmul.f32 %v437, %v560
      %v565 = vmul.f32 %v440, %v560
      %v566 = vmul.f32 %v445, %v560
      %v567 = vmul.f32 %v448, %v560
      %v568 = vmul.f32 %v453, %v560
      %v569 = vmul.f32 %v456, %v560
      %v570 = vmul.f32 %v461, %v560
      %v571 = vmul.f32 %v464, %v560
      %v572 = vmul.f32 %v469, %v560
      %v573 = vmul.f32 %v472, %v560
      %v574 = vmul.f32 %v477, %v560
      %v575 = vmul.f32 %v480, %v560
      %v576 = vmul.f32 %v485, %v560
      %v577 = vmul.f32 %v488, %v560
      %v578 = vmul.f32 %v493, %v560
      %v579 = vmul.f32 %v496, %v560
      %v580 = vmul.f32 %v501, %v560
      %v581 = vmul.f32 %v504, %v560
      %v582 = vmul.f32 %v509, %v560
      %v583 = vmul.f32 %v512, %v560
      %v584 = vmul.f32 %v517, %v560
      %v585 = vmul.f32 %v520, %v560
      %v586 = vmul.f32 %v525, %v560
      %v587 = vmul.f32 %v528, %v560
      %v588 = vmul.f32 %v533, %v560
      %v589 = vmul.f32 %v536, %v560
      %v590 = vmul.f32 %v541, %v560
      %v591 = vmul.f32 %v544, %v560
      %v592 = vmul.f32 %v549, %v560
      %v593 = vmul.f32 %v552, %v560
      %v594 = vld [vmem:[%s3] sm:$0x1]
      %v596 = vlaneseq
      %v597 = vshrl.u32 %v596, 7
      %v598 = vsub.s32 0, %v597
      %v599 = vrot.slane %v594, %v598
      %v601 = vadd.f32 %v562, %v599
      %v602 = vadd.f32 %v563, %v599
      %v603 = vadd.f32 %v564, %v599
      %v604 = vadd.f32 %v565, %v599
      %v605 = vadd.f32 %v566, %v599
      %v606 = vadd.f32 %v567, %v599
      %v607 = vadd.f32 %v568, %v599
      %v608 = vadd.f32 %v569, %v599
      %v609 = vadd.f32 %v570, %v599
      %v610 = vadd.f32 %v571, %v599
      %v611 = vadd.f32 %v572, %v599
      %v612 = vadd.f32 %v573, %v599
      %v613 = vadd.f32 %v574, %v599
      %v614 = vadd.f32 %v575, %v599
      %v615 = vadd.f32 %v576, %v599
      %v616 = vadd.f32 %v577, %v599
      %v617 = vadd.f32 %v578, %v599
      %v618 = vadd.f32 %v579, %v599
      %v619 = vadd.f32 %v580, %v599
      %v620 = vadd.f32 %v581, %v599
      %v621 = vadd.f32 %v582, %v599
      %v622 = vadd.f32 %v583, %v599
      %v623 = vadd.f32 %v584, %v599
      %v624 = vadd.f32 %v585, %v599
      %v625 = vadd.f32 %v586, %v599
      %v626 = vadd.f32 %v587, %v599
      %v627 = vadd.f32 %v588, %v599
      %v628 = vadd.f32 %v589, %v599
      %v629 = vadd.f32 %v590, %v599
      %v630 = vadd.f32 %v591, %v599
      %v631 = vadd.f32 %v592, %v599
      %v632 = vadd.f32 %v593, %v599
      %v633 = vmax.f32 %v601, 0.0
      %v634 = vmax.f32 %v602, 0.0
      %v635 = vmax.f32 %v603, 0.0
      %v636 = vmax.f32 %v604, 0.0
      %v637 = vmax.f32 %v605, 0.0
      %v638 = vmax.f32 %v606, 0.0
      %v639 = vmax.f32 %v607, 0.0
      %v640 = vmax.f32 %v608, 0.0
      %v641 = vmax.f32 %v609, 0.0
      %v642 = vmax.f32 %v610, 0.0
      %v643 = vmax.f32 %v611, 0.0
      %v644 = vmax.f32 %v612, 0.0
      %v645 = vmax.f32 %v613, 0.0
      %v646 = vmax.f32 %v614, 0.0
      %v647 = vmax.f32 %v615, 0.0
      %v648 = vmax.f32 %v616, 0.0
      %v649 = vmax.f32 %v617, 0.0
      %v650 = vmax.f32 %v618, 0.0
      %v651 = vmax.f32 %v619, 0.0
      %v652 = vmax.f32 %v620, 0.0
      %v653 = vmax.f32 %v621, 0.0
      %v654 = vmax.f32 %v622, 0.0
      %v655 = vmax.f32 %v623, 0.0
      %v656 = vmax.f32 %v624, 0.0
      %v657 = vmax.f32 %v625, 0.0
      %v658 = vmax.f32 %v626, 0.0
      %v659 = vmax.f32 %v627, 0.0
      %v660 = vmax.f32 %v628, 0.0
      %v661 = vmax.f32 %v629, 0.0
      %v662 = vmax.f32 %v630, 0.0
      %v663 = vmax.f32 %v631, 0.0
      %v664 = vmax.f32 %v632, 0.0
      %vm665 = vcmask 261120
      %666 = vst.msk [vmem:[%s199] sm:$0xff] %vm665, %v633
      %667 = vst.msk [vmem:[%s199 + $0x8] sm:$0xff] %vm665, %v634
      %668 = vst.msk [vmem:[%s199 + $0x10] sm:$0xff] %vm665, %v635
      %669 = vst.msk [vmem:[%s199 + $0x18] sm:$0xff] %vm665, %v636
      %670 = vst.msk [vmem:[%s199 + $0x20] sm:$0xff] %vm665, %v637
      %671 = vst.msk [vmem:[%s199 + $0x28] sm:$0xff] %vm665, %v638
      %672 = vst.msk [vmem:[%s199 + $0x30] sm:$0xff] %vm665, %v639
      %673 = vst.msk [vmem:[%s199 + $0x38] sm:$0xff] %vm665, %v640
      %674 = vst.msk [vmem:[%s199 + $0x40] sm:$0xff] %vm665, %v641
      %675 = vst.msk [vmem:[%s199 + $0x48] sm:$0xff] %vm665, %v642
      %676 = vst.msk [vmem:[%s199 + $0x50] sm:$0xff] %vm665, %v643
      %677 = vst.msk [vmem:[%s199 + $0x58] sm:$0xff] %vm665, %v644
      %678 = vst.msk [vmem:[%s199 + $0x60] sm:$0xff] %vm665, %v645
      %679 = vst.msk [vmem:[%s199 + $0x68] sm:$0xff] %vm665, %v646
      %680 = vst.msk [vmem:[%s199 + $0x70] sm:$0xff] %vm665, %v647
      %681 = vst.msk [vmem:[%s199 + $0x78] sm:$0xff] %vm665, %v648
      %682 = vst.msk [vmem:[%s199 + $0x80] sm:$0xff] %vm665, %v649
      %683 = vst.msk [vmem:[%s199 + $0x88] sm:$0xff] %vm665, %v650
      %684 = vst.msk [vmem:[%s199 + $0x90] sm:$0xff] %vm665, %v651
      %685 = vst.msk [vmem:[%s199 + $0x98] sm:$0xff] %vm665, %v652
      %686 = vst.msk [vmem:[%s199 + $0xa0] sm:$0xff] %vm665, %v653
      %687 = vst.msk [vmem:[%s199 + $0xa8] sm:$0xff] %vm665, %v654
      %688 = vst.msk [vmem:[%s199 + $0xb0] sm:$0xff] %vm665, %v655
      %689 = vst.msk [vmem:[%s199 + $0xb8] sm:$0xff] %vm665, %v656
      %690 = vst.msk [vmem:[%s199 + $0xc0] sm:$0xff] %vm665, %v657
      %691 = vst.msk [vmem:[%s199 + $0xc8] sm:$0xff] %vm665, %v658
      %692 = vst.msk [vmem:[%s199 + $0xd0] sm:$0xff] %vm665, %v659
      %693 = vst.msk [vmem:[%s199 + $0xd8] sm:$0xff] %vm665, %v660
      %694 = vst.msk [vmem:[%s199 + $0xe0] sm:$0xff] %vm665, %v661
      %695 = vst.msk [vmem:[%s199 + $0xe8] sm:$0xff] %vm665, %v662
      %696 = vst.msk [vmem:[%s199 + $0xf0] sm:$0xff] %vm665, %v663
      %697 = vst.msk [vmem:[%s199 + $0xf8] sm:$0xff] %vm665, %v664
      %s698 = smul.u32 32, %s15
      %p699 = scmp.lt.s32.totalorder %s698, 63
      %s700 = scalar_select %p699, %s698, 63
      %s701 = smul.addr %s700, 8
      %s702 = scalar_lea.vmem %s4, %s701
      // Predicated region
      $region37: #{bcnn_forward.3} parent=35 // pred_check
        %p703 = pneg %p122
      $region38: #{bcnn_forward.3} parent=35 // pred_check_branch
        %705 = sbr.rel (%p703) target = $region40
      $region39: #{bcnn_forward.3} parent=35 // pred_region
        %s706 = smul.u32 32, %s15
      $region40: #{bcnn_forward.3} parent=35 // pred_fallthru
        _
    $region36: #{bcnn_forward.3} parent=5 // pred_fallthru
      _
    %p707 = scmp.le.s32.totalorder 2, %s10
    // Predicated region
    $region41: #{bcnn_forward.3} parent=5 // pred_check
      %p708 = pneg %p707
    $region42: #{bcnn_forward.3} parent=5 // pred_check_branch
      %710 = sbr.rel (%p708) target = $region44
    $region43: #{bcnn_forward.3} parent=5 // pred_region
      %s711 = ssub.s32 %s10, 2
      // Predicated region
      $region45: #{bcnn_forward.3} parent=43 // pred_check
        %p712 = pneg %p128
      $region46: #{bcnn_forward.3} parent=43 // pred_check_branch
        %714 = sbr.rel (%p712) target = $region48
      $region47: #{bcnn_forward.3} parent=43 // pred_region
        %s715 = smul.u32 32, %s16
        %p716 = scmp.lt.s32.totalorder %s715, 63
        %s717 = scalar_select %p716, %s715, 63
        %s718 = smul.addr %s717, 8
        %s719 = scalar_lea.vmem %s4, %s718
      $region48: #{bcnn_forward.3} parent=43 // pred_fallthru
        _
    $region44: #{bcnn_forward.3} parent=5 // pred_fallthru
      _
  $region6: #{bcnn_forward.3} parent=0 // loop_footer
    %s14 = sadd.s32 1, %s10
  $region7: #{bcnn_forward.3} parent=0 // loop_footer_branch
    %9 = sbr.rel target = $region3
  $region8: #{bcnn_forward.3} parent=0 // loop_exit
    _

// kernel: bcnn_forward.4
$region0: #{bcnn_forward.4}
  #allocation0 [shape = 'u32[]', space=smem, size = 0x4, offset = 0x4, fixed_abs, tag = 'smem constant byte address 0x4 - core index']
  #allocation1 [shape = 'u32[144,128]{1,0:T(1,128)}', space=vmem, size = 0x12000, scoped, tag = 'internal scratch']
  %s0 = inlined_call_operand.vmem [shape: bf16[256,896], index: 0, kind: input, shape index: {}]
  %s1 = inlined_call_operand.vmem [shape: bf16[896,64], index: 1, kind: input, shape index: {}]
  %s2 = inlined_call_operand.vmem [shape: f32[1,64], index: 2, kind: input, shape index: {}]
  %s3 = inlined_call_operand.vmem [shape: f32[1,64], index: 3, kind: input, shape index: {}]
  %s4 = inlined_call_operand.vmem [shape: f32[256,64], index: 4, kind: output, shape index: {}]
  %s5 = sld [smem:[#allocation0]]
  $region26: #{bcnn_forward.4} parent=0
    _
  %s7 = ssub.s32 1, %s5
  %s8 = scalar_select 0, %s7, %s5
  // Predicated region
  $region2: #{bcnn_forward.4} parent=0 // pred_check
    _
  $region3: #{bcnn_forward.4} parent=0 // pred_check_branch
    %10 = sbr.rel (0) target = $region5
  $region4: #{bcnn_forward.4} parent=0 // pred_region
    _
  $region5: #{bcnn_forward.4} parent=0 // pred_fallthru
    _
  // Predicated region
  $region6: #{bcnn_forward.4} parent=0 // pred_check
    _
  $region7: #{bcnn_forward.4} parent=0 // pred_check_branch
    %12 = sbr.rel (0) target = $region9
  $region8: #{bcnn_forward.4} parent=0 // pred_region
    _
  $region9: #{bcnn_forward.4} parent=0 // pred_fallthru
    _
  // Predicated region
  $region10: #{bcnn_forward.4} parent=0 // pred_check
    _
  $region11: #{bcnn_forward.4} parent=0 // pred_check_branch
    %14 = sbr.rel (0) target = $region13
  $region12: #{bcnn_forward.4} parent=0 // pred_region
    _
  $region13: #{bcnn_forward.4} parent=0 // pred_fallthru
    _
  // Predicated region
  $region14: #{bcnn_forward.4} parent=0 // pred_check
    _
  $region15: #{bcnn_forward.4} parent=0 // pred_check_branch
    %16 = sbr.rel (0) target = $region17
  $region16: #{bcnn_forward.4} parent=0 // pred_region
    _
  $region17: #{bcnn_forward.4} parent=0 // pred_fallthru
    _
  %v18 = vld [vmem:[%s0] sm:$0xff]
  %v19 = vld [vmem:[%s0 + $0x8] sm:$0xff]
  %v20 = vld [vmem:[%s0 + $0x10] sm:$0xff]
  %v21 = vld [vmem:[%s0 + $0x18] sm:$0xf]
  %v22 = vld [vmem:[%s0 + $0x1c] sm:$0xff]
  %v23 = vld [vmem:[%s0 + $0x24] sm:$0xff]
  %v24 = vld [vmem:[%s0 + $0x2c] sm:$0xff]
  %v25 = vld [vmem:[%s0 + $0x34] sm:$0xf]
  %v26 = vld [vmem:[%s0 + $0x38] sm:$0xff]
  %v27 = vld [vmem:[%s0 + $0x40] sm:$0xff]
  %v28 = vld [vmem:[%s0 + $0x48] sm:$0xff]
  %v29 = vld [vmem:[%s0 + $0x50] sm:$0xf]
  %v30 = vld [vmem:[%s0 + $0x54] sm:$0xff]
  %v31 = vld [vmem:[%s0 + $0x5c] sm:$0xff]
  %v32 = vld [vmem:[%s0 + $0x64] sm:$0xff]
  %v33 = vld [vmem:[%s0 + $0x6c] sm:$0xf]
  %v34 = vld [vmem:[%s0 + $0x70] sm:$0xff]
  %v35 = vld [vmem:[%s0 + $0x78] sm:$0xff]
  %v36 = vld [vmem:[%s0 + $0x80] sm:$0xff]
  %v37 = vld [vmem:[%s0 + $0x88] sm:$0xf]
  %v38 = vld [vmem:[%s0 + $0x8c] sm:$0xff]
  %v39 = vld [vmem:[%s0 + $0x94] sm:$0xff]
  %v40 = vld [vmem:[%s0 + $0x9c] sm:$0xff]
  %v41 = vld [vmem:[%s0 + $0xa4] sm:$0xf]
  %v42 = vld [vmem:[%s0 + $0xa8] sm:$0xff]
  %v43 = vld [vmem:[%s0 + $0xb0] sm:$0xff]
  %v44 = vld [vmem:[%s0 + $0xb8] sm:$0xff]
  %v45 = vld [vmem:[%s0 + $0xc0] sm:$0xf]
  %v46 = vld [vmem:[%s0 + $0xc4] sm:$0xff]
  %v47 = vld [vmem:[%s0 + $0xcc] sm:$0xff]
  %v48 = vld [vmem:[%s0 + $0xd4] sm:$0xff]
  %v49 = vld [vmem:[%s0 + $0xdc] sm:$0xf]
  %v50 = vld [vmem:[%s0 + $0xe0] sm:$0xff]
  %v51 = vld [vmem:[%s0 + $0xe8] sm:$0xff]
  %v52 = vld [vmem:[%s0 + $0xf0] sm:$0xff]
  %v53 = vld [vmem:[%s0 + $0xf8] sm:$0xf]
  %v54 = vld [vmem:[%s0 + $0xfc] sm:$0xff]
  %v55 = vld [vmem:[%s0 + $0x104] sm:$0xff]
  %v56 = vld [vmem:[%s0 + $0x10c] sm:$0xff]
  %v57 = vld [vmem:[%s0 + $0x114] sm:$0xf]
  %v58 = vld [vmem:[%s0 + $0x118] sm:$0xff]
  %v59 = vld [vmem:[%s0 + $0x120] sm:$0xff]
  %v60 = vld [vmem:[%s0 + $0x128] sm:$0xff]
  %v61 = vld [vmem:[%s0 + $0x130] sm:$0xf]
  %v62 = vld [vmem:[%s0 + $0x134] sm:$0xff]
  %v63 = vld [vmem:[%s0 + $0x13c] sm:$0xff]
  %v64 = vld [vmem:[%s0 + $0x144] sm:$0xff]
  %v65 = vld [vmem:[%s0 + $0x14c] sm:$0xf]
  %v66 = vld [vmem:[%s0 + $0x150] sm:$0xff]
  %v67 = vld [vmem:[%s0 + $0x158] sm:$0xff]
  %v68 = vld [vmem:[%s0 + $0x160] sm:$0xff]
  %v69 = vld [vmem:[%s0 + $0x168] sm:$0xf]
  %v70 = vld [vmem:[%s0 + $0x16c] sm:$0xff]
  %v71 = vld [vmem:[%s0 + $0x174] sm:$0xff]
  %v72 = vld [vmem:[%s0 + $0x17c] sm:$0xff]
  %v73 = vld [vmem:[%s0 + $0x184] sm:$0xf]
  %v74 = vld [vmem:[%s0 + $0x188] sm:$0xff]
  %v75 = vld [vmem:[%s0 + $0x190] sm:$0xff]
  %v76 = vld [vmem:[%s0 + $0x198] sm:$0xff]
  %v77 = vld [vmem:[%s0 + $0x1a0] sm:$0xf]
  %v78 = vld [vmem:[%s0 + $0x1a4] sm:$0xff]
  %v79 = vld [vmem:[%s0 + $0x1ac] sm:$0xff]
  %v80 = vld [vmem:[%s0 + $0x1b4] sm:$0xff]
  %v81 = vld [vmem:[%s0 + $0x1bc] sm:$0xf]
  %v82 = vld [vmem:[%s0 + $0x1c0] sm:$0xff]
  %v83 = vld [vmem:[%s0 + $0x1c8] sm:$0xff]
  %v84 = vld [vmem:[%s0 + $0x1d0] sm:$0xff]
  %v85 = vld [vmem:[%s0 + $0x1d8] sm:$0xf]
  %v86 = vld [vmem:[%s0 + $0x1dc] sm:$0xff]
  %v87 = vld [vmem:[%s0 + $0x1e4] sm:$0xff]
  %v88 = vld [vmem:[%s0 + $0x1ec] sm:$0xff]
  %v89 = vld [vmem:[%s0 + $0x1f4] sm:$0xf]
  %v90 = vld [vmem:[%s0 + $0x1f8] sm:$0xff]
  %v91 = vld [vmem:[%s0 + $0x200] sm:$0xff]
  %v92 = vld [vmem:[%s0 + $0x208] sm:$0xff]
  %v93 = vld [vmem:[%s0 + $0x210] sm:$0xf]
  %v94 = vld [vmem:[%s0 + $0x214] sm:$0xff]
  %v95 = vld [vmem:[%s0 + $0x21c] sm:$0xff]
  %v96 = vld [vmem:[%s0 + $0x224] sm:$0xff]
  %v97 = vld [vmem:[%s0 + $0x22c] sm:$0xf]
  %v98 = vld [vmem:[%s0 + $0x230] sm:$0xff]
  %v99 = vld [vmem:[%s0 + $0x238] sm:$0xff]
  %v100 = vld [vmem:[%s0 + $0x240] sm:$0xff]
  %v101 = vld [vmem:[%s0 + $0x248] sm:$0xf]
  %v102 = vld [vmem:[%s0 + $0x24c] sm:$0xff]
  %v103 = vld [vmem:[%s0 + $0x254] sm:$0xff]
  %v104 = vld [vmem:[%s0 + $0x25c] sm:$0xff]
  %v105 = vld [vmem:[%s0 + $0x264] sm:$0xf]
  %v106 = vld [vmem:[%s0 + $0x268] sm:$0xff]
  %v107 = vld [vmem:[%s0 + $0x270] sm:$0xff]
  %v108 = vld [vmem:[%s0 + $0x278] sm:$0xff]
  %v109 = vld [vmem:[%s0 + $0x280] sm:$0xf]
  %v110 = vld [vmem:[%s0 + $0x284] sm:$0xff]
  %v111 = vld [vmem:[%s0 + $0x28c] sm:$0xff]
  %v112 = vld [vmem:[%s0 + $0x294] sm:$0xff]
  %v113 = vld [vmem:[%s0 + $0x29c] sm:$0xf]
  %v114 = vld [vmem:[%s0 + $0x2a0] sm:$0xff]
  %v115 = vld [vmem:[%s0 + $0x2a8] sm:$0xff]
  %v116 = vld [vmem:[%s0 + $0x2b0] sm:$0xff]
  %v117 = vld [vmem:[%s0 + $0x2b8] sm:$0xf]
  %v118 = vld [vmem:[%s0 + $0x2bc] sm:$0xff]
  %v119 = vld [vmem:[%s0 + $0x2c4] sm:$0xff]
  %v120 = vld [vmem:[%s0 + $0x2cc] sm:$0xff]
  %v121 = vld [vmem:[%s0 + $0x2d4] sm:$0xf]
  %v122 = vld [vmem:[%s0 + $0x2d8] sm:$0xff]
  %v123 = vld [vmem:[%s0 + $0x2e0] sm:$0xff]
  %v124 = vld [vmem:[%s0 + $0x2e8] sm:$0xff]
  %v125 = vld [vmem:[%s0 + $0x2f0] sm:$0xf]
  %v126 = vld [vmem:[%s0 + $0x2f4] sm:$0xff]
  %v127 = vld [vmem:[%s0 + $0x2fc] sm:$0xff]
  %v128 = vld [vmem:[%s0 + $0x304] sm:$0xff]
  %v129 = vld [vmem:[%s0 + $0x30c] sm:$0xf]
  %v130 = vld [vmem:[%s0 + $0x310] sm:$0xff]
  %v131 = vld [vmem:[%s0 + $0x318] sm:$0xff]
  %v132 = vld [vmem:[%s0 + $0x320] sm:$0xff]
  %v133 = vld [vmem:[%s0 + $0x328] sm:$0xf]
  %v134 = vld [vmem:[%s0 + $0x32c] sm:$0xff]
  %v135 = vld [vmem:[%s0 + $0x334] sm:$0xff]
  %v136 = vld [vmem:[%s0 + $0x33c] sm:$0xff]
  %v137 = vld [vmem:[%s0 + $0x344] sm:$0xf]
  %v138 = vld [vmem:[%s0 + $0x348] sm:$0xff]
  %v139 = vld [vmem:[%s0 + $0x350] sm:$0xff]
  %v140 = vld [vmem:[%s0 + $0x358] sm:$0xff]
  %v141 = vld [vmem:[%s0 + $0x360] sm:$0xf]
  %v142 = vld [vmem:[%s0 + $0x364] sm:$0xff]
  %v143 = vld [vmem:[%s0 + $0x36c] sm:$0xff]
  %v144 = vld [vmem:[%s0 + $0x374] sm:$0xff]
  %v145 = vld [vmem:[%s0 + $0x37c] sm:$0xf]
  %v146 = vld [vmem:[%s1] sm:$0xf]
  %v147 = vld [vmem:[%s1 + $0x4] sm:$0xf]
  %v148 = vld [vmem:[%s1 + $0x8] sm:$0xf]
  %v149 = vld [vmem:[%s1 + $0xc] sm:$0xf]
  %v150 = vld [vmem:[%s1 + $0x10] sm:$0xf]
  %v151 = vld [vmem:[%s1 + $0x14] sm:$0xf]
  %v152 = vld [vmem:[%s1 + $0x18] sm:$0xf]
  %v153 = vld [vmem:[%s1 + $0x1c] sm:$0xf]
  %v154 = vld [vmem:[%s1 + $0x20] sm:$0xf]
  %v155 = vld [vmem:[%s1 + $0x24] sm:$0xf]
  %v156 = vld [vmem:[%s1 + $0x28] sm:$0xf]
  %v157 = vld [vmem:[%s1 + $0x2c] sm:$0xf]
  %v158 = vld [vmem:[%s1 + $0x30] sm:$0xf]
  %v159 = vld [vmem:[%s1 + $0x34] sm:$0xf]
  %v160 = vld [vmem:[%s1 + $0x38] sm:$0xf]
  %v161 = vld [vmem:[%s1 + $0x3c] sm:$0xf]
  %v162 = vld [vmem:[%s1 + $0x40] sm:$0xf]
  %v163 = vld [vmem:[%s1 + $0x44] sm:$0xf]
  %v164 = vld [vmem:[%s1 + $0x48] sm:$0xf]
  %v165 = vld [vmem:[%s1 + $0x4c] sm:$0xf]
  %v166 = vld [vmem:[%s1 + $0x50] sm:$0xf]
  %v167 = vld [vmem:[%s1 + $0x54] sm:$0xf]
  %v168 = vld [vmem:[%s1 + $0x58] sm:$0xf]
  %v169 = vld [vmem:[%s1 + $0x5c] sm:$0xf]
  %v170 = vld [vmem:[%s1 + $0x60] sm:$0xf]
  %v171 = vld [vmem:[%s1 + $0x64] sm:$0xf]
  %v172 = vld [vmem:[%s1 + $0x68] sm:$0xf]
  %v173 = vld [vmem:[%s1 + $0x6c] sm:$0xf]
  %v174 = vld [vmem:[%s1 + $0x70] sm:$0xf]
  %v175 = vld [vmem:[%s1 + $0x74] sm:$0xf]
  %v176 = vld [vmem:[%s1 + $0x78] sm:$0xf]
  %v177 = vld [vmem:[%s1 + $0x7c] sm:$0xf]
  %v178 = vld [vmem:[%s1 + $0x80] sm:$0xf]
  %v179 = vld [vmem:[%s1 + $0x84] sm:$0xf]
  %v180 = vld [vmem:[%s1 + $0x88] sm:$0xf]
  %v181 = vld [vmem:[%s1 + $0x8c] sm:$0xf]
  %v182 = vld [vmem:[%s1 + $0x90] sm:$0xf]
  %v183 = vld [vmem:[%s1 + $0x94] sm:$0xf]
  %v184 = vld [vmem:[%s1 + $0x98] sm:$0xf]
  %v185 = vld [vmem:[%s1 + $0x9c] sm:$0xf]
  %v186 = vld [vmem:[%s1 + $0xa0] sm:$0xf]
  %v187 = vld [vmem:[%s1 + $0xa4] sm:$0xf]
  %v188 = vld [vmem:[%s1 + $0xa8] sm:$0xf]
  %v189 = vld [vmem:[%s1 + $0xac] sm:$0xf]
  %v190 = vld [vmem:[%s1 + $0xb0] sm:$0xf]
  %v191 = vld [vmem:[%s1 + $0xb4] sm:$0xf]
  %v192 = vld [vmem:[%s1 + $0xb8] sm:$0xf]
  %v193 = vld [vmem:[%s1 + $0xbc] sm:$0xf]
  %v194 = vld [vmem:[%s1 + $0xc0] sm:$0xf]
  %v195 = vld [vmem:[%s1 + $0xc4] sm:$0xf]
  %v196 = vld [vmem:[%s1 + $0xc8] sm:$0xf]
  %v197 = vld [vmem:[%s1 + $0xcc] sm:$0xf]
  %v198 = vld [vmem:[%s1 + $0xd0] sm:$0xf]
  %v199 = vld [vmem:[%s1 + $0xd4] sm:$0xf]
  %v200 = vld [vmem:[%s1 + $0xd8] sm:$0xf]
  %v201 = vld [vmem:[%s1 + $0xdc] sm:$0xf]
  %v202 = vld [vmem:[%s1 + $0xe0] sm:$0xf]
  %v203 = vld [vmem:[%s1 + $0xe4] sm:$0xf]
  %v204 = vld [vmem:[%s1 + $0xe8] sm:$0xf]
  %v205 = vld [vmem:[%s1 + $0xec] sm:$0xf]
  %v206 = vld [vmem:[%s1 + $0xf0] sm:$0xf]
  %v207 = vld [vmem:[%s1 + $0xf4] sm:$0xf]
  %v208 = vld [vmem:[%s1 + $0xf8] sm:$0xf]
  %v209 = vld [vmem:[%s1 + $0xfc] sm:$0xf]
  %v210 = vld [vmem:[%s1 + $0x100] sm:$0xf]
  %v211 = vld [vmem:[%s1 + $0x104] sm:$0xf]
  %v212 = vld [vmem:[%s1 + $0x108] sm:$0xf]
  %v213 = vld [vmem:[%s1 + $0x10c] sm:$0xf]
  %v214 = vld [vmem:[%s1 + $0x110] sm:$0xf]
  %v215 = vld [vmem:[%s1 + $0x114] sm:$0xf]
  %v216 = vld [vmem:[%s1 + $0x118] sm:$0xf]
  %v217 = vld [vmem:[%s1 + $0x11c] sm:$0xf]
  %v218 = vld [vmem:[%s1 + $0x120] sm:$0xf]
  %v219 = vld [vmem:[%s1 + $0x124] sm:$0xf]
  %v220 = vld [vmem:[%s1 + $0x128] sm:$0xf]
  %v221 = vld [vmem:[%s1 + $0x12c] sm:$0xf]
  %v222 = vld [vmem:[%s1 + $0x130] sm:$0xf]
  %v223 = vld [vmem:[%s1 + $0x134] sm:$0xf]
  %v224 = vld [vmem:[%s1 + $0x138] sm:$0xf]
  %v225 = vld [vmem:[%s1 + $0x13c] sm:$0xf]
  %v226 = vld [vmem:[%s1 + $0x140] sm:$0xf]
  %v227 = vld [vmem:[%s1 + $0x144] sm:$0xf]
  %v228 = vld [vmem:[%s1 + $0x148] sm:$0xf]
  %v229 = vld [vmem:[%s1 + $0x14c] sm:$0xf]
  %v230 = vld [vmem:[%s1 + $0x150] sm:$0xf]
  %v231 = vld [vmem:[%s1 + $0x154] sm:$0xf]
  %v232 = vld [vmem:[%s1 + $0x158] sm:$0xf]
  %v233 = vld [vmem:[%s1 + $0x15c] sm:$0xf]
  %v234 = vld [vmem:[%s1 + $0x160] sm:$0xf]
  %v235 = vld [vmem:[%s1 + $0x164] sm:$0xf]
  %v236 = vld [vmem:[%s1 + $0x168] sm:$0xf]
  %v237 = vld [vmem:[%s1 + $0x16c] sm:$0xf]
  %v238 = vld [vmem:[%s1 + $0x170] sm:$0xf]
  %v239 = vld [vmem:[%s1 + $0x174] sm:$0xf]
  %v240 = vld [vmem:[%s1 + $0x178] sm:$0xf]
  %v241 = vld [vmem:[%s1 + $0x17c] sm:$0xf]
  %v242 = vld [vmem:[%s1 + $0x180] sm:$0xf]
  %v243 = vld [vmem:[%s1 + $0x184] sm:$0xf]
  %v244 = vld [vmem:[%s1 + $0x188] sm:$0xf]
  %v245 = vld [vmem:[%s1 + $0x18c] sm:$0xf]
  %v246 = vld [vmem:[%s1 + $0x190] sm:$0xf]
  %v247 = vld [vmem:[%s1 + $0x194] sm:$0xf]
  %v248 = vld [vmem:[%s1 + $0x198] sm:$0xf]
  %v249 = vld [vmem:[%s1 + $0x19c] sm:$0xf]
  %v250 = vld [vmem:[%s1 + $0x1a0] sm:$0xf]
  %v251 = vld [vmem:[%s1 + $0x1a4] sm:$0xf]
  %v252 = vld [vmem:[%s1 + $0x1a8] sm:$0xf]
  %v253 = vld [vmem:[%s1 + $0x1ac] sm:$0xf]
  %v254 = vld [vmem:[%s1 + $0x1b0] sm:$0xf]
  %v255 = vld [vmem:[%s1 + $0x1b4] sm:$0xf]
  %v256 = vld [vmem:[%s1 + $0x1b8] sm:$0xf]
  %v257 = vld [vmem:[%s1 + $0x1bc] sm:$0xf]
  %v386 = vunpack.c.l.b16 %v18
  %v387 = vunpack.c.h.b16 %v18
  %v388 = vunpack.c.l.b16 %v19
  %v389 = vunpack.c.h.b16 %v19
  %v390 = vunpack.c.l.b16 %v20
  %v391 = vunpack.c.h.b16 %v20
  %v392 = vunpack.c.l.b16 %v21
  %v393 = vunpack.c.l.b16 %v22
  %v394 = vunpack.c.h.b16 %v22
  %v395 = vunpack.c.l.b16 %v23
  %v396 = vunpack.c.h.b16 %v23
  %v397 = vunpack.c.l.b16 %v24
  %v398 = vunpack.c.h.b16 %v24
  %v399 = vunpack.c.l.b16 %v25
  %v400 = vunpack.c.l.b16 %v26
  %v401 = vunpack.c.h.b16 %v26
  %v402 = vunpack.c.l.b16 %v27
  %v403 = vunpack.c.h.b16 %v27
  %v404 = vunpack.c.l.b16 %v28
  %v405 = vunpack.c.h.b16 %v28
  %v406 = vunpack.c.l.b16 %v29
  %v407 = vunpack.c.l.b16 %v30
  %v408 = vunpack.c.h.b16 %v30
  %v409 = vunpack.c.l.b16 %v31
  %v410 = vunpack.c.h.b16 %v31
  %v411 = vunpack.c.l.b16 %v32
  %v412 = vunpack.c.h.b16 %v32
  %v413 = vunpack.c.l.b16 %v33
  %v414 = vunpack.c.l.b16 %v34
  %v415 = vunpack.c.h.b16 %v34
  %v416 = vunpack.c.l.b16 %v35
  %v417 = vunpack.c.h.b16 %v35
  %v418 = vunpack.c.l.b16 %v36
  %v419 = vunpack.c.h.b16 %v36
  %v420 = vunpack.c.l.b16 %v37
  %v421 = vunpack.c.l.b16 %v38
  %v422 = vunpack.c.h.b16 %v38
  %v423 = vunpack.c.l.b16 %v39
  %v424 = vunpack.c.h.b16 %v39
  %v425 = vunpack.c.l.b16 %v40
  %v426 = vunpack.c.h.b16 %v40
  %v427 = vunpack.c.l.b16 %v41
  %v428 = vunpack.c.l.b16 %v42
  %v429 = vunpack.c.h.b16 %v42
  %v430 = vunpack.c.l.b16 %v43
  %v431 = vunpack.c.h.b16 %v43
  %v432 = vunpack.c.l.b16 %v44
  %v433 = vunpack.c.h.b16 %v44
  %v434 = vunpack.c.l.b16 %v45
  %v435 = vunpack.c.l.b16 %v46
  %v436 = vunpack.c.h.b16 %v46
  %v437 = vunpack.c.l.b16 %v47
  %v438 = vunpack.c.h.b16 %v47
  %v439 = vunpack.c.l.b16 %v48
  %v440 = vunpack.c.h.b16 %v48
  %v441 = vunpack.c.l.b16 %v49
  %v442 = vunpack.c.l.b16 %v50
  %v443 = vunpack.c.h.b16 %v50
  %v444 = vunpack.c.l.b16 %v51
  %v445 = vunpack.c.h.b16 %v51
  %v446 = vunpack.c.l.b16 %v52
  %v447 = vunpack.c.h.b16 %v52
  %v448 = vunpack.c.l.b16 %v53
  %v449 = vunpack.c.l.b16 %v54
  %v450 = vunpack.c.h.b16 %v54
  %v451 = vunpack.c.l.b16 %v55
  %v452 = vunpack.c.h.b16 %v55
  %v453 = vunpack.c.l.b16 %v56
  %v454 = vunpack.c.h.b16 %v56
  %v455 = vunpack.c.l.b16 %v57
  %v456 = vunpack.c.l.b16 %v58
  %v457 = vunpack.c.h.b16 %v58
  %v458 = vunpack.c.l.b16 %v59
  %v459 = vunpack.c.h.b16 %v59
  %v460 = vunpack.c.l.b16 %v60
  %v461 = vunpack.c.h.b16 %v60
  %v462 = vunpack.c.l.b16 %v61
  %v463 = vunpack.c.l.b16 %v62
  %v464 = vunpack.c.h.b16 %v62
  %v465 = vunpack.c.l.b16 %v63
  %v466 = vunpack.c.h.b16 %v63
  %v467 = vunpack.c.l.b16 %v64
  %v468 = vunpack.c.h.b16 %v64
  %v469 = vunpack.c.l.b16 %v65
  %v470 = vunpack.c.l.b16 %v66
  %v471 = vunpack.c.h.b16 %v66
  %v472 = vunpack.c.l.b16 %v67
  %v473 = vunpack.c.h.b16 %v67
  %v474 = vunpack.c.l.b16 %v68
  %v475 = vunpack.c.h.b16 %v68
  %v476 = vunpack.c.l.b16 %v69
  %v477 = vunpack.c.l.b16 %v70
  %v478 = vunpack.c.h.b16 %v70
  %v479 = vunpack.c.l.b16 %v71
  %v480 = vunpack.c.h.b16 %v71
  %v481 = vunpack.c.l.b16 %v72
  %v482 = vunpack.c.h.b16 %v72
  %v483 = vunpack.c.l.b16 %v73
  %v484 = vunpack.c.l.b16 %v74
  %v485 = vunpack.c.h.b16 %v74
  %v486 = vunpack.c.l.b16 %v75
  %v487 = vunpack.c.h.b16 %v75
  %v488 = vunpack.c.l.b16 %v76
  %v489 = vunpack.c.h.b16 %v76
  %v490 = vunpack.c.l.b16 %v77
  %v491 = vunpack.c.l.b16 %v78
  %v492 = vunpack.c.h.b16 %v78
  %v493 = vunpack.c.l.b16 %v79
  %v494 = vunpack.c.h.b16 %v79
  %v495 = vunpack.c.l.b16 %v80
  %v496 = vunpack.c.h.b16 %v80
  %v497 = vunpack.c.l.b16 %v81
  %v498 = vunpack.c.l.b16 %v82
  %v499 = vunpack.c.h.b16 %v82
  %v500 = vunpack.c.l.b16 %v83
  %v501 = vunpack.c.h.b16 %v83
  %v502 = vunpack.c.l.b16 %v84
  %v503 = vunpack.c.h.b16 %v84
  %v504 = vunpack.c.l.b16 %v85
  %v505 = vunpack.c.l.b16 %v86
  %v506 = vunpack.c.h.b16 %v86
  %v507 = vunpack.c.l.b16 %v87
  %v508 = vunpack.c.h.b16 %v87
  %v509 = vunpack.c.l.b16 %v88
  %v510 = vunpack.c.h.b16 %v88
  %v511 = vunpack.c.l.b16 %v89
  %v512 = vunpack.c.l.b16 %v90
  %v513 = vunpack.c.h.b16 %v90
  %v514 = vunpack.c.l.b16 %v91
  %v515 = vunpack.c.h.b16 %v91
  %v516 = vunpack.c.l.b16 %v92
  %v517 = vunpack.c.h.b16 %v92
  %v518 = vunpack.c.l.b16 %v93
  %v519 = vunpack.c.l.b16 %v94
  %v520 = vunpack.c.h.b16 %v94
  %v521 = vunpack.c.l.b16 %v95
  %v522 = vunpack.c.h.b16 %v95
  %v523 = vunpack.c.l.b16 %v96
  %v524 = vunpack.c.h.b16 %v96
  %v525 = vunpack.c.l.b16 %v97
  %v526 = vunpack.c.l.b16 %v98
  %v527 = vunpack.c.h.b16 %v98
  %v528 = vunpack.c.l.b16 %v99
  %v529 = vunpack.c.h.b16 %v99
  %v530 = vunpack.c.l.b16 %v100
  %v531 = vunpack.c.h.b16 %v100
  %v532 = vunpack.c.l.b16 %v101
  %v533 = vunpack.c.l.b16 %v102
  %v534 = vunpack.c.h.b16 %v102
  %v535 = vunpack.c.l.b16 %v103
  %v536 = vunpack.c.h.b16 %v103
  %v537 = vunpack.c.l.b16 %v104
  %v538 = vunpack.c.h.b16 %v104
  %v539 = vunpack.c.l.b16 %v105
  %v540 = vunpack.c.l.b16 %v106
  %v541 = vunpack.c.h.b16 %v106
  %v542 = vunpack.c.l.b16 %v107
  %v543 = vunpack.c.h.b16 %v107
  %v544 = vunpack.c.l.b16 %v108
  %v545 = vunpack.c.h.b16 %v108
  %v546 = vunpack.c.l.b16 %v109
  %v547 = vunpack.c.l.b16 %v110
  %v548 = vunpack.c.h.b16 %v110
  %v549 = vunpack.c.l.b16 %v111
  %v550 = vunpack.c.h.b16 %v111
  %v551 = vunpack.c.l.b16 %v112
  %v552 = vunpack.c.h.b16 %v112
  %v553 = vunpack.c.l.b16 %v113
  %v554 = vunpack.c.l.b16 %v114
  %v555 = vunpack.c.h.b16 %v114
  %v556 = vunpack.c.l.b16 %v115
  %v557 = vunpack.c.h.b16 %v115
  %v558 = vunpack.c.l.b16 %v116
  %v559 = vunpack.c.h.b16 %v116
  %v560 = vunpack.c.l.b16 %v117
  %v561 = vunpack.c.l.b16 %v118
  %v562 = vunpack.c.h.b16 %v118
  %v563 = vunpack.c.l.b16 %v119
  %v564 = vunpack.c.h.b16 %v119
  %v565 = vunpack.c.l.b16 %v120
  %v566 = vunpack.c.h.b16 %v120
  %v567 = vunpack.c.l.b16 %v121
  %v568 = vunpack.c.l.b16 %v122
  %v569 = vunpack.c.h.b16 %v122
  %v570 = vunpack.c.l.b16 %v123
  %v571 = vunpack.c.h.b16 %v123
  %v572 = vunpack.c.l.b16 %v124
  %v573 = vunpack.c.h.b16 %v124
  %v574 = vunpack.c.l.b16 %v125
  %v575 = vunpack.c.l.b16 %v126
  %v576 = vunpack.c.h.b16 %v126
  %v577 = vunpack.c.l.b16 %v127
  %v578 = vunpack.c.h.b16 %v127
  %v579 = vunpack.c.l.b16 %v128
  %v580 = vunpack.c.h.b16 %v128
  %v581 = vunpack.c.l.b16 %v129
  %v582 = vunpack.c.l.b16 %v130
  %v583 = vunpack.c.h.b16 %v130
  %v584 = vunpack.c.l.b16 %v131
  %v585 = vunpack.c.h.b16 %v131
  %v586 = vunpack.c.l.b16 %v132
  %v587 = vunpack.c.h.b16 %v132
  %v588 = vunpack.c.l.b16 %v133
  %v589 = vunpack.c.l.b16 %v134
  %v590 = vunpack.c.h.b16 %v134
  %v591 = vunpack.c.l.b16 %v135
  %v592 = vunpack.c.h.b16 %v135
  %v593 = vunpack.c.l.b16 %v136
  %v594 = vunpack.c.h.b16 %v136
  %v595 = vunpack.c.l.b16 %v137
  %v596 = vunpack.c.l.b16 %v138
  %v597 = vunpack.c.h.b16 %v138
  %v598 = vunpack.c.l.b16 %v139
  %v599 = vunpack.c.h.b16 %v139
  %v600 = vunpack.c.l.b16 %v140
  %v601 = vunpack.c.h.b16 %v140
  %v602 = vunpack.c.l.b16 %v141
  %v603 = vunpack.c.l.b16 %v142
  %v604 = vunpack.c.h.b16 %v142
  %v605 = vunpack.c.l.b16 %v143
  %v606 = vunpack.c.h.b16 %v143
  %v607 = vunpack.c.l.b16 %v144
  %v608 = vunpack.c.h.b16 %v144
  %v609 = vunpack.c.l.b16 %v145
  %v610 = vpack.c.b16 %v393, %v386
  %v611 = vpack.c.b16 %v394, %v387
  %v612 = vpack.c.b16 %v395, %v388
  %v613 = vpack.c.b16 %v396, %v389
  %v614 = vpack.c.b16 %v397, %v390
  %v615 = vpack.c.b16 %v398, %v391
  %v616 = vpack.c.b16 %v399, %v392
  %v617 = vpack.c.b16 %v407, %v400
  %v618 = vpack.c.b16 %v408, %v401
  %v619 = vpack.c.b16 %v409, %v402
  %v620 = vpack.c.b16 %v410, %v403
  %v621 = vpack.c.b16 %v411, %v404
  %v622 = vpack.c.b16 %v412, %v405
  %v623 = vpack.c.b16 %v413, %v406
  %v624 = vpack.c.b16 %v421, %v414
  %v625 = vpack.c.b16 %v422, %v415
  %v626 = vpack.c.b16 %v423, %v416
  %v627 = vpack.c.b16 %v424, %v417
  %v628 = vpack.c.b16 %v425, %v418
  %v629 = vpack.c.b16 %v426, %v419
  %v630 = vpack.c.b16 %v427, %v420
  %v631 = vpack.c.b16 %v435, %v428
  %v632 = vpack.c.b16 %v436, %v429
  %v633 = vpack.c.b16 %v437, %v430
  %v634 = vpack.c.b16 %v438, %v431
  %v635 = vpack.c.b16 %v439, %v432
  %v636 = vpack.c.b16 %v440, %v433
  %v637 = vpack.c.b16 %v441, %v434
  %v638 = vpack.c.b16 %v449, %v442
  %v639 = vpack.c.b16 %v450, %v443
  %v640 = vpack.c.b16 %v451, %v444
  %v641 = vpack.c.b16 %v452, %v445
  %v642 = vpack.c.b16 %v453, %v446
  %v643 = vpack.c.b16 %v454, %v447
  %v644 = vpack.c.b16 %v455, %v448
  %v645 = vpack.c.b16 %v463, %v456
  %v646 = vpack.c.b16 %v464, %v457
  %v647 = vpack.c.b16 %v465, %v458
  %v648 = vpack.c.b16 %v466, %v459
  %v649 = vpack.c.b16 %v467, %v460
  %v650 = vpack.c.b16 %v468, %v461
  %v651 = vpack.c.b16 %v469, %v462
  %v652 = vpack.c.b16 %v477, %v470
  %v653 = vpack.c.b16 %v478, %v471
  %v654 = vpack.c.b16 %v479, %v472
  %v655 = vpack.c.b16 %v480, %v473
  %v656 = vpack.c.b16 %v481, %v474
  %v657 = vpack.c.b16 %v482, %v475
  %v658 = vpack.c.b16 %v483, %v476
  %v659 = vpack.c.b16 %v491, %v484
  %v660 = vpack.c.b16 %v492, %v485
  %v661 = vpack.c.b16 %v493, %v486
  %v662 = vpack.c.b16 %v494, %v487
  %v663 = vpack.c.b16 %v495, %v488
  %v664 = vpack.c.b16 %v496, %v489
  %v665 = vpack.c.b16 %v497, %v490
  %v666 = vpack.c.b16 %v505, %v498
  %v667 = vpack.c.b16 %v506, %v499
  %v668 = vpack.c.b16 %v507, %v500
  %v669 = vpack.c.b16 %v508, %v501
  %v670 = vpack.c.b16 %v509, %v502
  %v671 = vpack.c.b16 %v510, %v503
  %v672 = vpack.c.b16 %v511, %v504
  %v673 = vpack.c.b16 %v519, %v512
  %v674 = vpack.c.b16 %v520, %v513
  %v675 = vpack.c.b16 %v521, %v514
  %v676 = vpack.c.b16 %v522, %v515
  %v677 = vpack.c.b16 %v523, %v516
  %v678 = vpack.c.b16 %v524, %v517
  %v679 = vpack.c.b16 %v525, %v518
  %v680 = vpack.c.b16 %v533, %v526
  %v681 = vpack.c.b16 %v534, %v527
  %v682 = vpack.c.b16 %v535, %v528
  %v683 = vpack.c.b16 %v536, %v529
  %v684 = vpack.c.b16 %v537, %v530
  %v685 = vpack.c.b16 %v538, %v531
  %v686 = vpack.c.b16 %v539, %v532
  %v687 = vpack.c.b16 %v547, %v540
  %v688 = vpack.c.b16 %v548, %v541
  %v689 = vpack.c.b16 %v549, %v542
  %v690 = vpack.c.b16 %v550, %v543
  %v691 = vpack.c.b16 %v551, %v544
  %v692 = vpack.c.b16 %v552, %v545
  %v693 = vpack.c.b16 %v553, %v546
  %v694 = vpack.c.b16 %v561, %v554
  %v695 = vpack.c.b16 %v562, %v555
  %v696 = vpack.c.b16 %v563, %v556
  %v697 = vpack.c.b16 %v564, %v557
  %v698 = vpack.c.b16 %v565, %v558
  %v699 = vpack.c.b16 %v566, %v559
  %v700 = vpack.c.b16 %v567, %v560
  %v701 = vpack.c.b16 %v575, %v568
  %v702 = vpack.c.b16 %v576, %v569
  %v703 = vpack.c.b16 %v577, %v570
  %v704 = vpack.c.b16 %v578, %v571
  %v705 = vpack.c.b16 %v579, %v572
  %v706 = vpack.c.b16 %v580, %v573
  %v707 = vpack.c.b16 %v581, %v574
  %v708 = vpack.c.b16 %v589, %v582
  %v709 = vpack.c.b16 %v590, %v583
  %v710 = vpack.c.b16 %v591, %v584
  %v711 = vpack.c.b16 %v592, %v585
  %v712 = vpack.c.b16 %v593, %v586
  %v713 = vpack.c.b16 %v594, %v587
  %v714 = vpack.c.b16 %v595, %v588
  %v715 = vpack.c.b16 %v603, %v596
  %v716 = vpack.c.b16 %v604, %v597
  %v717 = vpack.c.b16 %v605, %v598
  %v718 = vpack.c.b16 %v606, %v599
  %v719 = vpack.c.b16 %v607, %v600
  %v720 = vpack.c.b16 %v608, %v601
  %v721 = vpack.c.b16 %v609, %v602
  %v946 = vunpack.c.l.b16 %v146
  %v947 = vunpack.c.l.b16 %v147
  %v948 = vunpack.c.l.b16 %v148
  %v949 = vunpack.c.l.b16 %v149
  %v950 = vunpack.c.l.b16 %v150
  %v951 = vunpack.c.l.b16 %v151
  %v952 = vunpack.c.l.b16 %v152
  %v953 = vunpack.c.l.b16 %v153
  %v954 = vunpack.c.l.b16 %v154
  %v955 = vunpack.c.l.b16 %v155
  %v956 = vunpack.c.l.b16 %v156
  %v957 = vunpack.c.l.b16 %v157
  %v958 = vunpack.c.l.b16 %v158
  %v959 = vunpack.c.l.b16 %v159
  %v960 = vunpack.c.l.b16 %v160
  %v961 = vunpack.c.l.b16 %v161
  %v962 = vunpack.c.l.b16 %v162
  %v963 = vunpack.c.l.b16 %v163
  %v964 = vunpack.c.l.b16 %v164
  %v965 = vunpack.c.l.b16 %v165
  %v966 = vunpack.c.l.b16 %v166
  %v967 = vunpack.c.l.b16 %v167
  %v968 = vunpack.c.l.b16 %v168
  %v969 = vunpack.c.l.b16 %v169
  %v970 = vunpack.c.l.b16 %v170
  %v971 = vunpack.c.l.b16 %v171
  %v972 = vunpack.c.l.b16 %v172
  %v973 = vunpack.c.l.b16 %v173
  %v974 = vunpack.c.l.b16 %v174
  %v975 = vunpack.c.l.b16 %v175
  %v976 = vunpack.c.l.b16 %v176
  %v977 = vunpack.c.l.b16 %v177
  %v978 = vunpack.c.l.b16 %v178
  %v979 = vunpack.c.l.b16 %v179
  %v980 = vunpack.c.l.b16 %v180
  %v981 = vunpack.c.l.b16 %v181
  %v982 = vunpack.c.l.b16 %v182
  %v983 = vunpack.c.l.b16 %v183
  %v984 = vunpack.c.l.b16 %v184
  %v985 = vunpack.c.l.b16 %v185
  %v986 = vunpack.c.l.b16 %v186
  %v987 = vunpack.c.l.b16 %v187
  %v988 = vunpack.c.l.b16 %v188
  %v989 = vunpack.c.l.b16 %v189
  %v990 = vunpack.c.l.b16 %v190
  %v991 = vunpack.c.l.b16 %v191
  %v992 = vunpack.c.l.b16 %v192
  %v993 = vunpack.c.l.b16 %v193
  %v994 = vunpack.c.l.b16 %v194
  %v995 = vunpack.c.l.b16 %v195
  %v996 = vunpack.c.l.b16 %v196
  %v997 = vunpack.c.l.b16 %v197
  %v998 = vunpack.c.l.b16 %v198
  %v999 = vunpack.c.l.b16 %v199
  %v1000 = vunpack.c.l.b16 %v200
  %v1001 = vunpack.c.l.b16 %v201
  %v1002 = vunpack.c.l.b16 %v202
  %v1003 = vunpack.c.l.b16 %v203
  %v1004 = vunpack.c.l.b16 %v204
  %v1005 = vunpack.c.l.b16 %v205
  %v1006 = vunpack.c.l.b16 %v206
  %v1007 = vunpack.c.l.b16 %v207
  %v1008 = vunpack.c.l.b16 %v208
  %v1009 = vunpack.c.l.b16 %v209
  %v1010 = vunpack.c.l.b16 %v210
  %v1011 = vunpack.c.l.b16 %v211
  %v1012 = vunpack.c.l.b16 %v212
  %v1013 = vunpack.c.l.b16 %v213
  %v1014 = vunpack.c.l.b16 %v214
  %v1015 = vunpack.c.l.b16 %v215
  %v1016 = vunpack.c.l.b16 %v216
  %v1017 = vunpack.c.l.b16 %v217
  %v1018 = vunpack.c.l.b16 %v218
  %v1019 = vunpack.c.l.b16 %v219
  %v1020 = vunpack.c.l.b16 %v220
  %v1021 = vunpack.c.l.b16 %v221
  %v1022 = vunpack.c.l.b16 %v222
  %v1023 = vunpack.c.l.b16 %v223
  %v1024 = vunpack.c.l.b16 %v224
  %v1025 = vunpack.c.l.b16 %v225
  %v1026 = vunpack.c.l.b16 %v226
  %v1027 = vunpack.c.l.b16 %v227
  %v1028 = vunpack.c.l.b16 %v228
  %v1029 = vunpack.c.l.b16 %v229
  %v1030 = vunpack.c.l.b16 %v230
  %v1031 = vunpack.c.l.b16 %v231
  %v1032 = vunpack.c.l.b16 %v232
  %v1033 = vunpack.c.l.b16 %v233
  %v1034 = vunpack.c.l.b16 %v234
  %v1035 = vunpack.c.l.b16 %v235
  %v1036 = vunpack.c.l.b16 %v236
  %v1037 = vunpack.c.l.b16 %v237
  %v1038 = vunpack.c.l.b16 %v238
  %v1039 = vunpack.c.l.b16 %v239
  %v1040 = vunpack.c.l.b16 %v240
  %v1041 = vunpack.c.l.b16 %v241
  %v1042 = vunpack.c.l.b16 %v242
  %v1043 = vunpack.c.l.b16 %v243
  %v1044 = vunpack.c.l.b16 %v244
  %v1045 = vunpack.c.l.b16 %v245
  %v1046 = vunpack.c.l.b16 %v246
  %v1047 = vunpack.c.l.b16 %v247
  %v1048 = vunpack.c.l.b16 %v248
  %v1049 = vunpack.c.l.b16 %v249
  %v1050 = vunpack.c.l.b16 %v250
  %v1051 = vunpack.c.l.b16 %v251
  %v1052 = vunpack.c.l.b16 %v252
  %v1053 = vunpack.c.l.b16 %v253
  %v1054 = vunpack.c.l.b16 %v254
  %v1055 = vunpack.c.l.b16 %v255
  %v1056 = vunpack.c.l.b16 %v256
  %v1057 = vunpack.c.l.b16 %v257
  %v1058 = vpack.c.b16 %v947, %v946
  %v1059 = vpack.c.b16 %v949, %v948
  %v1060 = vpack.c.b16 %v951, %v950
  %v1061 = vpack.c.b16 %v953, %v952
  %v1062 = vpack.c.b16 %v955, %v954
  %v1063 = vpack.c.b16 %v957, %v956
  %v1064 = vpack.c.b16 %v959, %v958
  %v1065 = vpack.c.b16 %v961, %v960
  %v1066 = vpack.c.b16 %v963, %v962
  %v1067 = vpack.c.b16 %v965, %v964
  %v1068 = vpack.c.b16 %v967, %v966
  %v1069 = vpack.c.b16 %v969, %v968
  %v1070 = vpack.c.b16 %v971, %v970
  %v1071 = vpack.c.b16 %v973, %v972
  %v1072 = vpack.c.b16 %v975, %v974
  %v1073 = vpack.c.b16 %v977, %v976
  %v1074 = vpack.c.b16 %v979, %v978
  %v1075 = vpack.c.b16 %v981, %v980
  %v1076 = vpack.c.b16 %v983, %v982
  %v1077 = vpack.c.b16 %v985, %v984
  %v1078 = vpack.c.b16 %v987, %v986
  %v1079 = vpack.c.b16 %v989, %v988
  %v1080 = vpack.c.b16 %v991, %v990
  %v1081 = vpack.c.b16 %v993, %v992
  %v1082 = vpack.c.b16 %v995, %v994
  %v1083 = vpack.c.b16 %v997, %v996
  %v1084 = vpack.c.b16 %v999, %v998
  %v1085 = vpack.c.b16 %v1001, %v1000
  %v1086 = vpack.c.b16 %v1003, %v1002
  %v1087 = vpack.c.b16 %v1005, %v1004
  %v1088 = vpack.c.b16 %v1007, %v1006
  %v1089 = vpack.c.b16 %v1009, %v1008
  %v1090 = vpack.c.b16 %v1011, %v1010
  %v1091 = vpack.c.b16 %v1013, %v1012
  %v1092 = vpack.c.b16 %v1015, %v1014
  %v1093 = vpack.c.b16 %v1017, %v1016
  %v1094 = vpack.c.b16 %v1019, %v1018
  %v1095 = vpack.c.b16 %v1021, %v1020
  %v1096 = vpack.c.b16 %v1023, %v1022
  %v1097 = vpack.c.b16 %v1025, %v1024
  %v1098 = vpack.c.b16 %v1027, %v1026
  %v1099 = vpack.c.b16 %v1029, %v1028
  %v1100 = vpack.c.b16 %v1031, %v1030
  %v1101 = vpack.c.b16 %v1033, %v1032
  %v1102 = vpack.c.b16 %v1035, %v1034
  %v1103 = vpack.c.b16 %v1037, %v1036
  %v1104 = vpack.c.b16 %v1039, %v1038
  %v1105 = vpack.c.b16 %v1041, %v1040
  %v1106 = vpack.c.b16 %v1043, %v1042
  %v1107 = vpack.c.b16 %v1045, %v1044
  %v1108 = vpack.c.b16 %v1047, %v1046
  %v1109 = vpack.c.b16 %v1049, %v1048
  %v1110 = vpack.c.b16 %v1051, %v1050
  %v1111 = vpack.c.b16 %v1053, %v1052
  %v1112 = vpack.c.b16 %v1055, %v1054
  %v1113 = vpack.c.b16 %v1057, %v1056
  %1170 = vmatprep.subr.bf16.mxu0 0
  %1171 = vmatpush1.bf16.msra.mxu0 %v1058
  %1172 = vmatprep.subr.bf16.mxu0 0
  %1173 = vmatpush1.bf16.msra.mxu0 %v1059
  %1174 = vmatprep.subr.bf16.mxu0 0
  %1175 = vmatpush1.bf16.msra.mxu0 %v1060
  %1176 = vmatprep.subr.bf16.mxu0 0
  %1177 = vmatpush1.bf16.msra.mxu0 %v1061
  %1178 = vmatprep.subr.bf16.mxu0 0
  %1179 = vmatpush1.bf16.msra.mxu0 %v1062
  %1180 = vmatprep.subr.bf16.mxu0 0
  %1181 = vmatpush1.bf16.msra.mxu0 %v1063
  %1182 = vmatprep.subr.bf16.mxu0 0
  %1183 = vmatpush1.bf16.msra.mxu0 %v1064
  %1184 = vmatprep.subr.bf16.mxu0 0
  %1185 = vmatpush1.bf16.msra.mxu0 %v1065
  %1186 = vmatprep.subr.bf16.mxu0 0
  %1187 = vmatpush1.bf16.msra.mxu0 %v1066
  %1188 = vmatprep.subr.bf16.mxu0 0
  %1189 = vmatpush1.bf16.msra.mxu0 %v1067
  %1190 = vmatprep.subr.bf16.mxu0 0
  %1191 = vmatpush1.bf16.msra.mxu0 %v1068
  %1192 = vmatprep.subr.bf16.mxu0 0
  %1193 = vmatpush1.bf16.msra.mxu0 %v1069
  %1194 = vmatprep.subr.bf16.mxu0 0
  %1195 = vmatpush1.bf16.msra.mxu0 %v1070
  %1196 = vmatprep.subr.bf16.mxu0 0
  %1197 = vmatpush1.bf16.msra.mxu0 %v1071
  %1198 = vmatprep.subr.bf16.mxu0 0
  %1199 = vmatpush1.bf16.msra.mxu0 %v1072
  %1200 = vmatprep.subr.bf16.mxu0 0
  %1201 = vmatpush1.bf16.msra.mxu0 %v1073
  %1202 = vmatprep.mubr.bf16.mxu0 %v611
  %1203 = vmatmul.mubr.bf16.gmra.mrb[0].mxu0 %v610
  %v1204 = vpop.f32.mrb[0].mxu0
  %v1205 = vadd.f32 0.0, %v1204
  %v1206 = vpop.f32.mrb[0].mxu0
  %v1207 = vpop.f32.mrb[0].mxu0
  %v1208 = vadd.f32 0.0, %v1207
  %v1209 = vpop.f32.mrb[0].mxu0
  %1210 = vmatprep.mubr.bf16.mxu0 %v618
  %1211 = vmatmul.mubr.bf16.gmra.mrb[0].mxu0 %v617
  %v1212 = vpop.f32.mrb[0].mxu0
  %v1213 = vadd.f32 0.0, %v1212
  %v1214 = vpop.f32.mrb[0].mxu0
  %v1215 = vpop.f32.mrb[0].mxu0
  %v1216 = vadd.f32 0.0, %v1215
  %v1217 = vpop.f32.mrb[0].mxu0
  %1218 = vmatprep.mubr.bf16.mxu0 %v625
  %1219 = vmatmul.mubr.bf16.gmra.mrb[0].mxu0 %v624
  %v1220 = vpop.f32.mrb[0].mxu0
  %v1221 = vadd.f32 0.0, %v1220
  %v1222 = vpop.f32.mrb[0].mxu0
  %v1223 = vpop.f32.mrb[0].mxu0
  %v1224 = vadd.f32 0.0, %v1223
  %v1225 = vpop.f32.mrb[0].mxu0
  %1226 = vmatprep.mubr.bf16.mxu0 %v632
  %1227 = vmatmul.mubr.bf16.gmra.mrb[0].mxu0 %v631
  %v1228 = vpop.f32.mrb[0].mxu0
  %v1229 = vadd.f32 0.0, %v1228
  %v1230 = vpop.f32.mrb[0].mxu0
  %v1231 = vpop.f32.mrb[0].mxu0
  %v1232 = vadd.f32 0.0, %v1231
  %v1233 = vpop.f32.mrb[0].mxu0
  %1234 = vmatprep.mubr.bf16.mxu0 %v639
  %1235 = vmatmul.mubr.bf16.gmra.mrb[0].mxu0 %v638
  %v1236 = vpop.f32.mrb[0].mxu0
  %v1237 = vadd.f32 0.0, %v1236
  %v1238 = vpop.f32.mrb[0].mxu0
  %v1239 = vpop.f32.mrb[0].mxu0
  %v1240 = vadd.f32 0.0, %v1239
  %v1241 = vpop.f32.mrb[0].mxu0
  %1242 = vmatprep.mubr.bf16.mxu0 %v646
  %1243 = vmatmul.mubr.bf16.gmra.mrb[0].mxu0 %v645
  %v1244 = vpop.f32.mrb[0].mxu0
  %v1245 = vadd.f32 0.0, %v1244
  %v1246 = vpop.f32.mrb[0].mxu0
  %v1247 = vpop.f32.mrb[0].mxu0
  %v1248 = vadd.f32 0.0, %v1247
  %v1249 = vpop.f32.mrb[0].mxu0
  %1250 = vmatprep.mubr.bf16.mxu0 %v653
  %1251 = vmatmul.mubr.bf16.gmra.mrb[0].mxu0 %v652
  %v1252 = vpop.f32.mrb[0].mxu0
  %v1253 = vadd.f32 0.0, %v1252
  %v1254 = vpop.f32.mrb[0].mxu0
  %v1255 = vpop.f32.mrb[0].mxu0
  %v1256 = vadd.f32 0.0, %v1255
  %v1257 = vpop.f32.mrb[0].mxu0
  %1258 = vmatprep.mubr.bf16.mxu0 %v660
  %1259 = vmatmul.mubr.bf16.gmra.mrb[0].mxu0 %v659
  %v1260 = vpop.f32.mrb[0].mxu0
  %v1261 = vadd.f32 0.0, %v1260
  %v1262 = vpop.f32.mrb[0].mxu0
  %v1263 = vpop.f32.mrb[0].mxu0
  %v1264 = vadd.f32 0.0, %v1263
  %v1265 = vpop.f32.mrb[0].mxu0
  %1266 = vmatprep.mubr.bf16.mxu0 %v667
  %1267 = vmatmul.mubr.bf16.gmra.mrb[0].mxu0 %v666
  %v1268 = vpop.f32.mrb[0].mxu0
  %v1269 = vadd.f32 0.0, %v1268
  %v1270 = vpop.f32.mrb[0].mxu0
  %v1271 = vpop.f32.mrb[0].mxu0
  %v1272 = vadd.f32 0.0, %v1271
  %v1273 = vpop.f32.mrb[0].mxu0
  %1274 = vmatprep.mubr.bf16.mxu0 %v674
  %1275 = vmatmul.mubr.bf16.gmra.mrb[0].mxu0 %v673
  %v1276 = vpop.f32.mrb[0].mxu0
  %v1277 = vadd.f32 0.0, %v1276
  %v1278 = vpop.f32.mrb[0].mxu0
  %v1279 = vpop.f32.mrb[0].mxu0
  %v1280 = vadd.f32 0.0, %v1279
  %v1281 = vpop.f32.mrb[0].mxu0
  %1282 = vmatprep.mubr.bf16.mxu0 %v681
  %1283 = vmatmul.mubr.bf16.gmra.mrb[0].mxu0 %v680
  %v1284 = vpop.f32.mrb[0].mxu0
  %v1285 = vadd.f32 0.0, %v1284
  %v1286 = vpop.f32.mrb[0].mxu0
  %v1287 = vpop.f32.mrb[0].mxu0
  %v1288 = vadd.f32 0.0, %v1287
  %v1289 = vpop.f32.mrb[0].mxu0
  %1290 = vmatprep.mubr.bf16.mxu0 %v688
  %1291 = vmatmul.mubr.bf16.gmra.mrb[0].mxu0 %v687
  %v1292 = vpop.f32.mrb[0].mxu0
  %v1293 = vadd.f32 0.0, %v1292
  %v1294 = vpop.f32.mrb[0].mxu0
  %v1295 = vpop.f32.mrb[0].mxu0
  %v1296 = vadd.f32 0.0, %v1295
  %v1297 = vpop.f32.mrb[0].mxu0
  %1298 = vmatprep.mubr.bf16.mxu0 %v695
  %1299 = vmatmul.mubr.bf16.gmra.mrb[0].mxu0 %v694
  %v1300 = vpop.f32.mrb[0].mxu0
  %v1301 = vadd.f32 0.0, %v1300
  %v1302 = vpop.f32.mrb[0].mxu0
  %v1303 = vpop.f32.mrb[0].mxu0
  %v1304 = vadd.f32 0.0, %v1303
  %v1305 = vpop.f32.mrb[0].mxu0
  %1306 = vmatprep.mubr.bf16.mxu0 %v702
  %1307 = vmatmul.mubr.bf16.gmra.mrb[0].mxu0 %v701
  %v1308 = vpop.f32.mrb[0].mxu0
  %v1309 = vadd.f32 0.0, %v1308
  %v1310 = vpop.f32.mrb[0].mxu0
  %v1311 = vpop.f32.mrb[0].mxu0
  %v1312 = vadd.f32 0.0, %v1311
  %v1313 = vpop.f32.mrb[0].mxu0
  %1314 = vmatprep.mubr.bf16.mxu0 %v709
  %1315 = vmatmul.mubr.bf16.gmra.mrb[0].mxu0 %v708
  %v1316 = vpop.f32.mrb[0].mxu0
  %v1317 = vadd.f32 0.0, %v1316
  %v1318 = vpop.f32.mrb[0].mxu0
  %v1319 = vpop.f32.mrb[0].mxu0
  %v1320 = vadd.f32 0.0, %v1319
  %v1321 = vpop.f32.mrb[0].mxu0
  %1322 = vmatprep.mubr.bf16.mxu0 %v716
  %1323 = vmatmul.mubr.bf16.gmra.mrb[0].mxu0 %v715
  %v1324 = vpop.f32.mrb[0].mxu0
  %v1325 = vadd.f32 0.0, %v1324
  %v1326 = vpop.f32.mrb[0].mxu0
  %v1327 = vpop.f32.mrb[0].mxu0
  %v1328 = vadd.f32 0.0, %v1327
  %v1329 = vpop.f32.mrb[0].mxu0
  %1330 = vdwg.mxu0
  %1331 = vmatprep.subr.bf16.mxu0 0
  %1332 = vmatpush1.bf16.msra.mxu0 %v1074
  %1333 = vmatprep.subr.bf16.mxu0 0
  %1334 = vmatpush1.bf16.msra.mxu0 %v1075
  %1335 = vmatprep.subr.bf16.mxu0 0
  %1336 = vmatpush1.bf16.msra.mxu0 %v1076
  %1337 = vmatprep.subr.bf16.mxu0 0
  %1338 = vmatpush1.bf16.msra.mxu0 %v1077
  %1339 = vmatprep.subr.bf16.mxu0 0
  %1340 = vmatpush1.bf16.msra.mxu0 %v1078
  %1341 = vmatprep.subr.bf16.mxu0 0
  %1342 = vmatpush1.bf16.msra.mxu0 %v1079
  %1343 = vmatprep.subr.bf16.mxu0 0
  %1344 = vmatpush1.bf16.msra.mxu0 %v1080
  %1345 = vmatprep.subr.bf16.mxu0 0
  %1346 = vmatpush1.bf16.msra.mxu0 %v1081
  %1347 = vmatprep.subr.bf16.mxu0 0
  %1348 = vmatpush1.bf16.msra.mxu0 %v1082
  %1349 = vmatprep.subr.bf16.mxu0 0
  %1350 = vmatpush1.bf16.msra.mxu0 %v1083
  %1351 = vmatprep.subr.bf16.mxu0 0
  %1352 = vmatpush1.bf16.msra.mxu0 %v1084
  %1353 = vmatprep.subr.bf16.mxu0 0
  %1354 = vmatpush1.bf16.msra.mxu0 %v1085
  %1355 = vmatprep.subr.bf16.mxu0 0
  %1356 = vmatpush1.bf16.msra.mxu0 %v1086
  %1357 = vmatprep.subr.bf16.mxu0 0
  %1358 = vmatpush1.bf16.msra.mxu0 %v1087
  %1359 = vmatprep.subr.bf16.mxu0 0
  %1360 = vmatpush1.bf16.msra.mxu0 %v1088
  %1361 = vmatprep.subr.bf16.mxu0 0
  %1362 = vmatpush1.bf16.msra.mxu0 %v1089
  %1363 = vmatprep.mubr.bf16.mxu0 %v613
  %1364 = vmatmul.mubr.bf16.gmra.mrb[0].mxu0 %v612
  %v1365 = vpop.f32.mrb[0].mxu0
  %v1366 = vadd.f32 %v1205, %v1365
  %v1367 = vpop.f32.mrb[0].mxu0
  %v1368 = vpop.f32.mrb[0].mxu0
  %v1369 = vadd.f32 %v1208, %v1368
  %v1370 = vpop.f32.mrb[0].mxu0
  %1371 = vmatprep.mubr.bf16.mxu0 %v620
  %1372 = vmatmul.mubr.bf16.gmra.mrb[0].mxu0 %v619
  %v1373 = vpop.f32.mrb[0].mxu0
  %v1374 = vadd.f32 %v1213, %v1373
  %v1375 = vpop.f32.mrb[0].mxu0
  %v1376 = vpop.f32.mrb[0].mxu0
  %v1377 = vadd.f32 %v1216, %v1376
  %v1378 = vpop.f32.mrb[0].mxu0
  %1379 = vmatprep.mubr.bf16.mxu0 %v627
  %1380 = vmatmul.mubr.bf16.gmra.mrb[0].mxu0 %v626
  %v1381 = vpop.f32.mrb[0].mxu0
  %v1382 = vadd.f32 %v1221, %v1381
  %v1383 = vpop.f32.mrb[0].mxu0
  %v1384 = vpop.f32.mrb[0].mxu0
  %v1385 = vadd.f32 %v1224, %v1384
  %v1386 = vpop.f32.mrb[0].mxu0
  %1387 = vmatprep.mubr.bf16.mxu0 %v634
  %1388 = vmatmul.mubr.bf16.gmra.mrb[0].mxu0 %v633
  %v1389 = vpop.f32.mrb[0].mxu0
  %v1390 = vadd.f32 %v1229, %v1389
  %v1391 = vpop.f32.mrb[0].mxu0
  %v1392 = vpop.f32.mrb[0].mxu0
  %v1393 = vadd.f32 %v1232, %v1392
  %v1394 = vpop.f32.mrb[0].mxu0
  %1395 = vmatprep.mubr.bf16.mxu0 %v641
  %1396 = vmatmul.mubr.bf16.gmra.mrb[0].mxu0 %v640
  %v1397 = vpop.f32.mrb[0].mxu0
  %v1398 = vadd.f32 %v1237, %v1397
  %v1399 = vpop.f32.mrb[0].mxu0
  %v1400 = vpop.f32.mrb[0].mxu0
  %v1401 = vadd.f32 %v1240, %v1400
  %v1402 = vpop.f32.mrb[0].mxu0
  %1403 = vmatprep.mubr.bf16.mxu0 %v648
  %1404 = vmatmul.mubr.bf16.gmra.mrb[0].mxu0 %v647
  %v1405 = vpop.f32.mrb[0].mxu0
  %v1406 = vadd.f32 %v1245, %v1405
  %v1407 = vpop.f32.mrb[0].mxu0
  %v1408 = vpop.f32.mrb[0].mxu0
  %v1409 = vadd.f32 %v1248, %v1408
  %v1410 = vpop.f32.mrb[0].mxu0
  %1411 = vmatprep.mubr.bf16.mxu0 %v655
  %1412 = vmatmul.mubr.bf16.gmra.mrb[0].mxu0 %v654
  %v1413 = vpop.f32.mrb[0].mxu0
  %v1414 = vadd.f32 %v1253, %v1413
  %v1415 = vpop.f32.mrb[0].mxu0
  %v1416 = vpop.f32.mrb[0].mxu0
  %v1417 = vadd.f32 %v1256, %v1416
  %v1418 = vpop.f32.mrb[0].mxu0
  %1419 = vmatprep.mubr.bf16.mxu0 %v662
  %1420 = vmatmul.mubr.bf16.gmra.mrb[0].mxu0 %v661
  %v1421 = vpop.f32.mrb[0].mxu0
  %v1422 = vadd.f32 %v1261, %v1421
  %v1423 = vpop.f32.mrb[0].mxu0
  %v1424 = vpop.f32.mrb[0].mxu0
  %v1425 = vadd.f32 %v1264, %v1424
  %v1426 = vpop.f32.mrb[0].mxu0
  %1427 = vmatprep.mubr.bf16.mxu0 %v669
  %1428 = vmatmul.mubr.bf16.gmra.mrb[0].mxu0 %v668
  %v1429 = vpop.f32.mrb[0].mxu0
  %v1430 = vadd.f32 %v1269, %v1429
  %v1431 = vpop.f32.mrb[0].mxu0
  %v1432 = vpop.f32.mrb[0].mxu0
  %v1433 = vadd.f32 %v1272, %v1432
  %v1434 = vpop.f32.mrb[0].mxu0
  %1435 = vmatprep.mubr.bf16.mxu0 %v676
  %1436 = vmatmul.mubr.bf16.gmra.mrb[0].mxu0 %v675
  %v1437 = vpop.f32.mrb[0].mxu0
  %v1438 = vadd.f32 %v1277, %v1437
  %v1439 = vpop.f32.mrb[0].mxu0
  %v1440 = vpop.f32.mrb[0].mxu0
  %v1441 = vadd.f32 %v1280, %v1440
  %v1442 = vpop.f32.mrb[0].mxu0
  %1443 = vmatprep.mubr.bf16.mxu0 %v683
  %1444 = vmatmul.mubr.bf16.gmra.mrb[0].mxu0 %v682
  %v1445 = vpop.f32.mrb[0].mxu0
  %v1446 = vadd.f32 %v1285, %v1445
  %v1447 = vpop.f32.mrb[0].mxu0
  %v1448 = vpop.f32.mrb[0].mxu0
  %v1449 = vadd.f32 %v1288, %v1448
  %v1450 = vpop.f32.mrb[0].mxu0
  %1451 = vmatprep.mubr.bf16.mxu0 %v690
  %1452 = vmatmul.mubr.bf16.gmra.mrb[0].mxu0 %v689
  %v1453 = vpop.f32.mrb[0].mxu0
  %v1454 = vadd.f32 %v1293, %v1453
  %v1455 = vpop.f32.mrb[0].mxu0
  %v1456 = vpop.f32.mrb[0].mxu0
  %v1457 = vadd.f32 %v1296, %v1456
  %v1458 = vpop.f32.mrb[0].mxu0
  %1459 = vmatprep.mubr.bf16.mxu0 %v697
  %1460 = vmatmul.mubr.bf16.gmra.mrb[0].mxu0 %v696
  %v1461 = vpop.f32.mrb[0].mxu0
  %v1462 = vadd.f32 %v1301, %v1461
  %v1463 = vpop.f32.mrb[0].mxu0
  %v1464 = vpop.f32.mrb[0].mxu0
  %v1465 = vadd.f32 %v1304, %v1464
  %v1466 = vpop.f32.mrb[0].mxu0
  %1467 = vmatprep.mubr.bf16.mxu0 %v704
  %1468 = vmatmul.mubr.bf16.gmra.mrb[0].mxu0 %v703
  %v1469 = vpop.f32.mrb[0].mxu0
  %v1470 = vadd.f32 %v1309, %v1469
  %v1471 = vpop.f32.mrb[0].mxu0
  %v1472 = vpop.f32.mrb[0].mxu0
  %v1473 = vadd.f32 %v1312, %v1472
  %v1474 = vpop.f32.mrb[0].mxu0
  %1475 = vmatprep.mubr.bf16.mxu0 %v711
  %1476 = vmatmul.mubr.bf16.gmra.mrb[0].mxu0 %v710
  %v1477 = vpop.f32.mrb[0].mxu0
  %v1478 = vadd.f32 %v1317, %v1477
  %v1479 = vpop.f32.mrb[0].mxu0
  %v1480 = vpop.f32.mrb[0].mxu0
  %v1481 = vadd.f32 %v1320, %v1480
  %v1482 = vpop.f32.mrb[0].mxu0
  %1483 = vmatprep.mubr.bf16.mxu0 %v718
  %1484 = vmatmul.mubr.bf16.gmra.mrb[0].mxu0 %v717
  %v1485 = vpop.f32.mrb[0].mxu0
  %v1486 = vadd.f32 %v1325, %v1485
  %v1487 = vpop.f32.mrb[0].mxu0
  %v1488 = vpop.f32.mrb[0].mxu0
  %v1489 = vadd.f32 %v1328, %v1488
  %v1490 = vpop.f32.mrb[0].mxu0
  %1491 = vdwg.mxu0
  %1492 = vmatprep.subr.bf16.mxu0 0
  %1493 = vmatpush1.bf16.msra.mxu0 %v1090
  %1494 = vmatprep.subr.bf16.mxu0 0
  %1495 = vmatpush1.bf16.msra.mxu0 %v1091
  %1496 = vmatprep.subr.bf16.mxu0 0
  %1497 = vmatpush1.bf16.msra.mxu0 %v1092
  %1498 = vmatprep.subr.bf16.mxu0 0
  %1499 = vmatpush1.bf16.msra.mxu0 %v1093
  %1500 = vmatprep.subr.bf16.mxu0 0
  %1501 = vmatpush1.bf16.msra.mxu0 %v1094
  %1502 = vmatprep.subr.bf16.mxu0 0
  %1503 = vmatpush1.bf16.msra.mxu0 %v1095
  %1504 = vmatprep.subr.bf16.mxu0 0
  %1505 = vmatpush1.bf16.msra.mxu0 %v1096
  %1506 = vmatprep.subr.bf16.mxu0 0
  %1507 = vmatpush1.bf16.msra.mxu0 %v1097
  %1508 = vmatprep.subr.bf16.mxu0 0
  %1509 = vmatpush1.bf16.msra.mxu0 %v1098
  %1510 = vmatprep.subr.bf16.mxu0 0
  %1511 = vmatpush1.bf16.msra.mxu0 %v1099
  %1512 = vmatprep.subr.bf16.mxu0 0
  %1513 = vmatpush1.bf16.msra.mxu0 %v1100
  %1514 = vmatprep.subr.bf16.mxu0 0
  %1515 = vmatpush1.bf16.msra.mxu0 %v1101
  %1516 = vmatprep.subr.bf16.mxu0 0
  %1517 = vmatpush1.bf16.msra.mxu0 %v1102
  %1518 = vmatprep.subr.bf16.mxu0 0
  %1519 = vmatpush1.bf16.msra.mxu0 %v1103
  %1520 = vmatprep.subr.bf16.mxu0 0
  %1521 = vmatpush1.bf16.msra.mxu0 %v1104
  %1522 = vmatprep.subr.bf16.mxu0 0
  %1523 = vmatpush1.bf16.msra.mxu0 %v1105
  %1524 = vmatprep.mubr.bf16.mxu0 %v615
  %1525 = vmatmul.mubr.bf16.gmra.mrb[0].mxu0 %v614
  %v1526 = vpop.f32.mrb[0].mxu0
  %v1527 = vadd.f32 %v1366, %v1526
  %v1528 = vpop.f32.mrb[0].mxu0
  %v1529 = vpop.f32.mrb[0].mxu0
  %v1530 = vadd.f32 %v1369, %v1529
  %v1531 = vpop.f32.mrb[0].mxu0
  %1532 = vmatprep.mubr.bf16.mxu0 %v622
  %1533 = vmatmul.mubr.bf16.gmra.mrb[0].mxu0 %v621
  %v1534 = vpop.f32.mrb[0].mxu0
  %v1535 = vadd.f32 %v1374, %v1534
  %v1536 = vpop.f32.mrb[0].mxu0
  %v1537 = vpop.f32.mrb[0].mxu0
  %v1538 = vadd.f32 %v1377, %v1537
  %v1539 = vpop.f32.mrb[0].mxu0
  %1540 = vmatprep.mubr.bf16.mxu0 %v629
  %1541 = vmatmul.mubr.bf16.gmra.mrb[0].mxu0 %v628
  %v1542 = vpop.f32.mrb[0].mxu0
  %v1543 = vadd.f32 %v1382, %v1542
  %v1544 = vpop.f32.mrb[0].mxu0
  %v1545 = vpop.f32.mrb[0].mxu0
  %v1546 = vadd.f32 %v1385, %v1545
  %v1547 = vpop.f32.mrb[0].mxu0
  %1548 = vmatprep.mubr.bf16.mxu0 %v636
  %1549 = vmatmul.mubr.bf16.gmra.mrb[0].mxu0 %v635
  %v1550 = vpop.f32.mrb[0].mxu0
  %v1551 = vadd.f32 %v1390, %v1550
  %v1552 = vpop.f32.mrb[0].mxu0
  %v1553 = vpop.f32.mrb[0].mxu0
  %v1554 = vadd.f32 %v1393, %v1553
  %v1555 = vpop.f32.mrb[0].mxu0
  %1556 = vmatprep.mubr.bf16.mxu0 %v643
  %1557 = vmatmul.mubr.bf16.gmra.mrb[0].mxu0 %v642
  %v1558 = vpop.f32.mrb[0].mxu0
  %v1559 = vadd.f32 %v1398, %v1558
  %v1560 = vpop.f32.mrb[0].mxu0
  %v1561 = vpop.f32.mrb[0].mxu0
  %v1562 = vadd.f32 %v1401, %v1561
  %v1563 = vpop.f32.mrb[0].mxu0
  %1564 = vmatprep.mubr.bf16.mxu0 %v650
  %1565 = vmatmul.mubr.bf16.gmra.mrb[0].mxu0 %v649
  %v1566 = vpop.f32.mrb[0].mxu0
  %v1567 = vadd.f32 %v1406, %v1566
  %v1568 = vpop.f32.mrb[0].mxu0
  %v1569 = vpop.f32.mrb[0].mxu0
  %v1570 = vadd.f32 %v1409, %v1569
  %v1571 = vpop.f32.mrb[0].mxu0
  %1572 = vmatprep.mubr.bf16.mxu0 %v657
  %1573 = vmatmul.mubr.bf16.gmra.mrb[0].mxu0 %v656
  %v1574 = vpop.f32.mrb[0].mxu0
  %v1575 = vadd.f32 %v1414, %v1574
  %v1576 = vpop.f32.mrb[0].mxu0
  %v1577 = vpop.f32.mrb[0].mxu0
  %v1578 = vadd.f32 %v1417, %v1577
  %v1579 = vpop.f32.mrb[0].mxu0
  %1580 = vmatprep.mubr.bf16.mxu0 %v664
  %1581 = vmatmul.mubr.bf16.gmra.mrb[0].mxu0 %v663
  %v1582 = vpop.f32.mrb[0].mxu0
  %v1583 = vadd.f32 %v1422, %v1582
  %v1584 = vpop.f32.mrb[0].mxu0
  %v1585 = vpop.f32.mrb[0].mxu0
  %v1586 = vadd.f32 %v1425, %v1585
  %v1587 = vpop.f32.mrb[0].mxu0
  %1588 = vmatprep.mubr.bf16.mxu0 %v671
  %1589 = vmatmul.mubr.bf16.gmra.mrb[0].mxu0 %v670
  %v1590 = vpop.f32.mrb[0].mxu0
  %v1591 = vadd.f32 %v1430, %v1590
  %v1592 = vpop.f32.mrb[0].mxu0
  %v1593 = vpop.f32.mrb[0].mxu0
  %v1594 = vadd.f32 %v1433, %v1593
  %v1595 = vpop.f32.mrb[0].mxu0
  %1596 = vmatprep.mubr.bf16.mxu0 %v678
  %1597 = vmatmul.mubr.bf16.gmra.mrb[0].mxu0 %v677
  %v1598 = vpop.f32.mrb[0].mxu0
  %v1599 = vadd.f32 %v1438, %v1598
  %v1600 = vpop.f32.mrb[0].mxu0
  %v1601 = vpop.f32.mrb[0].mxu0
  %v1602 = vadd.f32 %v1441, %v1601
  %v1603 = vpop.f32.mrb[0].mxu0
  %1604 = vmatprep.mubr.bf16.mxu0 %v685
  %1605 = vmatmul.mubr.bf16.gmra.mrb[0].mxu0 %v684
  %v1606 = vpop.f32.mrb[0].mxu0
  %v1607 = vadd.f32 %v1446, %v1606
  %v1608 = vpop.f32.mrb[0].mxu0
  %v1609 = vpop.f32.mrb[0].mxu0
  %v1610 = vadd.f32 %v1449, %v1609
  %v1611 = vpop.f32.mrb[0].mxu0
  %1612 = vmatprep.mubr.bf16.mxu0 %v692
  %1613 = vmatmul.mubr.bf16.gmra.mrb[0].mxu0 %v691
  %v1614 = vpop.f32.mrb[0].mxu0
  %v1615 = vadd.f32 %v1454, %v1614
  %v1616 = vpop.f32.mrb[0].mxu0
  %v1617 = vpop.f32.mrb[0].mxu0
  %v1618 = vadd.f32 %v1457, %v1617
  %v1619 = vpop.f32.mrb[0].mxu0
  %1620 = vmatprep.mubr.bf16.mxu0 %v699
  %1621 = vmatmul.mubr.bf16.gmra.mrb[0].mxu0 %v698
  %v1622 = vpop.f32.mrb[0].mxu0
  %v1623 = vadd.f32 %v1462, %v1622
  %v1624 = vpop.f32.mrb[0].mxu0
  %v1625 = vpop.f32.mrb[0].mxu0
  %v1626 = vadd.f32 %v1465, %v1625
  %v1627 = vpop.f32.mrb[0].mxu0
  %1628 = vmatprep.mubr.bf16.mxu0 %v706
  %1629 = vmatmul.mubr.bf16.gmra.mrb[0].mxu0 %v705
  %v1630 = vpop.f32.mrb[0].mxu0
  %v1631 = vadd.f32 %v1470, %v1630
  %v1632 = vpop.f32.mrb[0].mxu0
  %v1633 = vpop.f32.mrb[0].mxu0
  %v1634 = vadd.f32 %v1473, %v1633
  %v1635 = vpop.f32.mrb[0].mxu0
  %1636 = vmatprep.mubr.bf16.mxu0 %v713
  %1637 = vmatmul.mubr.bf16.gmra.mrb[0].mxu0 %v712
  %v1638 = vpop.f32.mrb[0].mxu0
  %v1639 = vadd.f32 %v1478, %v1638
  %v1640 = vpop.f32.mrb[0].mxu0
  %v1641 = vpop.f32.mrb[0].mxu0
  %v1642 = vadd.f32 %v1481, %v1641
  %v1643 = vpop.f32.mrb[0].mxu0
  %1644 = vmatprep.mubr.bf16.mxu0 %v720
  %1645 = vmatmul.mubr.bf16.gmra.mrb[0].mxu0 %v719
  %v1646 = vpop.f32.mrb[0].mxu0
  %v1647 = vadd.f32 %v1486, %v1646
  %v1648 = vpop.f32.mrb[0].mxu0
  %v1649 = vpop.f32.mrb[0].mxu0
  %v1650 = vadd.f32 %v1489, %v1649
  %v1651 = vpop.f32.mrb[0].mxu0
  %1652 = vdwg.mxu0
  %1653 = vmatprep.subr.bf16.mxu0 0
  %1654 = vmatpush1.bf16.msra.mxu0 %v1106
  %1655 = vmatprep.subr.bf16.mxu0 0
  %1656 = vmatpush1.bf16.msra.mxu0 %v1107
  %1657 = vmatprep.subr.bf16.mxu0 0
  %1658 = vmatpush1.bf16.msra.mxu0 %v1108
  %1659 = vmatprep.subr.bf16.mxu0 0
  %1660 = vmatpush1.bf16.msra.mxu0 %v1109
  %1661 = vmatprep.subr.bf16.mxu0 0
  %1662 = vmatpush1.bf16.msra.mxu0 %v1110
  %1663 = vmatprep.subr.bf16.mxu0 0
  %1664 = vmatpush1.bf16.msra.mxu0 %v1111
  %1665 = vmatprep.subr.bf16.mxu0 0
  %1666 = vmatpush1.bf16.msra.mxu0 %v1112
  %1667 = vmatprep.subr.bf16.mxu0 0
  %1668 = vmatpush1.bf16.msra.mxu0 %v1113
  %1669 = vmatprep.subr.bf16.mxu0 0
  %1670 = vmatpush1.bf16.msra.mxu0 0
  %1671 = vmatprep.subr.bf16.mxu0 0
  %1672 = vmatpush1.bf16.msra.mxu0 0
  %1673 = vmatprep.subr.bf16.mxu0 0
  %1674 = vmatpush1.bf16.msra.mxu0 0
  %1675 = vmatprep.subr.bf16.mxu0 0
  %1676 = vmatpush1.bf16.msra.mxu0 0
  %1677 = vmatprep.subr.bf16.mxu0 0
  %1678 = vmatpush1.bf16.msra.mxu0 0
  %1679 = vmatprep.subr.bf16.mxu0 0
  %1680 = vmatpush1.bf16.msra.mxu0 0
  %1681 = vmatprep.subr.bf16.mxu0 0
  %1682 = vmatpush1.bf16.msra.mxu0 0
  %1683 = vmatprep.subr.bf16.mxu0 0
  %1684 = vmatpush1.bf16.msra.mxu0 0
  %1685 = vmatprep.mubr.bf16.mxu0 0
  %1686 = vmatmul.mubr.bf16.gmra.mrb[0].mxu0 %v616
  %v1687 = vpop.f32.mrb[0].mxu0
  %v1688 = vadd.f32 %v1527, %v1687
  %v1689 = vpop.f32.mrb[0].mxu0
  %v1690 = vpop.f32.mrb[0].mxu0
  %v1691 = vadd.f32 %v1530, %v1690
  %v1692 = vpop.f32.mrb[0].mxu0
  %1693 = vmatprep.mubr.bf16.mxu0 0
  %1694 = vmatmul.mubr.bf16.gmra.mrb[0].mxu0 %v623
  %v1695 = vpop.f32.mrb[0].mxu0
  %v1696 = vadd.f32 %v1535, %v1695
  %v1697 = vpop.f32.mrb[0].mxu0
  %v1698 = vpop.f32.mrb[0].mxu0
  %v1699 = vadd.f32 %v1538, %v1698
  %v1700 = vpop.f32.mrb[0].mxu0
  %1701 = vmatprep.mubr.bf16.mxu0 0
  %1702 = vmatmul.mubr.bf16.gmra.mrb[0].mxu0 %v630
  %v1703 = vpop.f32.mrb[0].mxu0
  %v1704 = vadd.f32 %v1543, %v1703
  %v1705 = vpop.f32.mrb[0].mxu0
  %v1706 = vpop.f32.mrb[0].mxu0
  %v1707 = vadd.f32 %v1546, %v1706
  %v1708 = vpop.f32.mrb[0].mxu0
  %1709 = vmatprep.mubr.bf16.mxu0 0
  %1710 = vmatmul.mubr.bf16.gmra.mrb[0].mxu0 %v637
  %v1711 = vpop.f32.mrb[0].mxu0
  %v1712 = vadd.f32 %v1551, %v1711
  %v1713 = vpop.f32.mrb[0].mxu0
  %v1714 = vpop.f32.mrb[0].mxu0
  %v1715 = vadd.f32 %v1554, %v1714
  %v1716 = vpop.f32.mrb[0].mxu0
  %1717 = vmatprep.mubr.bf16.mxu0 0
  %1718 = vmatmul.mubr.bf16.gmra.mrb[0].mxu0 %v644
  %v1719 = vpop.f32.mrb[0].mxu0
  %v1720 = vadd.f32 %v1559, %v1719
  %v1721 = vpop.f32.mrb[0].mxu0
  %v1722 = vpop.f32.mrb[0].mxu0
  %v1723 = vadd.f32 %v1562, %v1722
  %v1724 = vpop.f32.mrb[0].mxu0
  %1725 = vmatprep.mubr.bf16.mxu0 0
  %1726 = vmatmul.mubr.bf16.gmra.mrb[0].mxu0 %v651
  %v1727 = vpop.f32.mrb[0].mxu0
  %v1728 = vadd.f32 %v1567, %v1727
  %v1729 = vpop.f32.mrb[0].mxu0
  %v1730 = vpop.f32.mrb[0].mxu0
  %v1731 = vadd.f32 %v1570, %v1730
  %v1732 = vpop.f32.mrb[0].mxu0
  %1733 = vmatprep.mubr.bf16.mxu0 0
  %1734 = vmatmul.mubr.bf16.gmra.mrb[0].mxu0 %v658
  %v1735 = vpop.f32.mrb[0].mxu0
  %v1736 = vadd.f32 %v1575, %v1735
  %v1737 = vpop.f32.mrb[0].mxu0
  %v1738 = vpop.f32.mrb[0].mxu0
  %v1739 = vadd.f32 %v1578, %v1738
  %v1740 = vpop.f32.mrb[0].mxu0
  %1741 = vmatprep.mubr.bf16.mxu0 0
  %1742 = vmatmul.mubr.bf16.gmra.mrb[0].mxu0 %v665
  %v1743 = vpop.f32.mrb[0].mxu0
  %v1744 = vadd.f32 %v1583, %v1743
  %v1745 = vpop.f32.mrb[0].mxu0
  %v1746 = vpop.f32.mrb[0].mxu0
  %v1747 = vadd.f32 %v1586, %v1746
  %v1748 = vpop.f32.mrb[0].mxu0
  %1749 = vmatprep.mubr.bf16.mxu0 0
  %1750 = vmatmul.mubr.bf16.gmra.mrb[0].mxu0 %v672
  %v1751 = vpop.f32.mrb[0].mxu0
  %v1752 = vadd.f32 %v1591, %v1751
  %v1753 = vpop.f32.mrb[0].mxu0
  %v1754 = vpop.f32.mrb[0].mxu0
  %v1755 = vadd.f32 %v1594, %v1754
  %v1756 = vpop.f32.mrb[0].mxu0
  %1757 = vmatprep.mubr.bf16.mxu0 0
  %1758 = vmatmul.mubr.bf16.gmra.mrb[0].mxu0 %v679
  %v1759 = vpop.f32.mrb[0].mxu0
  %v1760 = vadd.f32 %v1599, %v1759
  %v1761 = vpop.f32.mrb[0].mxu0
  %v1762 = vpop.f32.mrb[0].mxu0
  %v1763 = vadd.f32 %v1602, %v1762
  %v1764 = vpop.f32.mrb[0].mxu0
  %1765 = vmatprep.mubr.bf16.mxu0 0
  %1766 = vmatmul.mubr.bf16.gmra.mrb[0].mxu0 %v686
  %v1767 = vpop.f32.mrb[0].mxu0
  %v1768 = vadd.f32 %v1607, %v1767
  %v1769 = vpop.f32.mrb[0].mxu0
  %v1770 = vpop.f32.mrb[0].mxu0
  %v1771 = vadd.f32 %v1610, %v1770
  %v1772 = vpop.f32.mrb[0].mxu0
  %1773 = vmatprep.mubr.bf16.mxu0 0
  %1774 = vmatmul.mubr.bf16.gmra.mrb[0].mxu0 %v693
  %v1775 = vpop.f32.mrb[0].mxu0
  %v1776 = vadd.f32 %v1615, %v1775
  %v1777 = vpop.f32.mrb[0].mxu0
  %v1778 = vpop.f32.mrb[0].mxu0
  %v1779 = vadd.f32 %v1618, %v1778
  %v1780 = vpop.f32.mrb[0].mxu0
  %1781 = vmatprep.mubr.bf16.mxu0 0
  %1782 = vmatmul.mubr.bf16.gmra.mrb[0].mxu0 %v700
  %v1783 = vpop.f32.mrb[0].mxu0
  %v1784 = vadd.f32 %v1623, %v1783
  %v1785 = vpop.f32.mrb[0].mxu0
  %v1786 = vpop.f32.mrb[0].mxu0
  %v1787 = vadd.f32 %v1626, %v1786
  %v1788 = vpop.f32.mrb[0].mxu0
  %1789 = vmatprep.mubr.bf16.mxu0 0
  %1790 = vmatmul.mubr.bf16.gmra.mrb[0].mxu0 %v707
  %v1791 = vpop.f32.mrb[0].mxu0
  %v1792 = vadd.f32 %v1631, %v1791
  %v1793 = vpop.f32.mrb[0].mxu0
  %v1794 = vpop.f32.mrb[0].mxu0
  %v1795 = vadd.f32 %v1634, %v1794
  %v1796 = vpop.f32.mrb[0].mxu0
  %1797 = vmatprep.mubr.bf16.mxu0 0
  %1798 = vmatmul.mubr.bf16.gmra.mrb[0].mxu0 %v714
  %v1799 = vpop.f32.mrb[0].mxu0
  %v1800 = vadd.f32 %v1639, %v1799
  %v1801 = vpop.f32.mrb[0].mxu0
  %v1802 = vpop.f32.mrb[0].mxu0
  %v1803 = vadd.f32 %v1642, %v1802
  %v1804 = vpop.f32.mrb[0].mxu0
  %1805 = vmatprep.mubr.bf16.mxu0 0
  %1806 = vmatmul.mubr.bf16.gmra.mrb[0].mxu0 %v721
  %v1807 = vpop.f32.mrb[0].mxu0
  %v1808 = vadd.f32 %v1647, %v1807
  %v1809 = vpop.f32.mrb[0].mxu0
  %v1810 = vpop.f32.mrb[0].mxu0
  %v1811 = vadd.f32 %v1650, %v1810
  %v1812 = vpop.f32.mrb[0].mxu0
  %1813 = vdwg.mxu0
  %v1814 = vld [vmem:[%s2] sm:$0x1]
  %v1816 = vlaneseq
  %v1817 = vshrl.u32 %v1816, 7
  %v1818 = vsub.s32 0, %v1817
  %v1819 = vrot.slane %v1814, %v1818
  %v1821 = vmul.f32 %v1688, %v1819
  %v1822 = vmul.f32 %v1691, %v1819
  %v1823 = vmul.f32 %v1696, %v1819
  %v1824 = vmul.f32 %v1699, %v1819
  %v1825 = vmul.f32 %v1704, %v1819
  %v1826 = vmul.f32 %v1707, %v1819
  %v1827 = vmul.f32 %v1712, %v1819
  %v1828 = vmul.f32 %v1715, %v1819
  %v1829 = vmul.f32 %v1720, %v1819
  %v1830 = vmul.f32 %v1723, %v1819
  %v1831 = vmul.f32 %v1728, %v1819
  %v1832 = vmul.f32 %v1731, %v1819
  %v1833 = vmul.f32 %v1736, %v1819
  %v1834 = vmul.f32 %v1739, %v1819
  %v1835 = vmul.f32 %v1744, %v1819
  %v1836 = vmul.f32 %v1747, %v1819
  %v1837 = vmul.f32 %v1752, %v1819
  %v1838 = vmul.f32 %v1755, %v1819
  %v1839 = vmul.f32 %v1760, %v1819
  %v1840 = vmul.f32 %v1763, %v1819
  %v1841 = vmul.f32 %v1768, %v1819
  %v1842 = vmul.f32 %v1771, %v1819
  %v1843 = vmul.f32 %v1776, %v1819
  %v1844 = vmul.f32 %v1779, %v1819
  %v1845 = vmul.f32 %v1784, %v1819
  %v1846 = vmul.f32 %v1787, %v1819
  %v1847 = vmul.f32 %v1792, %v1819
  %v1848 = vmul.f32 %v1795, %v1819
  %v1849 = vmul.f32 %v1800, %v1819
  %v1850 = vmul.f32 %v1803, %v1819
  %v1851 = vmul.f32 %v1808, %v1819
  %v1852 = vmul.f32 %v1811, %v1819
  %v1853 = vld [vmem:[%s3] sm:$0x1]
  %v1855 = vlaneseq
  %v1856 = vshrl.u32 %v1855, 7
  %v1857 = vsub.s32 0, %v1856
  %v1858 = vrot.slane %v1853, %v1857
  %v1860 = vadd.f32 %v1821, %v1858
  %v1861 = vadd.f32 %v1822, %v1858
  %v1862 = vadd.f32 %v1823, %v1858
  %v1863 = vadd.f32 %v1824, %v1858
  %v1864 = vadd.f32 %v1825, %v1858
  %v1865 = vadd.f32 %v1826, %v1858
  %v1866 = vadd.f32 %v1827, %v1858
  %v1867 = vadd.f32 %v1828, %v1858
  %v1868 = vadd.f32 %v1829, %v1858
  %v1869 = vadd.f32 %v1830, %v1858
  %v1870 = vadd.f32 %v1831, %v1858
  %v1871 = vadd.f32 %v1832, %v1858
  %v1872 = vadd.f32 %v1833, %v1858
  %v1873 = vadd.f32 %v1834, %v1858
  %v1874 = vadd.f32 %v1835, %v1858
  %v1875 = vadd.f32 %v1836, %v1858
  %v1876 = vadd.f32 %v1837, %v1858
  %v1877 = vadd.f32 %v1838, %v1858
  %v1878 = vadd.f32 %v1839, %v1858
  %v1879 = vadd.f32 %v1840, %v1858
  %v1880 = vadd.f32 %v1841, %v1858
  %v1881 = vadd.f32 %v1842, %v1858
  %v1882 = vadd.f32 %v1843, %v1858
  %v1883 = vadd.f32 %v1844, %v1858
  %v1884 = vadd.f32 %v1845, %v1858
  %v1885 = vadd.f32 %v1846, %v1858
  %v1886 = vadd.f32 %v1847, %v1858
  %v1887 = vadd.f32 %v1848, %v1858
  %v1888 = vadd.f32 %v1849, %v1858
  %v1889 = vadd.f32 %v1850, %v1858
  %v1890 = vadd.f32 %v1851, %v1858
  %v1891 = vadd.f32 %v1852, %v1858
  %v1892 = vmax.f32 %v1860, 0.0
  %v1893 = vmax.f32 %v1861, 0.0
  %v1894 = vmax.f32 %v1862, 0.0
  %v1895 = vmax.f32 %v1863, 0.0
  %v1896 = vmax.f32 %v1864, 0.0
  %v1897 = vmax.f32 %v1865, 0.0
  %v1898 = vmax.f32 %v1866, 0.0
  %v1899 = vmax.f32 %v1867, 0.0
  %v1900 = vmax.f32 %v1868, 0.0
  %v1901 = vmax.f32 %v1869, 0.0
  %v1902 = vmax.f32 %v1870, 0.0
  %v1903 = vmax.f32 %v1871, 0.0
  %v1904 = vmax.f32 %v1872, 0.0
  %v1905 = vmax.f32 %v1873, 0.0
  %v1906 = vmax.f32 %v1874, 0.0
  %v1907 = vmax.f32 %v1875, 0.0
  %v1908 = vmax.f32 %v1876, 0.0
  %v1909 = vmax.f32 %v1877, 0.0
  %v1910 = vmax.f32 %v1878, 0.0
  %v1911 = vmax.f32 %v1879, 0.0
  %v1912 = vmax.f32 %v1880, 0.0
  %v1913 = vmax.f32 %v1881, 0.0
  %v1914 = vmax.f32 %v1882, 0.0
  %v1915 = vmax.f32 %v1883, 0.0
  %v1916 = vmax.f32 %v1884, 0.0
  %v1917 = vmax.f32 %v1885, 0.0
  %v1918 = vmax.f32 %v1886, 0.0
  %v1919 = vmax.f32 %v1887, 0.0
  %v1920 = vmax.f32 %v1888, 0.0
  %v1921 = vmax.f32 %v1889, 0.0
  %v1922 = vmax.f32 %v1890, 0.0
  %v1923 = vmax.f32 %v1891, 0.0
  %vm1924 = vcmask 523264
  %1925 = vst.msk [vmem:[%s4] sm:$0xff] %vm1924, %v1892
  %1926 = vst.msk [vmem:[%s4 + $0x8] sm:$0xff] %vm1924, %v1893
  %1927 = vst.msk [vmem:[%s4 + $0x10] sm:$0xff] %vm1924, %v1894
  %1928 = vst.msk [vmem:[%s4 + $0x18] sm:$0xff] %vm1924, %v1895
  %1929 = vst.msk [vmem:[%s4 + $0x20] sm:$0xff] %vm1924, %v1896
  %1930 = vst.msk [vmem:[%s4 + $0x28] sm:$0xff] %vm1924, %v1897
  %1931 = vst.msk [vmem:[%s4 + $0x30] sm:$0xff] %vm1924, %v1898
  %1932 = vst.msk [vmem:[%s4 + $0x38] sm:$0xff] %vm1924, %v1899
  %1933 = vst.msk [vmem:[%s4 + $0x40] sm:$0xff] %vm1924, %v1900
  %1934 = vst.msk [vmem:[%s4 + $0x48] sm:$0xff] %vm1924, %v1901
  %1935 = vst.msk [vmem:[%s4 + $0x50] sm:$0xff] %vm1924, %v1902
  %1936 = vst.msk [vmem:[%s4 + $0x58] sm:$0xff] %vm1924, %v1903
  %1937 = vst.msk [vmem:[%s4 + $0x60] sm:$0xff] %vm1924, %v1904
  %1938 = vst.msk [vmem:[%s4 + $0x68] sm:$0xff] %vm1924, %v1905
  %1939 = vst.msk [vmem:[%s4 + $0x70] sm:$0xff] %vm1924, %v1906
  %1940 = vst.msk [vmem:[%s4 + $0x78] sm:$0xff] %vm1924, %v1907
  %1941 = vst.msk [vmem:[%s4 + $0x80] sm:$0xff] %vm1924, %v1908
  %1942 = vst.msk [vmem:[%s4 + $0x88] sm:$0xff] %vm1924, %v1909
  %1943 = vst.msk [vmem:[%s4 + $0x90] sm:$0xff] %vm1924, %v1910
  %1944 = vst.msk [vmem:[%s4 + $0x98] sm:$0xff] %vm1924, %v1911
  %1945 = vst.msk [vmem:[%s4 + $0xa0] sm:$0xff] %vm1924, %v1912
  %1946 = vst.msk [vmem:[%s4 + $0xa8] sm:$0xff] %vm1924, %v1913
  %1947 = vst.msk [vmem:[%s4 + $0xb0] sm:$0xff] %vm1924, %v1914
  %1948 = vst.msk [vmem:[%s4 + $0xb8] sm:$0xff] %vm1924, %v1915
  %1949 = vst.msk [vmem:[%s4 + $0xc0] sm:$0xff] %vm1924, %v1916
  %1950 = vst.msk [vmem:[%s4 + $0xc8] sm:$0xff] %vm1924, %v1917
  %1951 = vst.msk [vmem:[%s4 + $0xd0] sm:$0xff] %vm1924, %v1918
  %1952 = vst.msk [vmem:[%s4 + $0xd8] sm:$0xff] %vm1924, %v1919
  %1953 = vst.msk [vmem:[%s4 + $0xe0] sm:$0xff] %vm1924, %v1920
  %1954 = vst.msk [vmem:[%s4 + $0xe8] sm:$0xff] %vm1924, %v1921
  %1955 = vst.msk [vmem:[%s4 + $0xf0] sm:$0xff] %vm1924, %v1922
  %1956 = vst.msk [vmem:[%s4 + $0xf8] sm:$0xff] %vm1924, %v1923
  // Predicated region
  $region18: #{bcnn_forward.4} parent=0 // pred_check
    _
  $region19: #{bcnn_forward.4} parent=0 // pred_check_branch
    %1958 = sbr.rel (0) target = $region21
  $region20: #{bcnn_forward.4} parent=0 // pred_region
    _
  $region21: #{bcnn_forward.4} parent=0 // pred_fallthru
    _
  // Predicated region
  $region22: #{bcnn_forward.4} parent=0 // pred_check
    _
  $region23: #{bcnn_forward.4} parent=0 // pred_check_branch
    %1960 = sbr.rel (0) target = $region25
  $region24: #{bcnn_forward.4} parent=0 // pred_region
    _
  $region25: #{bcnn_forward.4} parent=0 // pred_fallthru
    _

// kernel: bcnn_forward.5
$region0: #{bcnn_forward.5}
  #allocation0 [shape = 'u32[]', space=smem, size = 0x4, offset = 0x4, fixed_abs, tag = 'smem constant byte address 0x4 - core index']
  #allocation1 [shape = 'u32[144,128]{1,0:T(1,128)}', space=vmem, size = 0x12000, scoped, tag = 'internal scratch']
  #allocation2 [shape = 'f32[2,128]{1,0:T(2,128)}', space=vmem, size = 0x400, scoped, tag = 'scratch operand']
  %s0 = inlined_call_operand.vmem [shape: bf16[256,1664], index: 0, kind: input, shape index: {}]
  %s1 = inlined_call_operand.vmem [shape: bf16[1664,128], index: 1, kind: input, shape index: {}]
  %s2 = inlined_call_operand.vmem [shape: f32[1,128], index: 2, kind: input, shape index: {}]
  %s3 = inlined_call_operand.vmem [shape: f32[1,128], index: 3, kind: input, shape index: {}]
  %s4 = inlined_call_operand.vmem [shape: f32[2,256], index: 4, kind: input, shape index: {}]
  %s5 = inlined_call_operand.vmem [shape: f32[128,2], index: 5, kind: input, shape index: {}]
  %s6 = inlined_call_operand.vmem [shape: f32[1,2], index: 6, kind: input, shape index: {}]
  %s7 = inlined_call_operand.hbm [shape: f32[2,2], index: 7, kind: output, shape index: {}]
  %s8 = sld [smem:[#allocation0]]
  $region46: #{bcnn_forward.5} parent=0
    _
  %s10 = ssub.s32 1, %s8
  %s11 = scalar_select 0, %s10, %s8
  $region1: #{bcnn_forward.5} parent=0
    #allocation3 [shape = 'u8[1024]{0}', space=vmem, size = 0x400, scoped, tag = 'output window, operand 0, single buffered']
    #allocation4 [shape = 's32[1]{0}', space=sflag, size = 0x4, scoped, tag = 'scoped memory for bcnn_forward.5']
    %12 = vsyncpa [#allocation4], 0
    // Predicated region
    $region2: #{bcnn_forward.5} parent=1 // pred_check
      _
    $region3: #{bcnn_forward.5} parent=1 // pred_check_branch
      %14 = sbr.rel (0) target = $region5
    $region4: #{bcnn_forward.5} parent=1 // pred_region
      _
    $region5: #{bcnn_forward.5} parent=1 // pred_fallthru
      _
    // Predicated region
    $region6: #{bcnn_forward.5} parent=1 // pred_check
      _
    $region7: #{bcnn_forward.5} parent=1 // pred_check_branch
      %16 = sbr.rel (0) target = $region9
    $region8: #{bcnn_forward.5} parent=1 // pred_region
      _
    $region9: #{bcnn_forward.5} parent=1 // pred_fallthru
      _
    // Predicated region
    $region10: #{bcnn_forward.5} parent=1 // pred_check
      _
    $region11: #{bcnn_forward.5} parent=1 // pred_check_branch
      %18 = sbr.rel (0) target = $region13
    $region12: #{bcnn_forward.5} parent=1 // pred_region
      _
    $region13: #{bcnn_forward.5} parent=1 // pred_fallthru
      _
    // Predicated region
    $region14: #{bcnn_forward.5} parent=1 // pred_check
      _
    $region15: #{bcnn_forward.5} parent=1 // pred_check_branch
      %20 = sbr.rel (0) target = $region17
    $region16: #{bcnn_forward.5} parent=1 // pred_region
      _
    $region17: #{bcnn_forward.5} parent=1 // pred_fallthru
      _
    // Predicated region
    $region18: #{bcnn_forward.5} parent=1 // pred_check
      _
    $region19: #{bcnn_forward.5} parent=1 // pred_check_branch
      %22 = sbr.rel (0) target = $region21
    $region20: #{bcnn_forward.5} parent=1 // pred_region
      _
    $region21: #{bcnn_forward.5} parent=1 // pred_fallthru
      _
    // Predicated region
    $region22: #{bcnn_forward.5} parent=1 // pred_check
      _
    $region23: #{bcnn_forward.5} parent=1 // pred_check_branch
      %24 = sbr.rel (0) target = $region25
    $region24: #{bcnn_forward.5} parent=1 // pred_region
      _
    $region25: #{bcnn_forward.5} parent=1 // pred_fallthru
      _
    // Predicated region
    $region26: #{bcnn_forward.5} parent=1 // pred_check
      _
    $region27: #{bcnn_forward.5} parent=1 // pred_check_branch
      %26 = sbr.rel (0) target = $region29
    $region28: #{bcnn_forward.5} parent=1 // pred_region
      _
    $region29: #{bcnn_forward.5} parent=1 // pred_fallthru
      _
    %p28 = scmp.eq.s32.totalorder 0, 0
    // Predicated region
    $region30: #{bcnn_forward.5} parent=1 // pred_check
      %p29 = pneg %p28
    $region31: #{bcnn_forward.5} parent=1 // pred_check_branch
      %31 = sbr.rel (%p29) target = $region33
    $region32: #{bcnn_forward.5} parent=1 // pred_region
      %32 = vst [vmem:[#allocation2] sm:$0x3] 0.0
    $region33: #{bcnn_forward.5} parent=1 // pred_fallthru
      _
    %v33 = vld [vmem:[%s0] sm:$0xff]
    %v34 = vld [vmem:[%s0 + $0x8] sm:$0xff]
    %v35 = vld [vmem:[%s0 + $0x10] sm:$0xff]
    %v36 = vld [vmem:[%s0 + $0x18] sm:$0xff]
    %v37 = vld [vmem:[%s0 + $0x20] sm:$0xff]
    %v38 = vld [vmem:[%s0 + $0x28] sm:$0xff]
    %v39 = vld [vmem:[%s0 + $0x30] sm:$0xf]
    %v40 = vld [vmem:[%s0 + $0x34] sm:$0xff]
    %v41 = vld [vmem:[%s0 + $0x3c] sm:$0xff]
    %v42 = vld [vmem:[%s0 + $0x44] sm:$0xff]
    %v43 = vld [vmem:[%s0 + $0x4c] sm:$0xff]
    %v44 = vld [vmem:[%s0 + $0x54] sm:$0xff]
    %v45 = vld [vmem:[%s0 + $0x5c] sm:$0xff]
    %v46 = vld [vmem:[%s0 + $0x64] sm:$0xf]
    %v47 = vld [vmem:[%s0 + $0x68] sm:$0xff]
    %v48 = vld [vmem:[%s0 + $0x70] sm:$0xff]
    %v49 = vld [vmem:[%s0 + $0x78] sm:$0xff]
    %v50 = vld [vmem:[%s0 + $0x80] sm:$0xff]
    %v51 = vld [vmem:[%s0 + $0x88] sm:$0xff]
    %v52 = vld [vmem:[%s0 + $0x90] sm:$0xff]
    %v53 = vld [vmem:[%s0 + $0x98] sm:$0xf]
    %v54 = vld [vmem:[%s0 + $0x9c] sm:$0xff]
    %v55 = vld [vmem:[%s0 + $0xa4] sm:$0xff]
    %v56 = vld [vmem:[%s0 + $0xac] sm:$0xff]
    %v57 = vld [vmem:[%s0 + $0xb4] sm:$0xff]
    %v58 = vld [vmem:[%s0 + $0xbc] sm:$0xff]
    %v59 = vld [vmem:[%s0 + $0xc4] sm:$0xff]
    %v60 = vld [vmem:[%s0 + $0xcc] sm:$0xf]
    %v61 = vld [vmem:[%s0 + $0xd0] sm:$0xff]
    %v62 = vld [vmem:[%s0 + $0xd8] sm:$0xff]
    %v63 = vld [vmem:[%s0 + $0xe0] sm:$0xff]
    %v64 = vld [vmem:[%s0 + $0xe8] sm:$0xff]
    %v65 = vld [vmem:[%s0 + $0xf0] sm:$0xff]
    %v66 = vld [vmem:[%s0 + $0xf8] sm:$0xff]
    %v67 = vld [vmem:[%s0 + $0x100] sm:$0xf]
    %v68 = vld [vmem:[%s0 + $0x104] sm:$0xff]
    %v69 = vld [vmem:[%s0 + $0x10c] sm:$0xff]
    %v70 = vld [vmem:[%s0 + $0x114] sm:$0xff]
    %v71 = vld [vmem:[%s0 + $0x11c] sm:$0xff]
    %v72 = vld [vmem:[%s0 + $0x124] sm:$0xff]
    %v73 = vld [vmem:[%s0 + $0x12c] sm:$0xff]
    %v74 = vld [vmem:[%s0 + $0x134] sm:$0xf]
    %v75 = vld [vmem:[%s0 + $0x138] sm:$0xff]
    %v76 = vld [vmem:[%s0 + $0x140] sm:$0xff]
    %v77 = vld [vmem:[%s0 + $0x148] sm:$0xff]
    %v78 = vld [vmem:[%s0 + $0x150] sm:$0xff]
    %v79 = vld [vmem:[%s0 + $0x158] sm:$0xff]
    %v80 = vld [vmem:[%s0 + $0x160] sm:$0xff]
    %v81 = vld [vmem:[%s0 + $0x168] sm:$0xf]
    %v82 = vld [vmem:[%s0 + $0x16c] sm:$0xff]
    %v83 = vld [vmem:[%s0 + $0x174] sm:$0xff]
    %v84 = vld [vmem:[%s0 + $0x17c] sm:$0xff]
    %v85 = vld [vmem:[%s0 + $0x184] sm:$0xff]
    %v86 = vld [vmem:[%s0 + $0x18c] sm:$0xff]
    %v87 = vld [vmem:[%s0 + $0x194] sm:$0xff]
    %v88 = vld [vmem:[%s0 + $0x19c] sm:$0xf]
    %v89 = vld [vmem:[%s0 + $0x1a0] sm:$0xff]
    %v90 = vld [vmem:[%s0 + $0x1a8] sm:$0xff]
    %v91 = vld [vmem:[%s0 + $0x1b0] sm:$0xff]
    %v92 = vld [vmem:[%s0 + $0x1b8] sm:$0xff]
    %v93 = vld [vmem:[%s0 + $0x1c0] sm:$0xff]
    %v94 = vld [vmem:[%s0 + $0x1c8] sm:$0xff]
    %v95 = vld [vmem:[%s0 + $0x1d0] sm:$0xf]
    %v96 = vld [vmem:[%s0 + $0x1d4] sm:$0xff]
    %v97 = vld [vmem:[%s0 + $0x1dc] sm:$0xff]
    %v98 = vld [vmem:[%s0 + $0x1e4] sm:$0xff]
    %v99 = vld [vmem:[%s0 + $0x1ec] sm:$0xff]
    %v100 = vld [vmem:[%s0 + $0x1f4] sm:$0xff]
    %v101 = vld [vmem:[%s0 + $0x1fc] sm:$0xff]
    %v102 = vld [vmem:[%s0 + $0x204] sm:$0xf]
    %v103 = vld [vmem:[%s0 + $0x208] sm:$0xff]
    %v104 = vld [vmem:[%s0 + $0x210] sm:$0xff]
    %v105 = vld [vmem:[%s0 + $0x218] sm:$0xff]
    %v106 = vld [vmem:[%s0 + $0x220] sm:$0xff]
    %v107 = vld [vmem:[%s0 + $0x228] sm:$0xff]
    %v108 = vld [vmem:[%s0 + $0x230] sm:$0xff]
    %v109 = vld [vmem:[%s0 + $0x238] sm:$0xf]
    %v110 = vld [vmem:[%s0 + $0x23c] sm:$0xff]
    %v111 = vld [vmem:[%s0 + $0x244] sm:$0xff]
    %v112 = vld [vmem:[%s0 + $0x24c] sm:$0xff]
    %v113 = vld [vmem:[%s0 + $0x254] sm:$0xff]
    %v114 = vld [vmem:[%s0 + $0x25c] sm:$0xff]
    %v115 = vld [vmem:[%s0 + $0x264] sm:$0xff]
    %v116 = vld [vmem:[%s0 + $0x26c] sm:$0xf]
    %v117 = vld [vmem:[%s0 + $0x270] sm:$0xff]
    %v118 = vld [vmem:[%s0 + $0x278] sm:$0xff]
    %v119 = vld [vmem:[%s0 + $0x280] sm:$0xff]
    %v120 = vld [vmem:[%s0 + $0x288] sm:$0xff]
    %v121 = vld [vmem:[%s0 + $0x290] sm:$0xff]
    %v122 = vld [vmem:[%s0 + $0x298] sm:$0xff]
    %v123 = vld [vmem:[%s0 + $0x2a0] sm:$0xf]
    %v124 = vld [vmem:[%s0 + $0x2a4] sm:$0xff]
    %v125 = vld [vmem:[%s0 + $0x2ac] sm:$0xff]
    %v126 = vld [vmem:[%s0 + $0x2b4] sm:$0xff]
    %v127 = vld [vmem:[%s0 + $0x2bc] sm:$0xff]
    %v128 = vld [vmem:[%s0 + $0x2c4] sm:$0xff]
    %v129 = vld [vmem:[%s0 + $0x2cc] sm:$0xff]
    %v130 = vld [vmem:[%s0 + $0x2d4] sm:$0xf]
    %v131 = vld [vmem:[%s0 + $0x2d8] sm:$0xff]
    %v132 = vld [vmem:[%s0 + $0x2e0] sm:$0xff]
    %v133 = vld [vmem:[%s0 + $0x2e8] sm:$0xff]
    %v134 = vld [vmem:[%s0 + $0x2f0] sm:$0xff]
    %v135 = vld [vmem:[%s0 + $0x2f8] sm:$0xff]
    %v136 = vld [vmem:[%s0 + $0x300] sm:$0xff]
    %v137 = vld [vmem:[%s0 + $0x308] sm:$0xf]
    %v138 = vld [vmem:[%s0 + $0x30c] sm:$0xff]
    %v139 = vld [vmem:[%s0 + $0x314] sm:$0xff]
    %v140 = vld [vmem:[%s0 + $0x31c] sm:$0xff]
    %v141 = vld [vmem:[%s0 + $0x324] sm:$0xff]
    %v142 = vld [vmem:[%s0 + $0x32c] sm:$0xff]
    %v143 = vld [vmem:[%s0 + $0x334] sm:$0xff]
    %v144 = vld [vmem:[%s0 + $0x33c] sm:$0xf]
    %v145 = vld [vmem:[%s0 + $0x340] sm:$0xff]
    %v146 = vld [vmem:[%s0 + $0x348] sm:$0xff]
    %v147 = vld [vmem:[%s0 + $0x350] sm:$0xff]
    %v148 = vld [vmem:[%s0 + $0x358] sm:$0xff]
    %v149 = vld [vmem:[%s0 + $0x360] sm:$0xff]
    %v150 = vld [vmem:[%s0 + $0x368] sm:$0xff]
    %v151 = vld [vmem:[%s0 + $0x370] sm:$0xf]
    %v152 = vld [vmem:[%s0 + $0x374] sm:$0xff]
    %v153 = vld [vmem:[%s0 + $0x37c] sm:$0xff]
    %v154 = vld [vmem:[%s0 + $0x384] sm:$0xff]
    %v155 = vld [vmem:[%s0 + $0x38c] sm:$0xff]
    %v156 = vld [vmem:[%s0 + $0x394] sm:$0xff]
    %v157 = vld [vmem:[%s0 + $0x39c] sm:$0xff]
    %v158 = vld [vmem:[%s0 + $0x3a4] sm:$0xf]
    %v159 = vld [vmem:[%s0 + $0x3a8] sm:$0xff]
    %v160 = vld [vmem:[%s0 + $0x3b0] sm:$0xff]
    %v161 = vld [vmem:[%s0 + $0x3b8] sm:$0xff]
    %v162 = vld [vmem:[%s0 + $0x3c0] sm:$0xff]
    %v163 = vld [vmem:[%s0 + $0x3c8] sm:$0xff]
    %v164 = vld [vmem:[%s0 + $0x3d0] sm:$0xff]
    %v165 = vld [vmem:[%s0 + $0x3d8] sm:$0xf]
    %v166 = vld [vmem:[%s0 + $0x3dc] sm:$0xff]
    %v167 = vld [vmem:[%s0 + $0x3e4] sm:$0xff]
    %v168 = vld [vmem:[%s0 + $0x3ec] sm:$0xff]
    %v169 = vld [vmem:[%s0 + $0x3f4] sm:$0xff]
    %v170 = vld [vmem:[%s0 + $0x3fc] sm:$0xff]
    %v171 = vld [vmem:[%s0 + $0x404] sm:$0xff]
    %v172 = vld [vmem:[%s0 + $0x40c] sm:$0xf]
    %v173 = vld [vmem:[%s0 + $0x410] sm:$0xff]
    %v174 = vld [vmem:[%s0 + $0x418] sm:$0xff]
    %v175 = vld [vmem:[%s0 + $0x420] sm:$0xff]
    %v176 = vld [vmem:[%s0 + $0x428] sm:$0xff]
    %v177 = vld [vmem:[%s0 + $0x430] sm:$0xff]
    %v178 = vld [vmem:[%s0 + $0x438] sm:$0xff]
    %v179 = vld [vmem:[%s0 + $0x440] sm:$0xf]
    %v180 = vld [vmem:[%s0 + $0x444] sm:$0xff]
    %v181 = vld [vmem:[%s0 + $0x44c] sm:$0xff]
    %v182 = vld [vmem:[%s0 + $0x454] sm:$0xff]
    %v183 = vld [vmem:[%s0 + $0x45c] sm:$0xff]
    %v184 = vld [vmem:[%s0 + $0x464] sm:$0xff]
    %v185 = vld [vmem:[%s0 + $0x46c] sm:$0xff]
    %v186 = vld [vmem:[%s0 + $0x474] sm:$0xf]
    %v187 = vld [vmem:[%s0 + $0x478] sm:$0xff]
    %v188 = vld [vmem:[%s0 + $0x480] sm:$0xff]
    %v189 = vld [vmem:[%s0 + $0x488] sm:$0xff]
    %v190 = vld [vmem:[%s0 + $0x490] sm:$0xff]
    %v191 = vld [vmem:[%s0 + $0x498] sm:$0xff]
    %v192 = vld [vmem:[%s0 + $0x4a0] sm:$0xff]
    %v193 = vld [vmem:[%s0 + $0x4a8] sm:$0xf]
    %v194 = vld [vmem:[%s0 + $0x4ac] sm:$0xff]
    %v195 = vld [vmem:[%s0 + $0x4b4] sm:$0xff]
    %v196 = vld [vmem:[%s0 + $0x4bc] sm:$0xff]
    %v197 = vld [vmem:[%s0 + $0x4c4] sm:$0xff]
    %v198 = vld [vmem:[%s0 + $0x4cc] sm:$0xff]
    %v199 = vld [vmem:[%s0 + $0x4d4] sm:$0xff]
    %v200 = vld [vmem:[%s0 + $0x4dc] sm:$0xf]
    %v201 = vld [vmem:[%s0 + $0x4e0] sm:$0xff]
    %v202 = vld [vmem:[%s0 + $0x4e8] sm:$0xff]
    %v203 = vld [vmem:[%s0 + $0x4f0] sm:$0xff]
    %v204 = vld [vmem:[%s0 + $0x4f8] sm:$0xff]
    %v205 = vld [vmem:[%s0 + $0x500] sm:$0xff]
    %v206 = vld [vmem:[%s0 + $0x508] sm:$0xff]
    %v207 = vld [vmem:[%s0 + $0x510] sm:$0xf]
    %v208 = vld [vmem:[%s0 + $0x514] sm:$0xff]
    %v209 = vld [vmem:[%s0 + $0x51c] sm:$0xff]
    %v210 = vld [vmem:[%s0 + $0x524] sm:$0xff]
    %v211 = vld [vmem:[%s0 + $0x52c] sm:$0xff]
    %v212 = vld [vmem:[%s0 + $0x534] sm:$0xff]
    %v213 = vld [vmem:[%s0 + $0x53c] sm:$0xff]
    %v214 = vld [vmem:[%s0 + $0x544] sm:$0xf]
    %v215 = vld [vmem:[%s0 + $0x548] sm:$0xff]
    %v216 = vld [vmem:[%s0 + $0x550] sm:$0xff]
    %v217 = vld [vmem:[%s0 + $0x558] sm:$0xff]
    %v218 = vld [vmem:[%s0 + $0x560] sm:$0xff]
    %v219 = vld [vmem:[%s0 + $0x568] sm:$0xff]
    %v220 = vld [vmem:[%s0 + $0x570] sm:$0xff]
    %v221 = vld [vmem:[%s0 + $0x578] sm:$0xf]
    %v222 = vld [vmem:[%s0 + $0x57c] sm:$0xff]
    %v223 = vld [vmem:[%s0 + $0x584] sm:$0xff]
    %v224 = vld [vmem:[%s0 + $0x58c] sm:$0xff]
    %v225 = vld [vmem:[%s0 + $0x594] sm:$0xff]
    %v226 = vld [vmem:[%s0 + $0x59c] sm:$0xff]
    %v227 = vld [vmem:[%s0 + $0x5a4] sm:$0xff]
    %v228 = vld [vmem:[%s0 + $0x5ac] sm:$0xf]
    %v229 = vld [vmem:[%s0 + $0x5b0] sm:$0xff]
    %v230 = vld [vmem:[%s0 + $0x5b8] sm:$0xff]
    %v231 = vld [vmem:[%s0 + $0x5c0] sm:$0xff]
    %v232 = vld [vmem:[%s0 + $0x5c8] sm:$0xff]
    %v233 = vld [vmem:[%s0 + $0x5d0] sm:$0xff]
    %v234 = vld [vmem:[%s0 + $0x5d8] sm:$0xff]
    %v235 = vld [vmem:[%s0 + $0x5e0] sm:$0xf]
    %v236 = vld [vmem:[%s0 + $0x5e4] sm:$0xff]
    %v237 = vld [vmem:[%s0 + $0x5ec] sm:$0xff]
    %v238 = vld [vmem:[%s0 + $0x5f4] sm:$0xff]
    %v239 = vld [vmem:[%s0 + $0x5fc] sm:$0xff]
    %v240 = vld [vmem:[%s0 + $0x604] sm:$0xff]
    %v241 = vld [vmem:[%s0 + $0x60c] sm:$0xff]
    %v242 = vld [vmem:[%s0 + $0x614] sm:$0xf]
    %v243 = vld [vmem:[%s0 + $0x618] sm:$0xff]
    %v244 = vld [vmem:[%s0 + $0x620] sm:$0xff]
    %v245 = vld [vmem:[%s0 + $0x628] sm:$0xff]
    %v246 = vld [vmem:[%s0 + $0x630] sm:$0xff]
    %v247 = vld [vmem:[%s0 + $0x638] sm:$0xff]
    %v248 = vld [vmem:[%s0 + $0x640] sm:$0xff]
    %v249 = vld [vmem:[%s0 + $0x648] sm:$0xf]
    %v250 = vld [vmem:[%s0 + $0x64c] sm:$0xff]
    %v251 = vld [vmem:[%s0 + $0x654] sm:$0xff]
    %v252 = vld [vmem:[%s0 + $0x65c] sm:$0xff]
    %v253 = vld [vmem:[%s0 + $0x664] sm:$0xff]
    %v254 = vld [vmem:[%s0 + $0x66c] sm:$0xff]
    %v255 = vld [vmem:[%s0 + $0x674] sm:$0xff]
    %v256 = vld [vmem:[%s0 + $0x67c] sm:$0xf]
    %v257 = vld [vmem:[%s1] sm:$0xf]
    %v258 = vld [vmem:[%s1 + $0x4] sm:$0xf]
    %v259 = vld [vmem:[%s1 + $0x8] sm:$0xf]
    %v260 = vld [vmem:[%s1 + $0xc] sm:$0xf]
    %v261 = vld [vmem:[%s1 + $0x10] sm:$0xf]
    %v262 = vld [vmem:[%s1 + $0x14] sm:$0xf]
    %v263 = vld [vmem:[%s1 + $0x18] sm:$0xf]
    %v264 = vld [vmem:[%s1 + $0x1c] sm:$0xf]
    %v265 = vld [vmem:[%s1 + $0x20] sm:$0xf]
    %v266 = vld [vmem:[%s1 + $0x24] sm:$0xf]
    %v267 = vld [vmem:[%s1 + $0x28] sm:$0xf]
    %v268 = vld [vmem:[%s1 + $0x2c] sm:$0xf]
    %v269 = vld [vmem:[%s1 + $0x30] sm:$0xf]
    %v270 = vld [vmem:[%s1 + $0x34] sm:$0xf]
    %v271 = vld [vmem:[%s1 + $0x38] sm:$0xf]
    %v272 = vld [vmem:[%s1 + $0x3c] sm:$0xf]
    %v273 = vld [vmem:[%s1 + $0x40] sm:$0xf]
    %v274 = vld [vmem:[%s1 + $0x44] sm:$0xf]
    %v275 = vld [vmem:[%s1 + $0x48] sm:$0xf]
    %v276 = vld [vmem:[%s1 + $0x4c] sm:$0xf]
    %v277 = vld [vmem:[%s1 + $0x50] sm:$0xf]
    %v278 = vld [vmem:[%s1 + $0x54] sm:$0xf]
    %v279 = vld [vmem:[%s1 + $0x58] sm:$0xf]
    %v280 = vld [vmem:[%s1 + $0x5c] sm:$0xf]
    %v281 = vld [vmem:[%s1 + $0x60] sm:$0xf]
    %v282 = vld [vmem:[%s1 + $0x64] sm:$0xf]
    %v283 = vld [vmem:[%s1 + $0x68] sm:$0xf]
    %v284 = vld [vmem:[%s1 + $0x6c] sm:$0xf]
    %v285 = vld [vmem:[%s1 + $0x70] sm:$0xf]
    %v286 = vld [vmem:[%s1 + $0x74] sm:$0xf]
    %v287 = vld [vmem:[%s1 + $0x78] sm:$0xf]
    %v288 = vld [vmem:[%s1 + $0x7c] sm:$0xf]
    %v289 = vld [vmem:[%s1 + $0x80] sm:$0xf]
    %v290 = vld [vmem:[%s1 + $0x84] sm:$0xf]
    %v291 = vld [vmem:[%s1 + $0x88] sm:$0xf]
    %v292 = vld [vmem:[%s1 + $0x8c] sm:$0xf]
    %v293 = vld [vmem:[%s1 + $0x90] sm:$0xf]
    %v294 = vld [vmem:[%s1 + $0x94] sm:$0xf]
    %v295 = vld [vmem:[%s1 + $0x98] sm:$0xf]
    %v296 = vld [vmem:[%s1 + $0x9c] sm:$0xf]
    %v297 = vld [vmem:[%s1 + $0xa0] sm:$0xf]
    %v298 = vld [vmem:[%s1 + $0xa4] sm:$0xf]
    %v299 = vld [vmem:[%s1 + $0xa8] sm:$0xf]
    %v300 = vld [vmem:[%s1 + $0xac] sm:$0xf]
    %v301 = vld [vmem:[%s1 + $0xb0] sm:$0xf]
    %v302 = vld [vmem:[%s1 + $0xb4] sm:$0xf]
    %v303 = vld [vmem:[%s1 + $0xb8] sm:$0xf]
    %v304 = vld [vmem:[%s1 + $0xbc] sm:$0xf]
    %v305 = vld [vmem:[%s1 + $0xc0] sm:$0xf]
    %v306 = vld [vmem:[%s1 + $0xc4] sm:$0xf]
    %v307 = vld [vmem:[%s1 + $0xc8] sm:$0xf]
    %v308 = vld [vmem:[%s1 + $0xcc] sm:$0xf]
    %v309 = vld [vmem:[%s1 + $0xd0] sm:$0xf]
    %v310 = vld [vmem:[%s1 + $0xd4] sm:$0xf]
    %v311 = vld [vmem:[%s1 + $0xd8] sm:$0xf]
    %v312 = vld [vmem:[%s1 + $0xdc] sm:$0xf]
    %v313 = vld [vmem:[%s1 + $0xe0] sm:$0xf]
    %v314 = vld [vmem:[%s1 + $0xe4] sm:$0xf]
    %v315 = vld [vmem:[%s1 + $0xe8] sm:$0xf]
    %v316 = vld [vmem:[%s1 + $0xec] sm:$0xf]
    %v317 = vld [vmem:[%s1 + $0xf0] sm:$0xf]
    %v318 = vld [vmem:[%s1 + $0xf4] sm:$0xf]
    %v319 = vld [vmem:[%s1 + $0xf8] sm:$0xf]
    %v320 = vld [vmem:[%s1 + $0xfc] sm:$0xf]
    %v321 = vld [vmem:[%s1 + $0x100] sm:$0xf]
    %v322 = vld [vmem:[%s1 + $0x104] sm:$0xf]
    %v323 = vld [vmem:[%s1 + $0x108] sm:$0xf]
    %v324 = vld [vmem:[%s1 + $0x10c] sm:$0xf]
    %v325 = vld [vmem:[%s1 + $0x110] sm:$0xf]
    %v326 = vld [vmem:[%s1 + $0x114] sm:$0xf]
    %v327 = vld [vmem:[%s1 + $0x118] sm:$0xf]
    %v328 = vld [vmem:[%s1 + $0x11c] sm:$0xf]
    %v329 = vld [vmem:[%s1 + $0x120] sm:$0xf]
    %v330 = vld [vmem:[%s1 + $0x124] sm:$0xf]
    %v331 = vld [vmem:[%s1 + $0x128] sm:$0xf]
    %v332 = vld [vmem:[%s1 + $0x12c] sm:$0xf]
    %v333 = vld [vmem:[%s1 + $0x130] sm:$0xf]
    %v334 = vld [vmem:[%s1 + $0x134] sm:$0xf]
    %v335 = vld [vmem:[%s1 + $0x138] sm:$0xf]
    %v336 = vld [vmem:[%s1 + $0x13c] sm:$0xf]
    %v337 = vld [vmem:[%s1 + $0x140] sm:$0xf]
    %v338 = vld [vmem:[%s1 + $0x144] sm:$0xf]
    %v339 = vld [vmem:[%s1 + $0x148] sm:$0xf]
    %v340 = vld [vmem:[%s1 + $0x14c] sm:$0xf]
    %v341 = vld [vmem:[%s1 + $0x150] sm:$0xf]
    %v342 = vld [vmem:[%s1 + $0x154] sm:$0xf]
    %v343 = vld [vmem:[%s1 + $0x158] sm:$0xf]
    %v344 = vld [vmem:[%s1 + $0x15c] sm:$0xf]
    %v345 = vld [vmem:[%s1 + $0x160] sm:$0xf]
    %v346 = vld [vmem:[%s1 + $0x164] sm:$0xf]
    %v347 = vld [vmem:[%s1 + $0x168] sm:$0xf]
    %v348 = vld [vmem:[%s1 + $0x16c] sm:$0xf]
    %v349 = vld [vmem:[%s1 + $0x170] sm:$0xf]
    %v350 = vld [vmem:[%s1 + $0x174] sm:$0xf]
    %v351 = vld [vmem:[%s1 + $0x178] sm:$0xf]
    %v352 = vld [vmem:[%s1 + $0x17c] sm:$0xf]
    %v353 = vld [vmem:[%s1 + $0x180] sm:$0xf]
    %v354 = vld [vmem:[%s1 + $0x184] sm:$0xf]
    %v355 = vld [vmem:[%s1 + $0x188] sm:$0xf]
    %v356 = vld [vmem:[%s1 + $0x18c] sm:$0xf]
    %v357 = vld [vmem:[%s1 + $0x190] sm:$0xf]
    %v358 = vld [vmem:[%s1 + $0x194] sm:$0xf]
    %v359 = vld [vmem:[%s1 + $0x198] sm:$0xf]
    %v360 = vld [vmem:[%s1 + $0x19c] sm:$0xf]
    %v361 = vld [vmem:[%s1 + $0x1a0] sm:$0xf]
    %v362 = vld [vmem:[%s1 + $0x1a4] sm:$0xf]
    %v363 = vld [vmem:[%s1 + $0x1a8] sm:$0xf]
    %v364 = vld [vmem:[%s1 + $0x1ac] sm:$0xf]
    %v365 = vld [vmem:[%s1 + $0x1b0] sm:$0xf]
    %v366 = vld [vmem:[%s1 + $0x1b4] sm:$0xf]
    %v367 = vld [vmem:[%s1 + $0x1b8] sm:$0xf]
    %v368 = vld [vmem:[%s1 + $0x1bc] sm:$0xf]
    %v369 = vld [vmem:[%s1 + $0x1c0] sm:$0xf]
    %v370 = vld [vmem:[%s1 + $0x1c4] sm:$0xf]
    %v371 = vld [vmem:[%s1 + $0x1c8] sm:$0xf]
    %v372 = vld [vmem:[%s1 + $0x1cc] sm:$0xf]
    %v373 = vld [vmem:[%s1 + $0x1d0] sm:$0xf]
    %v374 = vld [vmem:[%s1 + $0x1d4] sm:$0xf]
    %v375 = vld [vmem:[%s1 + $0x1d8] sm:$0xf]
    %v376 = vld [vmem:[%s1 + $0x1dc] sm:$0xf]
    %v377 = vld [vmem:[%s1 + $0x1e0] sm:$0xf]
    %v378 = vld [vmem:[%s1 + $0x1e4] sm:$0xf]
    %v379 = vld [vmem:[%s1 + $0x1e8] sm:$0xf]
    %v380 = vld [vmem:[%s1 + $0x1ec] sm:$0xf]
    %v381 = vld [vmem:[%s1 + $0x1f0] sm:$0xf]
    %v382 = vld [vmem:[%s1 + $0x1f4] sm:$0xf]
    %v383 = vld [vmem:[%s1 + $0x1f8] sm:$0xf]
    %v384 = vld [vmem:[%s1 + $0x1fc] sm:$0xf]
    %v385 = vld [vmem:[%s1 + $0x200] sm:$0xf]
    %v386 = vld [vmem:[%s1 + $0x204] sm:$0xf]
    %v387 = vld [vmem:[%s1 + $0x208] sm:$0xf]
    %v388 = vld [vmem:[%s1 + $0x20c] sm:$0xf]
    %v389 = vld [vmem:[%s1 + $0x210] sm:$0xf]
    %v390 = vld [vmem:[%s1 + $0x214] sm:$0xf]
    %v391 = vld [vmem:[%s1 + $0x218] sm:$0xf]
    %v392 = vld [vmem:[%s1 + $0x21c] sm:$0xf]
    %v393 = vld [vmem:[%s1 + $0x220] sm:$0xf]
    %v394 = vld [vmem:[%s1 + $0x224] sm:$0xf]
    %v395 = vld [vmem:[%s1 + $0x228] sm:$0xf]
    %v396 = vld [vmem:[%s1 + $0x22c] sm:$0xf]
    %v397 = vld [vmem:[%s1 + $0x230] sm:$0xf]
    %v398 = vld [vmem:[%s1 + $0x234] sm:$0xf]
    %v399 = vld [vmem:[%s1 + $0x238] sm:$0xf]
    %v400 = vld [vmem:[%s1 + $0x23c] sm:$0xf]
    %v401 = vld [vmem:[%s1 + $0x240] sm:$0xf]
    %v402 = vld [vmem:[%s1 + $0x244] sm:$0xf]
    %v403 = vld [vmem:[%s1 + $0x248] sm:$0xf]
    %v404 = vld [vmem:[%s1 + $0x24c] sm:$0xf]
    %v405 = vld [vmem:[%s1 + $0x250] sm:$0xf]
    %v406 = vld [vmem:[%s1 + $0x254] sm:$0xf]
    %v407 = vld [vmem:[%s1 + $0x258] sm:$0xf]
    %v408 = vld [vmem:[%s1 + $0x25c] sm:$0xf]
    %v409 = vld [vmem:[%s1 + $0x260] sm:$0xf]
    %v410 = vld [vmem:[%s1 + $0x264] sm:$0xf]
    %v411 = vld [vmem:[%s1 + $0x268] sm:$0xf]
    %v412 = vld [vmem:[%s1 + $0x26c] sm:$0xf]
    %v413 = vld [vmem:[%s1 + $0x270] sm:$0xf]
    %v414 = vld [vmem:[%s1 + $0x274] sm:$0xf]
    %v415 = vld [vmem:[%s1 + $0x278] sm:$0xf]
    %v416 = vld [vmem:[%s1 + $0x27c] sm:$0xf]
    %v417 = vld [vmem:[%s1 + $0x280] sm:$0xf]
    %v418 = vld [vmem:[%s1 + $0x284] sm:$0xf]
    %v419 = vld [vmem:[%s1 + $0x288] sm:$0xf]
    %v420 = vld [vmem:[%s1 + $0x28c] sm:$0xf]
    %v421 = vld [vmem:[%s1 + $0x290] sm:$0xf]
    %v422 = vld [vmem:[%s1 + $0x294] sm:$0xf]
    %v423 = vld [vmem:[%s1 + $0x298] sm:$0xf]
    %v424 = vld [vmem:[%s1 + $0x29c] sm:$0xf]
    %v425 = vld [vmem:[%s1 + $0x2a0] sm:$0xf]
    %v426 = vld [vmem:[%s1 + $0x2a4] sm:$0xf]
    %v427 = vld [vmem:[%s1 + $0x2a8] sm:$0xf]
    %v428 = vld [vmem:[%s1 + $0x2ac] sm:$0xf]
    %v429 = vld [vmem:[%s1 + $0x2b0] sm:$0xf]
    %v430 = vld [vmem:[%s1 + $0x2b4] sm:$0xf]
    %v431 = vld [vmem:[%s1 + $0x2b8] sm:$0xf]
    %v432 = vld [vmem:[%s1 + $0x2bc] sm:$0xf]
    %v433 = vld [vmem:[%s1 + $0x2c0] sm:$0xf]
    %v434 = vld [vmem:[%s1 + $0x2c4] sm:$0xf]
    %v435 = vld [vmem:[%s1 + $0x2c8] sm:$0xf]
    %v436 = vld [vmem:[%s1 + $0x2cc] sm:$0xf]
    %v437 = vld [vmem:[%s1 + $0x2d0] sm:$0xf]
    %v438 = vld [vmem:[%s1 + $0x2d4] sm:$0xf]
    %v439 = vld [vmem:[%s1 + $0x2d8] sm:$0xf]
    %v440 = vld [vmem:[%s1 + $0x2dc] sm:$0xf]
    %v441 = vld [vmem:[%s1 + $0x2e0] sm:$0xf]
    %v442 = vld [vmem:[%s1 + $0x2e4] sm:$0xf]
    %v443 = vld [vmem:[%s1 + $0x2e8] sm:$0xf]
    %v444 = vld [vmem:[%s1 + $0x2ec] sm:$0xf]
    %v445 = vld [vmem:[%s1 + $0x2f0] sm:$0xf]
    %v446 = vld [vmem:[%s1 + $0x2f4] sm:$0xf]
    %v447 = vld [vmem:[%s1 + $0x2f8] sm:$0xf]
    %v448 = vld [vmem:[%s1 + $0x2fc] sm:$0xf]
    %v449 = vld [vmem:[%s1 + $0x300] sm:$0xf]
    %v450 = vld [vmem:[%s1 + $0x304] sm:$0xf]
    %v451 = vld [vmem:[%s1 + $0x308] sm:$0xf]
    %v452 = vld [vmem:[%s1 + $0x30c] sm:$0xf]
    %v453 = vld [vmem:[%s1 + $0x310] sm:$0xf]
    %v454 = vld [vmem:[%s1 + $0x314] sm:$0xf]
    %v455 = vld [vmem:[%s1 + $0x318] sm:$0xf]
    %v456 = vld [vmem:[%s1 + $0x31c] sm:$0xf]
    %v457 = vld [vmem:[%s1 + $0x320] sm:$0xf]
    %v458 = vld [vmem:[%s1 + $0x324] sm:$0xf]
    %v459 = vld [vmem:[%s1 + $0x328] sm:$0xf]
    %v460 = vld [vmem:[%s1 + $0x32c] sm:$0xf]
    %v461 = vld [vmem:[%s1 + $0x330] sm:$0xf]
    %v462 = vld [vmem:[%s1 + $0x334] sm:$0xf]
    %v463 = vld [vmem:[%s1 + $0x338] sm:$0xf]
    %v464 = vld [vmem:[%s1 + $0x33c] sm:$0xf]
    %v689 = vunpack.c.l.b16 %v33
    %v690 = vunpack.c.h.b16 %v33
    %v691 = vunpack.c.l.b16 %v34
    %v692 = vunpack.c.h.b16 %v34
    %v693 = vunpack.c.l.b16 %v35
    %v694 = vunpack.c.h.b16 %v35
    %v695 = vunpack.c.l.b16 %v36
    %v696 = vunpack.c.h.b16 %v36
    %v697 = vunpack.c.l.b16 %v37
    %v698 = vunpack.c.h.b16 %v37
    %v699 = vunpack.c.l.b16 %v38
    %v700 = vunpack.c.h.b16 %v38
    %v701 = vunpack.c.l.b16 %v39
    %v702 = vunpack.c.l.b16 %v40
    %v703 = vunpack.c.h.b16 %v40
    %v704 = vunpack.c.l.b16 %v41
    %v705 = vunpack.c.h.b16 %v41
    %v706 = vunpack.c.l.b16 %v42
    %v707 = vunpack.c.h.b16 %v42
    %v708 = vunpack.c.l.b16 %v43
    %v709 = vunpack.c.h.b16 %v43
    %v710 = vunpack.c.l.b16 %v44
    %v711 = vunpack.c.h.b16 %v44
    %v712 = vunpack.c.l.b16 %v45
    %v713 = vunpack.c.h.b16 %v45
    %v714 = vunpack.c.l.b16 %v46
    %v715 = vunpack.c.l.b16 %v47
    %v716 = vunpack.c.h.b16 %v47
    %v717 = vunpack.c.l.b16 %v48
    %v718 = vunpack.c.h.b16 %v48
    %v719 = vunpack.c.l.b16 %v49
    %v720 = vunpack.c.h.b16 %v49
    %v721 = vunpack.c.l.b16 %v50
    %v722 = vunpack.c.h.b16 %v50
    %v723 = vunpack.c.l.b16 %v51
    %v724 = vunpack.c.h.b16 %v51
    %v725 = vunpack.c.l.b16 %v52
    %v726 = vunpack.c.h.b16 %v52
    %v727 = vunpack.c.l.b16 %v53
    %v728 = vunpack.c.l.b16 %v54
    %v729 = vunpack.c.h.b16 %v54
    %v730 = vunpack.c.l.b16 %v55
    %v731 = vunpack.c.h.b16 %v55
    %v732 = vunpack.c.l.b16 %v56
    %v733 = vunpack.c.h.b16 %v56
    %v734 = vunpack.c.l.b16 %v57
    %v735 = vunpack.c.h.b16 %v57
    %v736 = vunpack.c.l.b16 %v58
    %v737 = vunpack.c.h.b16 %v58
    %v738 = vunpack.c.l.b16 %v59
    %v739 = vunpack.c.h.b16 %v59
    %v740 = vunpack.c.l.b16 %v60
    %v741 = vunpack.c.l.b16 %v61
    %v742 = vunpack.c.h.b16 %v61
    %v743 = vunpack.c.l.b16 %v62
    %v744 = vunpack.c.h.b16 %v62
    %v745 = vunpack.c.l.b16 %v63
    %v746 = vunpack.c.h.b16 %v63
    %v747 = vunpack.c.l.b16 %v64
    %v748 = vunpack.c.h.b16 %v64
    %v749 = vunpack.c.l.b16 %v65
    %v750 = vunpack.c.h.b16 %v65
    %v751 = vunpack.c.l.b16 %v66
    %v752 = vunpack.c.h.b16 %v66
    %v753 = vunpack.c.l.b16 %v67
    %v754 = vunpack.c.l.b16 %v68
    %v755 = vunpack.c.h.b16 %v68
    %v756 = vunpack.c.l.b16 %v69
    %v757 = vunpack.c.h.b16 %v69
    %v758 = vunpack.c.l.b16 %v70
    %v759 = vunpack.c.h.b16 %v70
    %v760 = vunpack.c.l.b16 %v71
    %v761 = vunpack.c.h.b16 %v71
    %v762 = vunpack.c.l.b16 %v72
    %v763 = vunpack.c.h.b16 %v72
    %v764 = vunpack.c.l.b16 %v73
    %v765 = vunpack.c.h.b16 %v73
    %v766 = vunpack.c.l.b16 %v74
    %v767 = vunpack.c.l.b16 %v75
    %v768 = vunpack.c.h.b16 %v75
    %v769 = vunpack.c.l.b16 %v76
    %v770 = vunpack.c.h.b16 %v76
    %v771 = vunpack.c.l.b16 %v77
    %v772 = vunpack.c.h.b16 %v77
    %v773 = vunpack.c.l.b16 %v78
    %v774 = vunpack.c.h.b16 %v78
    %v775 = vunpack.c.l.b16 %v79
    %v776 = vunpack.c.h.b16 %v79
    %v777 = vunpack.c.l.b16 %v80
    %v778 = vunpack.c.h.b16 %v80
    %v779 = vunpack.c.l.b16 %v81
    %v780 = vunpack.c.l.b16 %v82
    %v781 = vunpack.c.h.b16 %v82
    %v782 = vunpack.c.l.b16 %v83
    %v783 = vunpack.c.h.b16 %v83
    %v784 = vunpack.c.l.b16 %v84
    %v785 = vunpack.c.h.b16 %v84
    %v786 = vunpack.c.l.b16 %v85
    %v787 = vunpack.c.h.b16 %v85
    %v788 = vunpack.c.l.b16 %v86
    %v789 = vunpack.c.h.b16 %v86
    %v790 = vunpack.c.l.b16 %v87
    %v791 = vunpack.c.h.b16 %v87
    %v792 = vunpack.c.l.b16 %v88
    %v793 = vunpack.c.l.b16 %v89
    %v794 = vunpack.c.h.b16 %v89
    %v795 = vunpack.c.l.b16 %v90
    %v796 = vunpack.c.h.b16 %v90
    %v797 = vunpack.c.l.b16 %v91
    %v798 = vunpack.c.h.b16 %v91
    %v799 = vunpack.c.l.b16 %v92
    %v800 = vunpack.c.h.b16 %v92
    %v801 = vunpack.c.l.b16 %v93
    %v802 = vunpack.c.h.b16 %v93
    %v803 = vunpack.c.l.b16 %v94
    %v804 = vunpack.c.h.b16 %v94
    %v805 = vunpack.c.l.b16 %v95
    %v806 = vunpack.c.l.b16 %v96
    %v807 = vunpack.c.h.b16 %v96
    %v808 = vunpack.c.l.b16 %v97
    %v809 = vunpack.c.h.b16 %v97
    %v810 = vunpack.c.l.b16 %v98
    %v811 = vunpack.c.h.b16 %v98
    %v812 = vunpack.c.l.b16 %v99
    %v813 = vunpack.c.h.b16 %v99
    %v814 = vunpack.c.l.b16 %v100
    %v815 = vunpack.c.h.b16 %v100
    %v816 = vunpack.c.l.b16 %v101
    %v817 = vunpack.c.h.b16 %v101
    %v818 = vunpack.c.l.b16 %v102
    %v819 = vunpack.c.l.b16 %v103
    %v820 = vunpack.c.h.b16 %v103
    %v821 = vunpack.c.l.b16 %v104
    %v822 = vunpack.c.h.b16 %v104
    %v823 = vunpack.c.l.b16 %v105
    %v824 = vunpack.c.h.b16 %v105
    %v825 = vunpack.c.l.b16 %v106
    %v826 = vunpack.c.h.b16 %v106
    %v827 = vunpack.c.l.b16 %v107
    %v828 = vunpack.c.h.b16 %v107
    %v829 = vunpack.c.l.b16 %v108
    %v830 = vunpack.c.h.b16 %v108
    %v831 = vunpack.c.l.b16 %v109
    %v832 = vunpack.c.l.b16 %v110
    %v833 = vunpack.c.h.b16 %v110
    %v834 = vunpack.c.l.b16 %v111
    %v835 = vunpack.c.h.b16 %v111
    %v836 = vunpack.c.l.b16 %v112
    %v837 = vunpack.c.h.b16 %v112
    %v838 = vunpack.c.l.b16 %v113
    %v839 = vunpack.c.h.b16 %v113
    %v840 = vunpack.c.l.b16 %v114
    %v841 = vunpack.c.h.b16 %v114
    %v842 = vunpack.c.l.b16 %v115
    %v843 = vunpack.c.h.b16 %v115
    %v844 = vunpack.c.l.b16 %v116
    %v845 = vunpack.c.l.b16 %v117
    %v846 = vunpack.c.h.b16 %v117
    %v847 = vunpack.c.l.b16 %v118
    %v848 = vunpack.c.h.b16 %v118
    %v849 = vunpack.c.l.b16 %v119
    %v850 = vunpack.c.h.b16 %v119
    %v851 = vunpack.c.l.b16 %v120
    %v852 = vunpack.c.h.b16 %v120
    %v853 = vunpack.c.l.b16 %v121
    %v854 = vunpack.c.h.b16 %v121
    %v855 = vunpack.c.l.b16 %v122
    %v856 = vunpack.c.h.b16 %v122
    %v857 = vunpack.c.l.b16 %v123
    %v858 = vunpack.c.l.b16 %v124
    %v859 = vunpack.c.h.b16 %v124
    %v860 = vunpack.c.l.b16 %v125
    %v861 = vunpack.c.h.b16 %v125
    %v862 = vunpack.c.l.b16 %v126
    %v863 = vunpack.c.h.b16 %v126
    %v864 = vunpack.c.l.b16 %v127
    %v865 = vunpack.c.h.b16 %v127
    %v866 = vunpack.c.l.b16 %v128
    %v867 = vunpack.c.h.b16 %v128
    %v868 = vunpack.c.l.b16 %v129
    %v869 = vunpack.c.h.b16 %v129
    %v870 = vunpack.c.l.b16 %v130
    %v871 = vunpack.c.l.b16 %v131
    %v872 = vunpack.c.h.b16 %v131
    %v873 = vunpack.c.l.b16 %v132
    %v874 = vunpack.c.h.b16 %v132
    %v875 = vunpack.c.l.b16 %v133
    %v876 = vunpack.c.h.b16 %v133
    %v877 = vunpack.c.l.b16 %v134
    %v878 = vunpack.c.h.b16 %v134
    %v879 = vunpack.c.l.b16 %v135
    %v880 = vunpack.c.h.b16 %v135
    %v881 = vunpack.c.l.b16 %v136
    %v882 = vunpack.c.h.b16 %v136
    %v883 = vunpack.c.l.b16 %v137
    %v884 = vunpack.c.l.b16 %v138
    %v885 = vunpack.c.h.b16 %v138
    %v886 = vunpack.c.l.b16 %v139
    %v887 = vunpack.c.h.b16 %v139
    %v888 = vunpack.c.l.b16 %v140
    %v889 = vunpack.c.h.b16 %v140
    %v890 = vunpack.c.l.b16 %v141
    %v891 = vunpack.c.h.b16 %v141
    %v892 = vunpack.c.l.b16 %v142
    %v893 = vunpack.c.h.b16 %v142
    %v894 = vunpack.c.l.b16 %v143
    %v895 = vunpack.c.h.b16 %v143
    %v896 = vunpack.c.l.b16 %v144
    %v897 = vunpack.c.l.b16 %v145
    %v898 = vunpack.c.h.b16 %v145
    %v899 = vunpack.c.l.b16 %v146
    %v900 = vunpack.c.h.b16 %v146
    %v901 = vunpack.c.l.b16 %v147
    %v902 = vunpack.c.h.b16 %v147
    %v903 = vunpack.c.l.b16 %v148
    %v904 = vunpack.c.h.b16 %v148
    %v905 = vunpack.c.l.b16 %v149
    %v906 = vunpack.c.h.b16 %v149
    %v907 = vunpack.c.l.b16 %v150
    %v908 = vunpack.c.h.b16 %v150
    %v909 = vunpack.c.l.b16 %v151
    %v910 = vunpack.c.l.b16 %v152
    %v911 = vunpack.c.h.b16 %v152
    %v912 = vunpack.c.l.b16 %v153
    %v913 = vunpack.c.h.b16 %v153
    %v914 = vunpack.c.l.b16 %v154
    %v915 = vunpack.c.h.b16 %v154
    %v916 = vunpack.c.l.b16 %v155
    %v917 = vunpack.c.h.b16 %v155
    %v918 = vunpack.c.l.b16 %v156
    %v919 = vunpack.c.h.b16 %v156
    %v920 = vunpack.c.l.b16 %v157
    %v921 = vunpack.c.h.b16 %v157
    %v922 = vunpack.c.l.b16 %v158
    %v923 = vunpack.c.l.b16 %v159
    %v924 = vunpack.c.h.b16 %v159
    %v925 = vunpack.c.l.b16 %v160
    %v926 = vunpack.c.h.b16 %v160
    %v927 = vunpack.c.l.b16 %v161
    %v928 = vunpack.c.h.b16 %v161
    %v929 = vunpack.c.l.b16 %v162
    %v930 = vunpack.c.h.b16 %v162
    %v931 = vunpack.c.l.b16 %v163
    %v932 = vunpack.c.h.b16 %v163
    %v933 = vunpack.c.l.b16 %v164
    %v934 = vunpack.c.h.b16 %v164
    %v935 = vunpack.c.l.b16 %v165
    %v936 = vunpack.c.l.b16 %v166
    %v937 = vunpack.c.h.b16 %v166
    %v938 = vunpack.c.l.b16 %v167
    %v939 = vunpack.c.h.b16 %v167
    %v940 = vunpack.c.l.b16 %v168
    %v941 = vunpack.c.h.b16 %v168
    %v942 = vunpack.c.l.b16 %v169
    %v943 = vunpack.c.h.b16 %v169
    %v944 = vunpack.c.l.b16 %v170
    %v945 = vunpack.c.h.b16 %v170
    %v946 = vunpack.c.l.b16 %v171
    %v947 = vunpack.c.h.b16 %v171
    %v948 = vunpack.c.l.b16 %v172
    %v949 = vunpack.c.l.b16 %v173
    %v950 = vunpack.c.h.b16 %v173
    %v951 = vunpack.c.l.b16 %v174
    %v952 = vunpack.c.h.b16 %v174
    %v953 = vunpack.c.l.b16 %v175
    %v954 = vunpack.c.h.b16 %v175
    %v955 = vunpack.c.l.b16 %v176
    %v956 = vunpack.c.h.b16 %v176
    %v957 = vunpack.c.l.b16 %v177
    %v958 = vunpack.c.h.b16 %v177
    %v959 = vunpack.c.l.b16 %v178
    %v960 = vunpack.c.h.b16 %v178
    %v961 = vunpack.c.l.b16 %v179
    %v962 = vunpack.c.l.b16 %v180
    %v963 = vunpack.c.h.b16 %v180
    %v964 = vunpack.c.l.b16 %v181
    %v965 = vunpack.c.h.b16 %v181
    %v966 = vunpack.c.l.b16 %v182
    %v967 = vunpack.c.h.b16 %v182
    %v968 = vunpack.c.l.b16 %v183
    %v969 = vunpack.c.h.b16 %v183
    %v970 = vunpack.c.l.b16 %v184
    %v971 = vunpack.c.h.b16 %v184
    %v972 = vunpack.c.l.b16 %v185
    %v973 = vunpack.c.h.b16 %v185
    %v974 = vunpack.c.l.b16 %v186
    %v975 = vunpack.c.l.b16 %v187
    %v976 = vunpack.c.h.b16 %v187
    %v977 = vunpack.c.l.b16 %v188
    %v978 = vunpack.c.h.b16 %v188
    %v979 = vunpack.c.l.b16 %v189
    %v980 = vunpack.c.h.b16 %v189
    %v981 = vunpack.c.l.b16 %v190
    %v982 = vunpack.c.h.b16 %v190
    %v983 = vunpack.c.l.b16 %v191
    %v984 = vunpack.c.h.b16 %v191
    %v985 = vunpack.c.l.b16 %v192
    %v986 = vunpack.c.h.b16 %v192
    %v987 = vunpack.c.l.b16 %v193
    %v988 = vunpack.c.l.b16 %v194
    %v989 = vunpack.c.h.b16 %v194
    %v990 = vunpack.c.l.b16 %v195
    %v991 = vunpack.c.h.b16 %v195
    %v992 = vunpack.c.l.b16 %v196
    %v993 = vunpack.c.h.b16 %v196
    %v994 = vunpack.c.l.b16 %v197
    %v995 = vunpack.c.h.b16 %v197
    %v996 = vunpack.c.l.b16 %v198
    %v997 = vunpack.c.h.b16 %v198
    %v998 = vunpack.c.l.b16 %v199
    %v999 = vunpack.c.h.b16 %v199
    %v1000 = vunpack.c.l.b16 %v200
    %v1001 = vunpack.c.l.b16 %v201
    %v1002 = vunpack.c.h.b16 %v201
    %v1003 = vunpack.c.l.b16 %v202
    %v1004 = vunpack.c.h.b16 %v202
    %v1005 = vunpack.c.l.b16 %v203
    %v1006 = vunpack.c.h.b16 %v203
    %v1007 = vunpack.c.l.b16 %v204
    %v1008 = vunpack.c.h.b16 %v204
    %v1009 = vunpack.c.l.b16 %v205
    %v1010 = vunpack.c.h.b16 %v205
    %v1011 = vunpack.c.l.b16 %v206
    %v1012 = vunpack.c.h.b16 %v206
    %v1013 = vunpack.c.l.b16 %v207
    %v1014 = vunpack.c.l.b16 %v208
    %v1015 = vunpack.c.h.b16 %v208
    %v1016 = vunpack.c.l.b16 %v209
    %v1017 = vunpack.c.h.b16 %v209
    %v1018 = vunpack.c.l.b16 %v210
    %v1019 = vunpack.c.h.b16 %v210
    %v1020 = vunpack.c.l.b16 %v211
    %v1021 = vunpack.c.h.b16 %v211
    %v1022 = vunpack.c.l.b16 %v212
    %v1023 = vunpack.c.h.b16 %v212
    %v1024 = vunpack.c.l.b16 %v213
    %v1025 = vunpack.c.h.b16 %v213
    %v1026 = vunpack.c.l.b16 %v214
    %v1027 = vunpack.c.l.b16 %v215
    %v1028 = vunpack.c.h.b16 %v215
    %v1029 = vunpack.c.l.b16 %v216
    %v1030 = vunpack.c.h.b16 %v216
    %v1031 = vunpack.c.l.b16 %v217
    %v1032 = vunpack.c.h.b16 %v217
    %v1033 = vunpack.c.l.b16 %v218
    %v1034 = vunpack.c.h.b16 %v218
    %v1035 = vunpack.c.l.b16 %v219
    %v1036 = vunpack.c.h.b16 %v219
    %v1037 = vunpack.c.l.b16 %v220
    %v1038 = vunpack.c.h.b16 %v220
    %v1039 = vunpack.c.l.b16 %v221
    %v1040 = vunpack.c.l.b16 %v222
    %v1041 = vunpack.c.h.b16 %v222
    %v1042 = vunpack.c.l.b16 %v223
    %v1043 = vunpack.c.h.b16 %v223
    %v1044 = vunpack.c.l.b16 %v224
    %v1045 = vunpack.c.h.b16 %v224
    %v1046 = vunpack.c.l.b16 %v225
    %v1047 = vunpack.c.h.b16 %v225
    %v1048 = vunpack.c.l.b16 %v226
    %v1049 = vunpack.c.h.b16 %v226
    %v1050 = vunpack.c.l.b16 %v227
    %v1051 = vunpack.c.h.b16 %v227
    %v1052 = vunpack.c.l.b16 %v228
    %v1053 = vunpack.c.l.b16 %v229
    %v1054 = vunpack.c.h.b16 %v229
    %v1055 = vunpack.c.l.b16 %v230
    %v1056 = vunpack.c.h.b16 %v230
    %v1057 = vunpack.c.l.b16 %v231
    %v1058 = vunpack.c.h.b16 %v231
    %v1059 = vunpack.c.l.b16 %v232
    %v1060 = vunpack.c.h.b16 %v232
    %v1061 = vunpack.c.l.b16 %v233
    %v1062 = vunpack.c.h.b16 %v233
    %v1063 = vunpack.c.l.b16 %v234
    %v1064 = vunpack.c.h.b16 %v234
    %v1065 = vunpack.c.l.b16 %v235
    %v1066 = vunpack.c.l.b16 %v236
    %v1067 = vunpack.c.h.b16 %v236
    %v1068 = vunpack.c.l.b16 %v237
    %v1069 = vunpack.c.h.b16 %v237
    %v1070 = vunpack.c.l.b16 %v238
    %v1071 = vunpack.c.h.b16 %v238
    %v1072 = vunpack.c.l.b16 %v239
    %v1073 = vunpack.c.h.b16 %v239
    %v1074 = vunpack.c.l.b16 %v240
    %v1075 = vunpack.c.h.b16 %v240
    %v1076 = vunpack.c.l.b16 %v241
    %v1077 = vunpack.c.h.b16 %v241
    %v1078 = vunpack.c.l.b16 %v242
    %v1079 = vunpack.c.l.b16 %v243
    %v1080 = vunpack.c.h.b16 %v243
    %v1081 = vunpack.c.l.b16 %v244
    %v1082 = vunpack.c.h.b16 %v244
    %v1083 = vunpack.c.l.b16 %v245
    %v1084 = vunpack.c.h.b16 %v245
    %v1085 = vunpack.c.l.b16 %v246
    %v1086 = vunpack.c.h.b16 %v246
    %v1087 = vunpack.c.l.b16 %v247
    %v1088 = vunpack.c.h.b16 %v247
    %v1089 = vunpack.c.l.b16 %v248
    %v1090 = vunpack.c.h.b16 %v248
    %v1091 = vunpack.c.l.b16 %v249
    %v1092 = vunpack.c.l.b16 %v250
    %v1093 = vunpack.c.h.b16 %v250
    %v1094 = vunpack.c.l.b16 %v251
    %v1095 = vunpack.c.h.b16 %v251
    %v1096 = vunpack.c.l.b16 %v252
    %v1097 = vunpack.c.h.b16 %v252
    %v1098 = vunpack.c.l.b16 %v253
    %v1099 = vunpack.c.h.b16 %v253
    %v1100 = vunpack.c.l.b16 %v254
    %v1101 = vunpack.c.h.b16 %v254
    %v1102 = vunpack.c.l.b16 %v255
    %v1103 = vunpack.c.h.b16 %v255
    %v1104 = vunpack.c.l.b16 %v256
    %v1105 = vpack.c.b16 %v702, %v689
    %v1106 = vpack.c.b16 %v703, %v690
    %v1107 = vpack.c.b16 %v704, %v691
    %v1108 = vpack.c.b16 %v705, %v692
    %v1109 = vpack.c.b16 %v706, %v693
    %v1110 = vpack.c.b16 %v707, %v694
    %v1111 = vpack.c.b16 %v708, %v695
    %v1112 = vpack.c.b16 %v709, %v696
    %v1113 = vpack.c.b16 %v710, %v697
    %v1114 = vpack.c.b16 %v711, %v698
    %v1115 = vpack.c.b16 %v712, %v699
    %v1116 = vpack.c.b16 %v713, %v700
    %v1117 = vpack.c.b16 %v714, %v701
    %v1118 = vpack.c.b16 %v728, %v715
    %v1119 = vpack.c.b16 %v729, %v716
    %v1120 = vpack.c.b16 %v730, %v717
    %v1121 = vpack.c.b16 %v731, %v718
    %v1122 = vpack.c.b16 %v732, %v719
    %v1123 = vpack.c.b16 %v733, %v720
    %v1124 = vpack.c.b16 %v734, %v721
    %v1125 = vpack.c.b16 %v735, %v722
    %v1126 = vpack.c.b16 %v736, %v723
    %v1127 = vpack.c.b16 %v737, %v724
    %v1128 = vpack.c.b16 %v738, %v725
    %v1129 = vpack.c.b16 %v739, %v726
    %v1130 = vpack.c.b16 %v740, %v727
    %v1131 = vpack.c.b16 %v754, %v741
    %v1132 = vpack.c.b16 %v755, %v742
    %v1133 = vpack.c.b16 %v756, %v743
    %v1134 = vpack.c.b16 %v757, %v744
    %v1135 = vpack.c.b16 %v758, %v745
    %v1136 = vpack.c.b16 %v759, %v746
    %v1137 = vpack.c.b16 %v760, %v747
    %v1138 = vpack.c.b16 %v761, %v748
    %v1139 = vpack.c.b16 %v762, %v749
    %v1140 = vpack.c.b16 %v763, %v750
    %v1141 = vpack.c.b16 %v764, %v751
    %v1142 = vpack.c.b16 %v765, %v752
    %v1143 = vpack.c.b16 %v766, %v753
    %v1144 = vpack.c.b16 %v780, %v767
    %v1145 = vpack.c.b16 %v781, %v768
    %v1146 = vpack.c.b16 %v782, %v769
    %v1147 = vpack.c.b16 %v783, %v770
    %v1148 = vpack.c.b16 %v784, %v771
    %v1149 = vpack.c.b16 %v785, %v772
    %v1150 = vpack.c.b16 %v786, %v773
    %v1151 = vpack.c.b16 %v787, %v774
    %v1152 = vpack.c.b16 %v788, %v775
    %v1153 = vpack.c.b16 %v789, %v776
    %v1154 = vpack.c.b16 %v790, %v777
    %v1155 = vpack.c.b16 %v791, %v778
    %v1156 = vpack.c.b16 %v792, %v779
    %v1157 = vpack.c.b16 %v806, %v793
    %v1158 = vpack.c.b16 %v807, %v794
    %v1159 = vpack.c.b16 %v808, %v795
    %v1160 = vpack.c.b16 %v809, %v796
    %v1161 = vpack.c.b16 %v810, %v797
    %v1162 = vpack.c.b16 %v811, %v798
    %v1163 = vpack.c.b16 %v812, %v799
    %v1164 = vpack.c.b16 %v813, %v800
    %v1165 = vpack.c.b16 %v814, %v801
    %v1166 = vpack.c.b16 %v815, %v802
    %v1167 = vpack.c.b16 %v816, %v803
    %v1168 = vpack.c.b16 %v817, %v804
    %v1169 = vpack.c.b16 %v818, %v805
    %v1170 = vpack.c.b16 %v832, %v819
    %v1171 = vpack.c.b16 %v833, %v820
    %v1172 = vpack.c.b16 %v834, %v821
    %v1173 = vpack.c.b16 %v835, %v822
    %v1174 = vpack.c.b16 %v836, %v823
    %v1175 = vpack.c.b16 %v837, %v824
    %v1176 = vpack.c.b16 %v838, %v825
    %v1177 = vpack.c.b16 %v839, %v826
    %v1178 = vpack.c.b16 %v840, %v827
    %v1179 = vpack.c.b16 %v841, %v828
    %v1180 = vpack.c.b16 %v842, %v829
    %v1181 = vpack.c.b16 %v843, %v830
    %v1182 = vpack.c.b16 %v844, %v831
    %v1183 = vpack.c.b16 %v858, %v845
    %v1184 = vpack.c.b16 %v859, %v846
    %v1185 = vpack.c.b16 %v860, %v847
    %v1186 = vpack.c.b16 %v861, %v848
    %v1187 = vpack.c.b16 %v862, %v849
    %v1188 = vpack.c.b16 %v863, %v850
    %v1189 = vpack.c.b16 %v864, %v851
    %v1190 = vpack.c.b16 %v865, %v852
    %v1191 = vpack.c.b16 %v866, %v853
    %v1192 = vpack.c.b16 %v867, %v854
    %v1193 = vpack.c.b16 %v868, %v855
    %v1194 = vpack.c.b16 %v869, %v856
    %v1195 = vpack.c.b16 %v870, %v857
    %v1196 = vpack.c.b16 %v884, %v871
    %v1197 = vpack.c.b16 %v885, %v872
    %v1198 = vpack.c.b16 %v886, %v873
    %v1199 = vpack.c.b16 %v887, %v874
    %v1200 = vpack.c.b16 %v888, %v875
    %v1201 = vpack.c.b16 %v889, %v876
    %v1202 = vpack.c.b16 %v890, %v877
    %v1203 = vpack.c.b16 %v891, %v878
    %v1204 = vpack.c.b16 %v892, %v879
    %v1205 = vpack.c.b16 %v893, %v880
    %v1206 = vpack.c.b16 %v894, %v881
    %v1207 = vpack.c.b16 %v895, %v882
    %v1208 = vpack.c.b16 %v896, %v883
    %v1209 = vpack.c.b16 %v910, %v897
    %v1210 = vpack.c.b16 %v911, %v898
    %v1211 = vpack.c.b16 %v912, %v899
    %v1212 = vpack.c.b16 %v913, %v900
    %v1213 = vpack.c.b16 %v914, %v901
    %v1214 = vpack.c.b16 %v915, %v902
    %v1215 = vpack.c.b16 %v916, %v903
    %v1216 = vpack.c.b16 %v917, %v904
    %v1217 = vpack.c.b16 %v918, %v905
    %v1218 = vpack.c.b16 %v919, %v906
    %v1219 = vpack.c.b16 %v920, %v907
    %v1220 = vpack.c.b16 %v921, %v908
    %v1221 = vpack.c.b16 %v922, %v909
    %v1222 = vpack.c.b16 %v936, %v923
    %v1223 = vpack.c.b16 %v937, %v924
    %v1224 = vpack.c.b16 %v938, %v925
    %v1225 = vpack.c.b16 %v939, %v926
    %v1226 = vpack.c.b16 %v940, %v927
    %v1227 = vpack.c.b16 %v941, %v928
    %v1228 = vpack.c.b16 %v942, %v929
    %v1229 = vpack.c.b16 %v943, %v930
    %v1230 = vpack.c.b16 %v944, %v931
    %v1231 = vpack.c.b16 %v945, %v932
    %v1232 = vpack.c.b16 %v946, %v933
    %v1233 = vpack.c.b16 %v947, %v934
    %v1234 = vpack.c.b16 %v948, %v935
    %v1235 = vpack.c.b16 %v962, %v949
    %v1236 = vpack.c.b16 %v963, %v950
    %v1237 = vpack.c.b16 %v964, %v951
    %v1238 = vpack.c.b16 %v965, %v952
    %v1239 = vpack.c.b16 %v966, %v953
    %v1240 = vpack.c.b16 %v967, %v954
    %v1241 = vpack.c.b16 %v968, %v955
    %v1242 = vpack.c.b16 %v969, %v956
    %v1243 = vpack.c.b16 %v970, %v957
    %v1244 = vpack.c.b16 %v971, %v958
    %v1245 = vpack.c.b16 %v972, %v959
    %v1246 = vpack.c.b16 %v973, %v960
    %v1247 = vpack.c.b16 %v974, %v961
    %v1248 = vpack.c.b16 %v988, %v975
    %v1249 = vpack.c.b16 %v989, %v976
    %v1250 = vpack.c.b16 %v990, %v977
    %v1251 = vpack.c.b16 %v991, %v978
    %v1252 = vpack.c.b16 %v992, %v979
    %v1253 = vpack.c.b16 %v993, %v980
    %v1254 = vpack.c.b16 %v994, %v981
    %v1255 = vpack.c.b16 %v995, %v982
    %v1256 = vpack.c.b16 %v996, %v983
    %v1257 = vpack.c.b16 %v997, %v984
    %v1258 = vpack.c.b16 %v998, %v985
    %v1259 = vpack.c.b16 %v999, %v986
    %v1260 = vpack.c.b16 %v1000, %v987
    %v1261 = vpack.c.b16 %v1014, %v1001
    %v1262 = vpack.c.b16 %v1015, %v1002
    %v1263 = vpack.c.b16 %v1016, %v1003
    %v1264 = vpack.c.b16 %v1017, %v1004
    %v1265 = vpack.c.b16 %v1018, %v1005
    %v1266 = vpack.c.b16 %v1019, %v1006
    %v1267 = vpack.c.b16 %v1020, %v1007
    %v1268 = vpack.c.b16 %v1021, %v1008
    %v1269 = vpack.c.b16 %v1022, %v1009
    %v1270 = vpack.c.b16 %v1023, %v1010
    %v1271 = vpack.c.b16 %v1024, %v1011
    %v1272 = vpack.c.b16 %v1025, %v1012
    %v1273 = vpack.c.b16 %v1026, %v1013
    %v1274 = vpack.c.b16 %v1040, %v1027
    %v1275 = vpack.c.b16 %v1041, %v1028
    %v1276 = vpack.c.b16 %v1042, %v1029
    %v1277 = vpack.c.b16 %v1043, %v1030
    %v1278 = vpack.c.b16 %v1044, %v1031
    %v1279 = vpack.c.b16 %v1045, %v1032
    %v1280 = vpack.c.b16 %v1046, %v1033
    %v1281 = vpack.c.b16 %v1047, %v1034
    %v1282 = vpack.c.b16 %v1048, %v1035
    %v1283 = vpack.c.b16 %v1049, %v1036
    %v1284 = vpack.c.b16 %v1050, %v1037
    %v1285 = vpack.c.b16 %v1051, %v1038
    %v1286 = vpack.c.b16 %v1052, %v1039
    %v1287 = vpack.c.b16 %v1066, %v1053
    %v1288 = vpack.c.b16 %v1067, %v1054
    %v1289 = vpack.c.b16 %v1068, %v1055
    %v1290 = vpack.c.b16 %v1069, %v1056
    %v1291 = vpack.c.b16 %v1070, %v1057
    %v1292 = vpack.c.b16 %v1071, %v1058
    %v1293 = vpack.c.b16 %v1072, %v1059
    %v1294 = vpack.c.b16 %v1073, %v1060
    %v1295 = vpack.c.b16 %v1074, %v1061
    %v1296 = vpack.c.b16 %v1075, %v1062
    %v1297 = vpack.c.b16 %v1076, %v1063
    %v1298 = vpack.c.b16 %v1077, %v1064
    %v1299 = vpack.c.b16 %v1078, %v1065
    %v1300 = vpack.c.b16 %v1092, %v1079
    %v1301 = vpack.c.b16 %v1093, %v1080
    %v1302 = vpack.c.b16 %v1094, %v1081
    %v1303 = vpack.c.b16 %v1095, %v1082
    %v1304 = vpack.c.b16 %v1096, %v1083
    %v1305 = vpack.c.b16 %v1097, %v1084
    %v1306 = vpack.c.b16 %v1098, %v1085
    %v1307 = vpack.c.b16 %v1099, %v1086
    %v1308 = vpack.c.b16 %v1100, %v1087
    %v1309 = vpack.c.b16 %v1101, %v1088
    %v1310 = vpack.c.b16 %v1102, %v1089
    %v1311 = vpack.c.b16 %v1103, %v1090
    %v1312 = vpack.c.b16 %v1104, %v1091
    %v1729 = vunpack.c.l.b16 %v257
    %v1730 = vunpack.c.l.b16 %v258
    %v1731 = vunpack.c.l.b16 %v259
    %v1732 = vunpack.c.l.b16 %v260
    %v1733 = vunpack.c.l.b16 %v261
    %v1734 = vunpack.c.l.b16 %v262
    %v1735 = vunpack.c.l.b16 %v263
    %v1736 = vunpack.c.l.b16 %v264
    %v1737 = vunpack.c.l.b16 %v265
    %v1738 = vunpack.c.l.b16 %v266
    %v1739 = vunpack.c.l.b16 %v267
    %v1740 = vunpack.c.l.b16 %v268
    %v1741 = vunpack.c.l.b16 %v269
    %v1742 = vunpack.c.l.b16 %v270
    %v1743 = vunpack.c.l.b16 %v271
    %v1744 = vunpack.c.l.b16 %v272
    %v1745 = vunpack.c.l.b16 %v273
    %v1746 = vunpack.c.l.b16 %v274
    %v1747 = vunpack.c.l.b16 %v275
    %v1748 = vunpack.c.l.b16 %v276
    %v1749 = vunpack.c.l.b16 %v277
    %v1750 = vunpack.c.l.b16 %v278
    %v1751 = vunpack.c.l.b16 %v279
    %v1752 = vunpack.c.l.b16 %v280
    %v1753 = vunpack.c.l.b16 %v281
    %v1754 = vunpack.c.l.b16 %v282
    %v1755 = vunpack.c.l.b16 %v283
    %v1756 = vunpack.c.l.b16 %v284
    %v1757 = vunpack.c.l.b16 %v285
    %v1758 = vunpack.c.l.b16 %v286
    %v1759 = vunpack.c.l.b16 %v287
    %v1760 = vunpack.c.l.b16 %v288
    %v1761 = vunpack.c.l.b16 %v289
    %v1762 = vunpack.c.l.b16 %v290
    %v1763 = vunpack.c.l.b16 %v291
    %v1764 = vunpack.c.l.b16 %v292
    %v1765 = vunpack.c.l.b16 %v293
    %v1766 = vunpack.c.l.b16 %v294
    %v1767 = vunpack.c.l.b16 %v295
    %v1768 = vunpack.c.l.b16 %v296
    %v1769 = vunpack.c.l.b16 %v297
    %v1770 = vunpack.c.l.b16 %v298
    %v1771 = vunpack.c.l.b16 %v299
    %v1772 = vunpack.c.l.b16 %v300
    %v1773 = vunpack.c.l.b16 %v301
    %v1774 = vunpack.c.l.b16 %v302
    %v1775 = vunpack.c.l.b16 %v303
    %v1776 = vunpack.c.l.b16 %v304
    %v1777 = vunpack.c.l.b16 %v305
    %v1778 = vunpack.c.l.b16 %v306
    %v1779 = vunpack.c.l.b16 %v307
    %v1780 = vunpack.c.l.b16 %v308
    %v1781 = vunpack.c.l.b16 %v309
    %v1782 = vunpack.c.l.b16 %v310
    %v1783 = vunpack.c.l.b16 %v311
    %v1784 = vunpack.c.l.b16 %v312
    %v1785 = vunpack.c.l.b16 %v313
    %v1786 = vunpack.c.l.b16 %v314
    %v1787 = vunpack.c.l.b16 %v315
    %v1788 = vunpack.c.l.b16 %v316
    %v1789 = vunpack.c.l.b16 %v317
    %v1790 = vunpack.c.l.b16 %v318
    %v1791 = vunpack.c.l.b16 %v319
    %v1792 = vunpack.c.l.b16 %v320
    %v1793 = vunpack.c.l.b16 %v321
    %v1794 = vunpack.c.l.b16 %v322
    %v1795 = vunpack.c.l.b16 %v323
    %v1796 = vunpack.c.l.b16 %v324
    %v1797 = vunpack.c.l.b16 %v325
    %v1798 = vunpack.c.l.b16 %v326
    %v1799 = vunpack.c.l.b16 %v327
    %v1800 = vunpack.c.l.b16 %v328
    %v1801 = vunpack.c.l.b16 %v329
    %v1802 = vunpack.c.l.b16 %v330
    %v1803 = vunpack.c.l.b16 %v331
    %v1804 = vunpack.c.l.b16 %v332
    %v1805 = vunpack.c.l.b16 %v333
    %v1806 = vunpack.c.l.b16 %v334
    %v1807 = vunpack.c.l.b16 %v335
    %v1808 = vunpack.c.l.b16 %v336
    %v1809 = vunpack.c.l.b16 %v337
    %v1810 = vunpack.c.l.b16 %v338
    %v1811 = vunpack.c.l.b16 %v339
    %v1812 = vunpack.c.l.b16 %v340
    %v1813 = vunpack.c.l.b16 %v341
    %v1814 = vunpack.c.l.b16 %v342
    %v1815 = vunpack.c.l.b16 %v343
    %v1816 = vunpack.c.l.b16 %v344
    %v1817 = vunpack.c.l.b16 %v345
    %v1818 = vunpack.c.l.b16 %v346
    %v1819 = vunpack.c.l.b16 %v347
    %v1820 = vunpack.c.l.b16 %v348
    %v1821 = vunpack.c.l.b16 %v349
    %v1822 = vunpack.c.l.b16 %v350
    %v1823 = vunpack.c.l.b16 %v351
    %v1824 = vunpack.c.l.b16 %v352
    %v1825 = vunpack.c.l.b16 %v353
    %v1826 = vunpack.c.l.b16 %v354
    %v1827 = vunpack.c.l.b16 %v355
    %v1828 = vunpack.c.l.b16 %v356
    %v1829 = vunpack.c.l.b16 %v357
    %v1830 = vunpack.c.l.b16 %v358
    %v1831 = vunpack.c.l.b16 %v359
    %v1832 = vunpack.c.l.b16 %v360
    %v1833 = vunpack.c.l.b16 %v361
    %v1834 = vunpack.c.l.b16 %v362
    %v1835 = vunpack.c.l.b16 %v363
    %v1836 = vunpack.c.l.b16 %v364
    %v1837 = vunpack.c.l.b16 %v365
    %v1838 = vunpack.c.l.b16 %v366
    %v1839 = vunpack.c.l.b16 %v367
    %v1840 = vunpack.c.l.b16 %v368
    %v1841 = vunpack.c.l.b16 %v369
    %v1842 = vunpack.c.l.b16 %v370
    %v1843 = vunpack.c.l.b16 %v371
    %v1844 = vunpack.c.l.b16 %v372
    %v1845 = vunpack.c.l.b16 %v373
    %v1846 = vunpack.c.l.b16 %v374
    %v1847 = vunpack.c.l.b16 %v375
    %v1848 = vunpack.c.l.b16 %v376
    %v1849 = vunpack.c.l.b16 %v377
    %v1850 = vunpack.c.l.b16 %v378
    %v1851 = vunpack.c.l.b16 %v379
    %v1852 = vunpack.c.l.b16 %v380
    %v1853 = vunpack.c.l.b16 %v381
    %v1854 = vunpack.c.l.b16 %v382
    %v1855 = vunpack.c.l.b16 %v383
    %v1856 = vunpack.c.l.b16 %v384
    %v1857 = vunpack.c.l.b16 %v385
    %v1858 = vunpack.c.l.b16 %v386
    %v1859 = vunpack.c.l.b16 %v387
    %v1860 = vunpack.c.l.b16 %v388
    %v1861 = vunpack.c.l.b16 %v389
    %v1862 = vunpack.c.l.b16 %v390
    %v1863 = vunpack.c.l.b16 %v391
    %v1864 = vunpack.c.l.b16 %v392
    %v1865 = vunpack.c.l.b16 %v393
    %v1866 = vunpack.c.l.b16 %v394
    %v1867 = vunpack.c.l.b16 %v395
    %v1868 = vunpack.c.l.b16 %v396
    %v1869 = vunpack.c.l.b16 %v397
    %v1870 = vunpack.c.l.b16 %v398
    %v1871 = vunpack.c.l.b16 %v399
    %v1872 = vunpack.c.l.b16 %v400
    %v1873 = vunpack.c.l.b16 %v401
    %v1874 = vunpack.c.l.b16 %v402
    %v1875 = vunpack.c.l.b16 %v403
    %v1876 = vunpack.c.l.b16 %v404
    %v1877 = vunpack.c.l.b16 %v405
    %v1878 = vunpack.c.l.b16 %v406
    %v1879 = vunpack.c.l.b16 %v407
    %v1880 = vunpack.c.l.b16 %v408
    %v1881 = vunpack.c.l.b16 %v409
    %v1882 = vunpack.c.l.b16 %v410
    %v1883 = vunpack.c.l.b16 %v411
    %v1884 = vunpack.c.l.b16 %v412
    %v1885 = vunpack.c.l.b16 %v413
    %v1886 = vunpack.c.l.b16 %v414
    %v1887 = vunpack.c.l.b16 %v415
    %v1888 = vunpack.c.l.b16 %v416
    %v1889 = vunpack.c.l.b16 %v417
    %v1890 = vunpack.c.l.b16 %v418
    %v1891 = vunpack.c.l.b16 %v419
    %v1892 = vunpack.c.l.b16 %v420
    %v1893 = vunpack.c.l.b16 %v421
    %v1894 = vunpack.c.l.b16 %v422
    %v1895 = vunpack.c.l.b16 %v423
    %v1896 = vunpack.c.l.b16 %v424
    %v1897 = vunpack.c.l.b16 %v425
    %v1898 = vunpack.c.l.b16 %v426
    %v1899 = vunpack.c.l.b16 %v427
    %v1900 = vunpack.c.l.b16 %v428
    %v1901 = vunpack.c.l.b16 %v429
    %v1902 = vunpack.c.l.b16 %v430
    %v1903 = vunpack.c.l.b16 %v431
    %v1904 = vunpack.c.l.b16 %v432
    %v1905 = vunpack.c.l.b16 %v433
    %v1906 = vunpack.c.l.b16 %v434
    %v1907 = vunpack.c.l.b16 %v435
    %v1908 = vunpack.c.l.b16 %v436
    %v1909 = vunpack.c.l.b16 %v437
    %v1910 = vunpack.c.l.b16 %v438
    %v1911 = vunpack.c.l.b16 %v439
    %v1912 = vunpack.c.l.b16 %v440
    %v1913 = vunpack.c.l.b16 %v441
    %v1914 = vunpack.c.l.b16 %v442
    %v1915 = vunpack.c.l.b16 %v443
    %v1916 = vunpack.c.l.b16 %v444
    %v1917 = vunpack.c.l.b16 %v445
    %v1918 = vunpack.c.l.b16 %v446
    %v1919 = vunpack.c.l.b16 %v447
    %v1920 = vunpack.c.l.b16 %v448
    %v1921 = vunpack.c.l.b16 %v449
    %v1922 = vunpack.c.l.b16 %v450
    %v1923 = vunpack.c.l.b16 %v451
    %v1924 = vunpack.c.l.b16 %v452
    %v1925 = vunpack.c.l.b16 %v453
    %v1926 = vunpack.c.l.b16 %v454
    %v1927 = vunpack.c.l.b16 %v455
    %v1928 = vunpack.c.l.b16 %v456
    %v1929 = vunpack.c.l.b16 %v457
    %v1930 = vunpack.c.l.b16 %v458
    %v1931 = vunpack.c.l.b16 %v459
    %v1932 = vunpack.c.l.b16 %v460
    %v1933 = vunpack.c.l.b16 %v461
    %v1934 = vunpack.c.l.b16 %v462
    %v1935 = vunpack.c.l.b16 %v463
    %v1936 = vunpack.c.l.b16 %v464
    %v1937 = vpack.c.b16 %v1730, %v1729
    %v1938 = vpack.c.b16 %v1732, %v1731
    %v1939 = vpack.c.b16 %v1734, %v1733
    %v1940 = vpack.c.b16 %v1736, %v1735
    %v1941 = vpack.c.b16 %v1738, %v1737
    %v1942 = vpack.c.b16 %v1740, %v1739
    %v1943 = vpack.c.b16 %v1742, %v1741
    %v1944 = vpack.c.b16 %v1744, %v1743
    %v1945 = vpack.c.b16 %v1746, %v1745
    %v1946 = vpack.c.b16 %v1748, %v1747
    %v1947 = vpack.c.b16 %v1750, %v1749
    %v1948 = vpack.c.b16 %v1752, %v1751
    %v1949 = vpack.c.b16 %v1754, %v1753
    %v1950 = vpack.c.b16 %v1756, %v1755
    %v1951 = vpack.c.b16 %v1758, %v1757
    %v1952 = vpack.c.b16 %v1760, %v1759
    %v1953 = vpack.c.b16 %v1762, %v1761
    %v1954 = vpack.c.b16 %v1764, %v1763
    %v1955 = vpack.c.b16 %v1766, %v1765
    %v1956 = vpack.c.b16 %v1768, %v1767
    %v1957 = vpack.c.b16 %v1770, %v1769
    %v1958 = vpack.c.b16 %v1772, %v1771
    %v1959 = vpack.c.b16 %v1774, %v1773
    %v1960 = vpack.c.b16 %v1776, %v1775
    %v1961 = vpack.c.b16 %v1778, %v1777
    %v1962 = vpack.c.b16 %v1780, %v1779
    %v1963 = vpack.c.b16 %v1782, %v1781
    %v1964 = vpack.c.b16 %v1784, %v1783
    %v1965 = vpack.c.b16 %v1786, %v1785
    %v1966 = vpack.c.b16 %v1788, %v1787
    %v1967 = vpack.c.b16 %v1790, %v1789
    %v1968 = vpack.c.b16 %v1792, %v1791
    %v1969 = vpack.c.b16 %v1794, %v1793
    %v1970 = vpack.c.b16 %v1796, %v1795
    %v1971 = vpack.c.b16 %v1798, %v1797
    %v1972 = vpack.c.b16 %v1800, %v1799
    %v1973 = vpack.c.b16 %v1802, %v1801
    %v1974 = vpack.c.b16 %v1804, %v1803
    %v1975 = vpack.c.b16 %v1806, %v1805
    %v1976 = vpack.c.b16 %v1808, %v1807
    %v1977 = vpack.c.b16 %v1810, %v1809
    %v1978 = vpack.c.b16 %v1812, %v1811
    %v1979 = vpack.c.b16 %v1814, %v1813
    %v1980 = vpack.c.b16 %v1816, %v1815
    %v1981 = vpack.c.b16 %v1818, %v1817
    %v1982 = vpack.c.b16 %v1820, %v1819
    %v1983 = vpack.c.b16 %v1822, %v1821
    %v1984 = vpack.c.b16 %v1824, %v1823
    %v1985 = vpack.c.b16 %v1826, %v1825
    %v1986 = vpack.c.b16 %v1828, %v1827
    %v1987 = vpack.c.b16 %v1830, %v1829
    %v1988 = vpack.c.b16 %v1832, %v1831
    %v1989 = vpack.c.b16 %v1834, %v1833
    %v1990 = vpack.c.b16 %v1836, %v1835
    %v1991 = vpack.c.b16 %v1838, %v1837
    %v1992 = vpack.c.b16 %v1840, %v1839
    %v1993 = vpack.c.b16 %v1842, %v1841
    %v1994 = vpack.c.b16 %v1844, %v1843
    %v1995 = vpack.c.b16 %v1846, %v1845
    %v1996 = vpack.c.b16 %v1848, %v1847
    %v1997 = vpack.c.b16 %v1850, %v1849
    %v1998 = vpack.c.b16 %v1852, %v1851
    %v1999 = vpack.c.b16 %v1854, %v1853
    %v2000 = vpack.c.b16 %v1856, %v1855
    %v2001 = vpack.c.b16 %v1858, %v1857
    %v2002 = vpack.c.b16 %v1860, %v1859
    %v2003 = vpack.c.b16 %v1862, %v1861
    %v2004 = vpack.c.b16 %v1864, %v1863
    %v2005 = vpack.c.b16 %v1866, %v1865
    %v2006 = vpack.c.b16 %v1868, %v1867
    %v2007 = vpack.c.b16 %v1870, %v1869
    %v2008 = vpack.c.b16 %v1872, %v1871
    %v2009 = vpack.c.b16 %v1874, %v1873
    %v2010 = vpack.c.b16 %v1876, %v1875
    %v2011 = vpack.c.b16 %v1878, %v1877
    %v2012 = vpack.c.b16 %v1880, %v1879
    %v2013 = vpack.c.b16 %v1882, %v1881
    %v2014 = vpack.c.b16 %v1884, %v1883
    %v2015 = vpack.c.b16 %v1886, %v1885
    %v2016 = vpack.c.b16 %v1888, %v1887
    %v2017 = vpack.c.b16 %v1890, %v1889
    %v2018 = vpack.c.b16 %v1892, %v1891
    %v2019 = vpack.c.b16 %v1894, %v1893
    %v2020 = vpack.c.b16 %v1896, %v1895
    %v2021 = vpack.c.b16 %v1898, %v1897
    %v2022 = vpack.c.b16 %v1900, %v1899
    %v2023 = vpack.c.b16 %v1902, %v1901
    %v2024 = vpack.c.b16 %v1904, %v1903
    %v2025 = vpack.c.b16 %v1906, %v1905
    %v2026 = vpack.c.b16 %v1908, %v1907
    %v2027 = vpack.c.b16 %v1910, %v1909
    %v2028 = vpack.c.b16 %v1912, %v1911
    %v2029 = vpack.c.b16 %v1914, %v1913
    %v2030 = vpack.c.b16 %v1916, %v1915
    %v2031 = vpack.c.b16 %v1918, %v1917
    %v2032 = vpack.c.b16 %v1920, %v1919
    %v2033 = vpack.c.b16 %v1922, %v1921
    %v2034 = vpack.c.b16 %v1924, %v1923
    %v2035 = vpack.c.b16 %v1926, %v1925
    %v2036 = vpack.c.b16 %v1928, %v1927
    %v2037 = vpack.c.b16 %v1930, %v1929
    %v2038 = vpack.c.b16 %v1932, %v1931
    %v2039 = vpack.c.b16 %v1934, %v1933
    %v2040 = vpack.c.b16 %v1936, %v1935
    %2145 = vmatprep.subr.bf16.mxu0 0
    %2146 = vmatpush1.bf16.msra.mxu0 %v1937
    %2147 = vmatprep.subr.bf16.mxu0 0
    %2148 = vmatpush1.bf16.msra.mxu0 %v1938
    %2149 = vmatprep.subr.bf16.mxu0 0
    %2150 = vmatpush1.bf16.msra.mxu0 %v1939
    %2151 = vmatprep.subr.bf16.mxu0 0
    %2152 = vmatpush1.bf16.msra.mxu0 %v1940
    %2153 = vmatprep.subr.bf16.mxu0 0
    %2154 = vmatpush1.bf16.msra.mxu0 %v1941
    %2155 = vmatprep.subr.bf16.mxu0 0
    %2156 = vmatpush1.bf16.msra.mxu0 %v1942
    %2157 = vmatprep.subr.bf16.mxu0 0
    %2158 = vmatpush1.bf16.msra.mxu0 %v1943
    %2159 = vmatprep.subr.bf16.mxu0 0
    %2160 = vmatpush1.bf16.msra.mxu0 %v1944
    %2161 = vmatprep.subr.bf16.mxu0 0
    %2162 = vmatpush1.bf16.msra.mxu0 %v1945
    %2163 = vmatprep.subr.bf16.mxu0 0
    %2164 = vmatpush1.bf16.msra.mxu0 %v1946
    %2165 = vmatprep.subr.bf16.mxu0 0
    %2166 = vmatpush1.bf16.msra.mxu0 %v1947
    %2167 = vmatprep.subr.bf16.mxu0 0
    %2168 = vmatpush1.bf16.msra.mxu0 %v1948
    %2169 = vmatprep.subr.bf16.mxu0 0
    %2170 = vmatpush1.bf16.msra.mxu0 %v1949
    %2171 = vmatprep.subr.bf16.mxu0 0
    %2172 = vmatpush1.bf16.msra.mxu0 %v1950
    %2173 = vmatprep.subr.bf16.mxu0 0
    %2174 = vmatpush1.bf16.msra.mxu0 %v1951
    %2175 = vmatprep.subr.bf16.mxu0 0
    %2176 = vmatpush1.bf16.msra.mxu0 %v1952
    %2177 = vmatprep.mubr.bf16.mxu0 %v1106
    %2178 = vmatmul.mubr.bf16.gmra.mrb[0].mxu0 %v1105
    %v2179 = vpop.f32.mrb[0].mxu0
    %v2180 = vadd.f32 0.0, %v2179
    %v2181 = vpop.f32.mrb[0].mxu0
    %v2182 = vpop.f32.mrb[0].mxu0
    %v2183 = vadd.f32 0.0, %v2182
    %v2184 = vpop.f32.mrb[0].mxu0
    %2185 = vmatprep.mubr.bf16.mxu0 %v1119
    %2186 = vmatmul.mubr.bf16.gmra.mrb[0].mxu0 %v1118
    %v2187 = vpop.f32.mrb[0].mxu0
    %v2188 = vadd.f32 0.0, %v2187
    %v2189 = vpop.f32.mrb[0].mxu0
    %v2190 = vpop.f32.mrb[0].mxu0
    %v2191 = vadd.f32 0.0, %v2190
    %v2192 = vpop.f32.mrb[0].mxu0
    %2193 = vmatprep.mubr.bf16.mxu0 %v1132
    %2194 = vmatmul.mubr.bf16.gmra.mrb[0].mxu0 %v1131
    %v2195 = vpop.f32.mrb[0].mxu0
    %v2196 = vadd.f32 0.0, %v2195
    %v2197 = vpop.f32.mrb[0].mxu0
    %v2198 = vpop.f32.mrb[0].mxu0
    %v2199 = vadd.f32 0.0, %v2198
    %v2200 = vpop.f32.mrb[0].mxu0
    %2201 = vmatprep.mubr.bf16.mxu0 %v1145
    %2202 = vmatmul.mubr.bf16.gmra.mrb[0].mxu0 %v1144
    %v2203 = vpop.f32.mrb[0].mxu0
    %v2204 = vadd.f32 0.0, %v2203
    %v2205 = vpop.f32.mrb[0].mxu0
    %v2206 = vpop.f32.mrb[0].mxu0
    %v2207 = vadd.f32 0.0, %v2206
    %v2208 = vpop.f32.mrb[0].mxu0
    %2209 = vmatprep.mubr.bf16.mxu0 %v1158
    %2210 = vmatmul.mubr.bf16.gmra.mrb[0].mxu0 %v1157
    %v2211 = vpop.f32.mrb[0].mxu0
    %v2212 = vadd.f32 0.0, %v2211
    %v2213 = vpop.f32.mrb[0].mxu0
    %v2214 = vpop.f32.mrb[0].mxu0
    %v2215 = vadd.f32 0.0, %v2214
    %v2216 = vpop.f32.mrb[0].mxu0
    %2217 = vmatprep.mubr.bf16.mxu0 %v1171
    %2218 = vmatmul.mubr.bf16.gmra.mrb[0].mxu0 %v1170
    %v2219 = vpop.f32.mrb[0].mxu0
    %v2220 = vadd.f32 0.0, %v2219
    %v2221 = vpop.f32.mrb[0].mxu0
    %v2222 = vpop.f32.mrb[0].mxu0
    %v2223 = vadd.f32 0.0, %v2222
    %v2224 = vpop.f32.mrb[0].mxu0
    %2225 = vmatprep.mubr.bf16.mxu0 %v1184
    %2226 = vmatmul.mubr.bf16.gmra.mrb[0].mxu0 %v1183
    %v2227 = vpop.f32.mrb[0].mxu0
    %v2228 = vadd.f32 0.0, %v2227
    %v2229 = vpop.f32.mrb[0].mxu0
    %v2230 = vpop.f32.mrb[0].mxu0
    %v2231 = vadd.f32 0.0, %v2230
    %v2232 = vpop.f32.mrb[0].mxu0
    %2233 = vmatprep.mubr.bf16.mxu0 %v1197
    %2234 = vmatmul.mubr.bf16.gmra.mrb[0].mxu0 %v1196
    %v2235 = vpop.f32.mrb[0].mxu0
    %v2236 = vadd.f32 0.0, %v2235
    %v2237 = vpop.f32.mrb[0].mxu0
    %v2238 = vpop.f32.mrb[0].mxu0
    %v2239 = vadd.f32 0.0, %v2238
    %v2240 = vpop.f32.mrb[0].mxu0
    %2241 = vmatprep.mubr.bf16.mxu0 %v1210
    %2242 = vmatmul.mubr.bf16.gmra.mrb[0].mxu0 %v1209
    %v2243 = vpop.f32.mrb[0].mxu0
    %v2244 = vadd.f32 0.0, %v2243
    %v2245 = vpop.f32.mrb[0].mxu0
    %v2246 = vpop.f32.mrb[0].mxu0
    %v2247 = vadd.f32 0.0, %v2246
    %v2248 = vpop.f32.mrb[0].mxu0
    %2249 = vmatprep.mubr.bf16.mxu0 %v1223
    %2250 = vmatmul.mubr.bf16.gmra.mrb[0].mxu0 %v1222
    %v2251 = vpop.f32.mrb[0].mxu0
    %v2252 = vadd.f32 0.0, %v2251
    %v2253 = vpop.f32.mrb[0].mxu0
    %v2254 = vpop.f32.mrb[0].mxu0
    %v2255 = vadd.f32 0.0, %v2254
    %v2256 = vpop.f32.mrb[0].mxu0
    %2257 = vmatprep.mubr.bf16.mxu0 %v1236
    %2258 = vmatmul.mubr.bf16.gmra.mrb[0].mxu0 %v1235
    %v2259 = vpop.f32.mrb[0].mxu0
    %v2260 = vadd.f32 0.0, %v2259
    %v2261 = vpop.f32.mrb[0].mxu0
    %v2262 = vpop.f32.mrb[0].mxu0
    %v2263 = vadd.f32 0.0, %v2262
    %v2264 = vpop.f32.mrb[0].mxu0
    %2265 = vmatprep.mubr.bf16.mxu0 %v1249
    %2266 = vmatmul.mubr.bf16.gmra.mrb[0].mxu0 %v1248
    %v2267 = vpop.f32.mrb[0].mxu0
    %v2268 = vadd.f32 0.0, %v2267
    %v2269 = vpop.f32.mrb[0].mxu0
    %v2270 = vpop.f32.mrb[0].mxu0
    %v2271 = vadd.f32 0.0, %v2270
    %v2272 = vpop.f32.mrb[0].mxu0
    %2273 = vmatprep.mubr.bf16.mxu0 %v1262
    %2274 = vmatmul.mubr.bf16.gmra.mrb[0].mxu0 %v1261
    %v2275 = vpop.f32.mrb[0].mxu0
    %v2276 = vadd.f32 0.0, %v2275
    %v2277 = vpop.f32.mrb[0].mxu0
    %v2278 = vpop.f32.mrb[0].mxu0
    %v2279 = vadd.f32 0.0, %v2278
    %v2280 = vpop.f32.mrb[0].mxu0
    %2281 = vmatprep.mubr.bf16.mxu0 %v1275
    %2282 = vmatmul.mubr.bf16.gmra.mrb[0].mxu0 %v1274
    %v2283 = vpop.f32.mrb[0].mxu0
    %v2284 = vadd.f32 0.0, %v2283
    %v2285 = vpop.f32.mrb[0].mxu0
    %v2286 = vpop.f32.mrb[0].mxu0
    %v2287 = vadd.f32 0.0, %v2286
    %v2288 = vpop.f32.mrb[0].mxu0
    %2289 = vmatprep.mubr.bf16.mxu0 %v1288
    %2290 = vmatmul.mubr.bf16.gmra.mrb[0].mxu0 %v1287
    %v2291 = vpop.f32.mrb[0].mxu0
    %v2292 = vadd.f32 0.0, %v2291
    %v2293 = vpop.f32.mrb[0].mxu0
    %v2294 = vpop.f32.mrb[0].mxu0
    %v2295 = vadd.f32 0.0, %v2294
    %v2296 = vpop.f32.mrb[0].mxu0
    %2297 = vmatprep.mubr.bf16.mxu0 %v1301
    %2298 = vmatmul.mubr.bf16.gmra.mrb[0].mxu0 %v1300
    %v2299 = vpop.f32.mrb[0].mxu0
    %v2300 = vadd.f32 0.0, %v2299
    %v2301 = vpop.f32.mrb[0].mxu0
    %v2302 = vpop.f32.mrb[0].mxu0
    %v2303 = vadd.f32 0.0, %v2302
    %v2304 = vpop.f32.mrb[0].mxu0
    %2305 = vdwg.mxu0
    %2306 = vmatprep.subr.bf16.mxu0 0
    %2307 = vmatpush1.bf16.msra.mxu0 %v1953
    %2308 = vmatprep.subr.bf16.mxu0 0
    %2309 = vmatpush1.bf16.msra.mxu0 %v1954
    %2310 = vmatprep.subr.bf16.mxu0 0
    %2311 = vmatpush1.bf16.msra.mxu0 %v1955
    %2312 = vmatprep.subr.bf16.mxu0 0
    %2313 = vmatpush1.bf16.msra.mxu0 %v1956
    %2314 = vmatprep.subr.bf16.mxu0 0
    %2315 = vmatpush1.bf16.msra.mxu0 %v1957
    %2316 = vmatprep.subr.bf16.mxu0 0
    %2317 = vmatpush1.bf16.msra.mxu0 %v1958
    %2318 = vmatprep.subr.bf16.mxu0 0
    %2319 = vmatpush1.bf16.msra.mxu0 %v1959
    %2320 = vmatprep.subr.bf16.mxu0 0
    %2321 = vmatpush1.bf16.msra.mxu0 %v1960
    %2322 = vmatprep.subr.bf16.mxu0 0
    %2323 = vmatpush1.bf16.msra.mxu0 %v1961
    %2324 = vmatprep.subr.bf16.mxu0 0
    %2325 = vmatpush1.bf16.msra.mxu0 %v1962
    %2326 = vmatprep.subr.bf16.mxu0 0
    %2327 = vmatpush1.bf16.msra.mxu0 %v1963
    %2328 = vmatprep.subr.bf16.mxu0 0
    %2329 = vmatpush1.bf16.msra.mxu0 %v1964
    %2330 = vmatprep.subr.bf16.mxu0 0
    %2331 = vmatpush1.bf16.msra.mxu0 %v1965
    %2332 = vmatprep.subr.bf16.mxu0 0
    %2333 = vmatpush1.bf16.msra.mxu0 %v1966
    %2334 = vmatprep.subr.bf16.mxu0 0
    %2335 = vmatpush1.bf16.msra.mxu0 %v1967
    %2336 = vmatprep.subr.bf16.mxu0 0
    %2337 = vmatpush1.bf16.msra.mxu0 %v1968
    %2338 = vmatprep.mubr.bf16.mxu0 %v1108
    %2339 = vmatmul.mubr.bf16.gmra.mrb[0].mxu0 %v1107
    %v2340 = vpop.f32.mrb[0].mxu0
    %v2341 = vadd.f32 %v2180, %v2340
    %v2342 = vpop.f32.mrb[0].mxu0
    %v2343 = vpop.f32.mrb[0].mxu0
    %v2344 = vadd.f32 %v2183, %v2343
    %v2345 = vpop.f32.mrb[0].mxu0
    %2346 = vmatprep.mubr.bf16.mxu0 %v1121
    %2347 = vmatmul.mubr.bf16.gmra.mrb[0].mxu0 %v1120
    %v2348 = vpop.f32.mrb[0].mxu0
    %v2349 = vadd.f32 %v2188, %v2348
    %v2350 = vpop.f32.mrb[0].mxu0
    %v2351 = vpop.f32.mrb[0].mxu0
    %v2352 = vadd.f32 %v2191, %v2351
    %v2353 = vpop.f32.mrb[0].mxu0
    %2354 = vmatprep.mubr.bf16.mxu0 %v1134
    %2355 = vmatmul.mubr.bf16.gmra.mrb[0].mxu0 %v1133
    %v2356 = vpop.f32.mrb[0].mxu0
    %v2357 = vadd.f32 %v2196, %v2356
    %v2358 = vpop.f32.mrb[0].mxu0
    %v2359 = vpop.f32.mrb[0].mxu0
    %v2360 = vadd.f32 %v2199, %v2359
    %v2361 = vpop.f32.mrb[0].mxu0
    %2362 = vmatprep.mubr.bf16.mxu0 %v1147
    %2363 = vmatmul.mubr.bf16.gmra.mrb[0].mxu0 %v1146
    %v2364 = vpop.f32.mrb[0].mxu0
    %v2365 = vadd.f32 %v2204, %v2364
    %v2366 = vpop.f32.mrb[0].mxu0
    %v2367 = vpop.f32.mrb[0].mxu0
    %v2368 = vadd.f32 %v2207, %v2367
    %v2369 = vpop.f32.mrb[0].mxu0
    %2370 = vmatprep.mubr.bf16.mxu0 %v1160
    %2371 = vmatmul.mubr.bf16.gmra.mrb[0].mxu0 %v1159
    %v2372 = vpop.f32.mrb[0].mxu0
    %v2373 = vadd.f32 %v2212, %v2372
    %v2374 = vpop.f32.mrb[0].mxu0
    %v2375 = vpop.f32.mrb[0].mxu0
    %v2376 = vadd.f32 %v2215, %v2375
    %v2377 = vpop.f32.mrb[0].mxu0
    %2378 = vmatprep.mubr.bf16.mxu0 %v1173
    %2379 = vmatmul.mubr.bf16.gmra.mrb[0].mxu0 %v1172
    %v2380 = vpop.f32.mrb[0].mxu0
    %v2381 = vadd.f32 %v2220, %v2380
    %v2382 = vpop.f32.mrb[0].mxu0
    %v2383 = vpop.f32.mrb[0].mxu0
    %v2384 = vadd.f32 %v2223, %v2383
    %v2385 = vpop.f32.mrb[0].mxu0
    %2386 = vmatprep.mubr.bf16.mxu0 %v1186
    %2387 = vmatmul.mubr.bf16.gmra.mrb[0].mxu0 %v1185
    %v2388 = vpop.f32.mrb[0].mxu0
    %v2389 = vadd.f32 %v2228, %v2388
    %v2390 = vpop.f32.mrb[0].mxu0
    %v2391 = vpop.f32.mrb[0].mxu0
    %v2392 = vadd.f32 %v2231, %v2391
    %v2393 = vpop.f32.mrb[0].mxu0
    %2394 = vmatprep.mubr.bf16.mxu0 %v1199
    %2395 = vmatmul.mubr.bf16.gmra.mrb[0].mxu0 %v1198
    %v2396 = vpop.f32.mrb[0].mxu0
    %v2397 = vadd.f32 %v2236, %v2396
    %v2398 = vpop.f32.mrb[0].mxu0
    %v2399 = vpop.f32.mrb[0].mxu0
    %v2400 = vadd.f32 %v2239, %v2399
    %v2401 = vpop.f32.mrb[0].mxu0
    %2402 = vmatprep.mubr.bf16.mxu0 %v1212
    %2403 = vmatmul.mubr.bf16.gmra.mrb[0].mxu0 %v1211
    %v2404 = vpop.f32.mrb[0].mxu0
    %v2405 = vadd.f32 %v2244, %v2404
    %v2406 = vpop.f32.mrb[0].mxu0
    %v2407 = vpop.f32.mrb[0].mxu0
    %v2408 = vadd.f32 %v2247, %v2407
    %v2409 = vpop.f32.mrb[0].mxu0
    %2410 = vmatprep.mubr.bf16.mxu0 %v1225
    %2411 = vmatmul.mubr.bf16.gmra.mrb[0].mxu0 %v1224
    %v2412 = vpop.f32.mrb[0].mxu0
    %v2413 = vadd.f32 %v2252, %v2412
    %v2414 = vpop.f32.mrb[0].mxu0
    %v2415 = vpop.f32.mrb[0].mxu0
    %v2416 = vadd.f32 %v2255, %v2415
    %v2417 = vpop.f32.mrb[0].mxu0
    %2418 = vmatprep.mubr.bf16.mxu0 %v1238
    %2419 = vmatmul.mubr.bf16.gmra.mrb[0].mxu0 %v1237
    %v2420 = vpop.f32.mrb[0].mxu0
    %v2421 = vadd.f32 %v2260, %v2420
    %v2422 = vpop.f32.mrb[0].mxu0
    %v2423 = vpop.f32.mrb[0].mxu0
    %v2424 = vadd.f32 %v2263, %v2423
    %v2425 = vpop.f32.mrb[0].mxu0
    %2426 = vmatprep.mubr.bf16.mxu0 %v1251
    %2427 = vmatmul.mubr.bf16.gmra.mrb[0].mxu0 %v1250
    %v2428 = vpop.f32.mrb[0].mxu0
    %v2429 = vadd.f32 %v2268, %v2428
    %v2430 = vpop.f32.mrb[0].mxu0
    %v2431 = vpop.f32.mrb[0].mxu0
    %v2432 = vadd.f32 %v2271, %v2431
    %v2433 = vpop.f32.mrb[0].mxu0
    %2434 = vmatprep.mubr.bf16.mxu0 %v1264
    %2435 = vmatmul.mubr.bf16.gmra.mrb[0].mxu0 %v1263
    %v2436 = vpop.f32.mrb[0].mxu0
    %v2437 = vadd.f32 %v2276, %v2436
    %v2438 = vpop.f32.mrb[0].mxu0
    %v2439 = vpop.f32.mrb[0].mxu0
    %v2440 = vadd.f32 %v2279, %v2439
    %v2441 = vpop.f32.mrb[0].mxu0
    %2442 = vmatprep.mubr.bf16.mxu0 %v1277
    %2443 = vmatmul.mubr.bf16.gmra.mrb[0].mxu0 %v1276
    %v2444 = vpop.f32.mrb[0].mxu0
    %v2445 = vadd.f32 %v2284, %v2444
    %v2446 = vpop.f32.mrb[0].mxu0
    %v2447 = vpop.f32.mrb[0].mxu0
    %v2448 = vadd.f32 %v2287, %v2447
    %v2449 = vpop.f32.mrb[0].mxu0
    %2450 = vmatprep.mubr.bf16.mxu0 %v1290
    %2451 = vmatmul.mubr.bf16.gmra.mrb[0].mxu0 %v1289
    %v2452 = vpop.f32.mrb[0].mxu0
    %v2453 = vadd.f32 %v2292, %v2452
    %v2454 = vpop.f32.mrb[0].mxu0
    %v2455 = vpop.f32.mrb[0].mxu0
    %v2456 = vadd.f32 %v2295, %v2455
    %v2457 = vpop.f32.mrb[0].mxu0
    %2458 = vmatprep.mubr.bf16.mxu0 %v1303
    %2459 = vmatmul.mubr.bf16.gmra.mrb[0].mxu0 %v1302
    %v2460 = vpop.f32.mrb[0].mxu0
    %v2461 = vadd.f32 %v2300, %v2460
    %v2462 = vpop.f32.mrb[0].mxu0
    %v2463 = vpop.f32.mrb[0].mxu0
    %v2464 = vadd.f32 %v2303, %v2463
    %v2465 = vpop.f32.mrb[0].mxu0
    %2466 = vdwg.mxu0
    %2467 = vmatprep.subr.bf16.mxu0 0
    %2468 = vmatpush1.bf16.msra.mxu0 %v1969
    %2469 = vmatprep.subr.bf16.mxu0 0
    %2470 = vmatpush1.bf16.msra.mxu0 %v1970
    %2471 = vmatprep.subr.bf16.mxu0 0
    %2472 = vmatpush1.bf16.msra.mxu0 %v1971
    %2473 = vmatprep.subr.bf16.mxu0 0
    %2474 = vmatpush1.bf16.msra.mxu0 %v1972
    %2475 = vmatprep.subr.bf16.mxu0 0
    %2476 = vmatpush1.bf16.msra.mxu0 %v1973
    %2477 = vmatprep.subr.bf16.mxu0 0
    %2478 = vmatpush1.bf16.msra.mxu0 %v1974
    %2479 = vmatprep.subr.bf16.mxu0 0
    %2480 = vmatpush1.bf16.msra.mxu0 %v1975
    %2481 = vmatprep.subr.bf16.mxu0 0
    %2482 = vmatpush1.bf16.msra.mxu0 %v1976
    %2483 = vmatprep.subr.bf16.mxu0 0
    %2484 = vmatpush1.bf16.msra.mxu0 %v1977
    %2485 = vmatprep.subr.bf16.mxu0 0
    %2486 = vmatpush1.bf16.msra.mxu0 %v1978
    %2487 = vmatprep.subr.bf16.mxu0 0
    %2488 = vmatpush1.bf16.msra.mxu0 %v1979
    %2489 = vmatprep.subr.bf16.mxu0 0
    %2490 = vmatpush1.bf16.msra.mxu0 %v1980
    %2491 = vmatprep.subr.bf16.mxu0 0
    %2492 = vmatpush1.bf16.msra.mxu0 %v1981
    %2493 = vmatprep.subr.bf16.mxu0 0
    %2494 = vmatpush1.bf16.msra.mxu0 %v1982
    %2495 = vmatprep.subr.bf16.mxu0 0
    %2496 = vmatpush1.bf16.msra.mxu0 %v1983
    %2497 = vmatprep.subr.bf16.mxu0 0
    %2498 = vmatpush1.bf16.msra.mxu0 %v1984
    %2499 = vmatprep.mubr.bf16.mxu0 %v1110
    %2500 = vmatmul.mubr.bf16.gmra.mrb[0].mxu0 %v1109
    %v2501 = vpop.f32.mrb[0].mxu0
    %v2502 = vadd.f32 %v2341, %v2501
    %v2503 = vpop.f32.mrb[0].mxu0
    %v2504 = vpop.f32.mrb[0].mxu0
    %v2505 = vadd.f32 %v2344, %v2504
    %v2506 = vpop.f32.mrb[0].mxu0
    %2507 = vmatprep.mubr.bf16.mxu0 %v1123
    %2508 = vmatmul.mubr.bf16.gmra.mrb[0].mxu0 %v1122
    %v2509 = vpop.f32.mrb[0].mxu0
    %v2510 = vadd.f32 %v2349, %v2509
    %v2511 = vpop.f32.mrb[0].mxu0
    %v2512 = vpop.f32.mrb[0].mxu0
    %v2513 = vadd.f32 %v2352, %v2512
    %v2514 = vpop.f32.mrb[0].mxu0
    %2515 = vmatprep.mubr.bf16.mxu0 %v1136
    %2516 = vmatmul.mubr.bf16.gmra.mrb[0].mxu0 %v1135
    %v2517 = vpop.f32.mrb[0].mxu0
    %v2518 = vadd.f32 %v2357, %v2517
    %v2519 = vpop.f32.mrb[0].mxu0
    %v2520 = vpop.f32.mrb[0].mxu0
    %v2521 = vadd.f32 %v2360, %v2520
    %v2522 = vpop.f32.mrb[0].mxu0
    %2523 = vmatprep.mubr.bf16.mxu0 %v1149
    %2524 = vmatmul.mubr.bf16.gmra.mrb[0].mxu0 %v1148
    %v2525 = vpop.f32.mrb[0].mxu0
    %v2526 = vadd.f32 %v2365, %v2525
    %v2527 = vpop.f32.mrb[0].mxu0
    %v2528 = vpop.f32.mrb[0].mxu0
    %v2529 = vadd.f32 %v2368, %v2528
    %v2530 = vpop.f32.mrb[0].mxu0
    %2531 = vmatprep.mubr.bf16.mxu0 %v1162
    %2532 = vmatmul.mubr.bf16.gmra.mrb[0].mxu0 %v1161
    %v2533 = vpop.f32.mrb[0].mxu0
    %v2534 = vadd.f32 %v2373, %v2533
    %v2535 = vpop.f32.mrb[0].mxu0
    %v2536 = vpop.f32.mrb[0].mxu0
    %v2537 = vadd.f32 %v2376, %v2536
    %v2538 = vpop.f32.mrb[0].mxu0
    %2539 = vmatprep.mubr.bf16.mxu0 %v1175
    %2540 = vmatmul.mubr.bf16.gmra.mrb[0].mxu0 %v1174
    %v2541 = vpop.f32.mrb[0].mxu0
    %v2542 = vadd.f32 %v2381, %v2541
    %v2543 = vpop.f32.mrb[0].mxu0
    %v2544 = vpop.f32.mrb[0].mxu0
    %v2545 = vadd.f32 %v2384, %v2544
    %v2546 = vpop.f32.mrb[0].mxu0
    %2547 = vmatprep.mubr.bf16.mxu0 %v1188
    %2548 = vmatmul.mubr.bf16.gmra.mrb[0].mxu0 %v1187
    %v2549 = vpop.f32.mrb[0].mxu0
    %v2550 = vadd.f32 %v2389, %v2549
    %v2551 = vpop.f32.mrb[0].mxu0
    %v2552 = vpop.f32.mrb[0].mxu0
    %v2553 = vadd.f32 %v2392, %v2552
    %v2554 = vpop.f32.mrb[0].mxu0
    %2555 = vmatprep.mubr.bf16.mxu0 %v1201
    %2556 = vmatmul.mubr.bf16.gmra.mrb[0].mxu0 %v1200
    %v2557 = vpop.f32.mrb[0].mxu0
    %v2558 = vadd.f32 %v2397, %v2557
    %v2559 = vpop.f32.mrb[0].mxu0
    %v2560 = vpop.f32.mrb[0].mxu0
    %v2561 = vadd.f32 %v2400, %v2560
    %v2562 = vpop.f32.mrb[0].mxu0
    %2563 = vmatprep.mubr.bf16.mxu0 %v1214
    %2564 = vmatmul.mubr.bf16.gmra.mrb[0].mxu0 %v1213
    %v2565 = vpop.f32.mrb[0].mxu0
    %v2566 = vadd.f32 %v2405, %v2565
    %v2567 = vpop.f32.mrb[0].mxu0
    %v2568 = vpop.f32.mrb[0].mxu0
    %v2569 = vadd.f32 %v2408, %v2568
    %v2570 = vpop.f32.mrb[0].mxu0
    %2571 = vmatprep.mubr.bf16.mxu0 %v1227
    %2572 = vmatmul.mubr.bf16.gmra.mrb[0].mxu0 %v1226
    %v2573 = vpop.f32.mrb[0].mxu0
    %v2574 = vadd.f32 %v2413, %v2573
    %v2575 = vpop.f32.mrb[0].mxu0
    %v2576 = vpop.f32.mrb[0].mxu0
    %v2577 = vadd.f32 %v2416, %v2576
    %v2578 = vpop.f32.mrb[0].mxu0
    %2579 = vmatprep.mubr.bf16.mxu0 %v1240
    %2580 = vmatmul.mubr.bf16.gmra.mrb[0].mxu0 %v1239
    %v2581 = vpop.f32.mrb[0].mxu0
    %v2582 = vadd.f32 %v2421, %v2581
    %v2583 = vpop.f32.mrb[0].mxu0
    %v2584 = vpop.f32.mrb[0].mxu0
    %v2585 = vadd.f32 %v2424, %v2584
    %v2586 = vpop.f32.mrb[0].mxu0
    %2587 = vmatprep.mubr.bf16.mxu0 %v1253
    %2588 = vmatmul.mubr.bf16.gmra.mrb[0].mxu0 %v1252
    %v2589 = vpop.f32.mrb[0].mxu0
    %v2590 = vadd.f32 %v2429, %v2589
    %v2591 = vpop.f32.mrb[0].mxu0
    %v2592 = vpop.f32.mrb[0].mxu0
    %v2593 = vadd.f32 %v2432, %v2592
    %v2594 = vpop.f32.mrb[0].mxu0
    %2595 = vmatprep.mubr.bf16.mxu0 %v1266
    %2596 = vmatmul.mubr.bf16.gmra.mrb[0].mxu0 %v1265
    %v2597 = vpop.f32.mrb[0].mxu0
    %v2598 = vadd.f32 %v2437, %v2597
    %v2599 = vpop.f32.mrb[0].mxu0
    %v2600 = vpop.f32.mrb[0].mxu0
    %v2601 = vadd.f32 %v2440, %v2600
    %v2602 = vpop.f32.mrb[0].mxu0
    %2603 = vmatprep.mubr.bf16.mxu0 %v1279
    %2604 = vmatmul.mubr.bf16.gmra.mrb[0].mxu0 %v1278
    %v2605 = vpop.f32.mrb[0].mxu0
    %v2606 = vadd.f32 %v2445, %v2605
    %v2607 = vpop.f32.mrb[0].mxu0
    %v2608 = vpop.f32.mrb[0].mxu0
    %v2609 = vadd.f32 %v2448, %v2608
    %v2610 = vpop.f32.mrb[0].mxu0
    %2611 = vmatprep.mubr.bf16.mxu0 %v1292
    %2612 = vmatmul.mubr.bf16.gmra.mrb[0].mxu0 %v1291
    %v2613 = vpop.f32.mrb[0].mxu0
    %v2614 = vadd.f32 %v2453, %v2613
    %v2615 = vpop.f32.mrb[0].mxu0
    %v2616 = vpop.f32.mrb[0].mxu0
    %v2617 = vadd.f32 %v2456, %v2616
    %v2618 = vpop.f32.mrb[0].mxu0
    %2619 = vmatprep.mubr.bf16.mxu0 %v1305
    %2620 = vmatmul.mubr.bf16.gmra.mrb[0].mxu0 %v1304
    %v2621 = vpop.f32.mrb[0].mxu0
    %v2622 = vadd.f32 %v2461, %v2621
    %v2623 = vpop.f32.mrb[0].mxu0
    %v2624 = vpop.f32.mrb[0].mxu0
    %v2625 = vadd.f32 %v2464, %v2624
    %v2626 = vpop.f32.mrb[0].mxu0
    %2627 = vdwg.mxu0
    %2628 = vmatprep.subr.bf16.mxu0 0
    %2629 = vmatpush1.bf16.msra.mxu0 %v1985
    %2630 = vmatprep.subr.bf16.mxu0 0
    %2631 = vmatpush1.bf16.msra.mxu0 %v1986
    %2632 = vmatprep.subr.bf16.mxu0 0
    %2633 = vmatpush1.bf16.msra.mxu0 %v1987
    %2634 = vmatprep.subr.bf16.mxu0 0
    %2635 = vmatpush1.bf16.msra.mxu0 %v1988
    %2636 = vmatprep.subr.bf16.mxu0 0
    %2637 = vmatpush1.bf16.msra.mxu0 %v1989
    %2638 = vmatprep.subr.bf16.mxu0 0
    %2639 = vmatpush1.bf16.msra.mxu0 %v1990
    %2640 = vmatprep.subr.bf16.mxu0 0
    %2641 = vmatpush1.bf16.msra.mxu0 %v1991
    %2642 = vmatprep.subr.bf16.mxu0 0
    %2643 = vmatpush1.bf16.msra.mxu0 %v1992
    %2644 = vmatprep.subr.bf16.mxu0 0
    %2645 = vmatpush1.bf16.msra.mxu0 %v1993
    %2646 = vmatprep.subr.bf16.mxu0 0
    %2647 = vmatpush1.bf16.msra.mxu0 %v1994
    %2648 = vmatprep.subr.bf16.mxu0 0
    %2649 = vmatpush1.bf16.msra.mxu0 %v1995
    %2650 = vmatprep.subr.bf16.mxu0 0
    %2651 = vmatpush1.bf16.msra.mxu0 %v1996
    %2652 = vmatprep.subr.bf16.mxu0 0
    %2653 = vmatpush1.bf16.msra.mxu0 %v1997
    %2654 = vmatprep.subr.bf16.mxu0 0
    %2655 = vmatpush1.bf16.msra.mxu0 %v1998
    %2656 = vmatprep.subr.bf16.mxu0 0
    %2657 = vmatpush1.bf16.msra.mxu0 %v1999
    %2658 = vmatprep.subr.bf16.mxu0 0
    %2659 = vmatpush1.bf16.msra.mxu0 %v2000
    %2660 = vmatprep.mubr.bf16.mxu0 %v1112
    %2661 = vmatmul.mubr.bf16.gmra.mrb[0].mxu0 %v1111
    %v2662 = vpop.f32.mrb[0].mxu0
    %v2663 = vadd.f32 %v2502, %v2662
    %v2664 = vpop.f32.mrb[0].mxu0
    %v2665 = vpop.f32.mrb[0].mxu0
    %v2666 = vadd.f32 %v2505, %v2665
    %v2667 = vpop.f32.mrb[0].mxu0
    %2668 = vmatprep.mubr.bf16.mxu0 %v1125
    %2669 = vmatmul.mubr.bf16.gmra.mrb[0].mxu0 %v1124
    %v2670 = vpop.f32.mrb[0].mxu0
    %v2671 = vadd.f32 %v2510, %v2670
    %v2672 = vpop.f32.mrb[0].mxu0
    %v2673 = vpop.f32.mrb[0].mxu0
    %v2674 = vadd.f32 %v2513, %v2673
    %v2675 = vpop.f32.mrb[0].mxu0
    %2676 = vmatprep.mubr.bf16.mxu0 %v1138
    %2677 = vmatmul.mubr.bf16.gmra.mrb[0].mxu0 %v1137
    %v2678 = vpop.f32.mrb[0].mxu0
    %v2679 = vadd.f32 %v2518, %v2678
    %v2680 = vpop.f32.mrb[0].mxu0
    %v2681 = vpop.f32.mrb[0].mxu0
    %v2682 = vadd.f32 %v2521, %v2681
    %v2683 = vpop.f32.mrb[0].mxu0
    %2684 = vmatprep.mubr.bf16.mxu0 %v1151
    %2685 = vmatmul.mubr.bf16.gmra.mrb[0].mxu0 %v1150
    %v2686 = vpop.f32.mrb[0].mxu0
    %v2687 = vadd.f32 %v2526, %v2686
    %v2688 = vpop.f32.mrb[0].mxu0
    %v2689 = vpop.f32.mrb[0].mxu0
    %v2690 = vadd.f32 %v2529, %v2689
    %v2691 = vpop.f32.mrb[0].mxu0
    %2692 = vmatprep.mubr.bf16.mxu0 %v1164
    %2693 = vmatmul.mubr.bf16.gmra.mrb[0].mxu0 %v1163
    %v2694 = vpop.f32.mrb[0].mxu0
    %v2695 = vadd.f32 %v2534, %v2694
    %v2696 = vpop.f32.mrb[0].mxu0
    %v2697 = vpop.f32.mrb[0].mxu0
    %v2698 = vadd.f32 %v2537, %v2697
    %v2699 = vpop.f32.mrb[0].mxu0
    %2700 = vmatprep.mubr.bf16.mxu0 %v1177
    %2701 = vmatmul.mubr.bf16.gmra.mrb[0].mxu0 %v1176
    %v2702 = vpop.f32.mrb[0].mxu0
    %v2703 = vadd.f32 %v2542, %v2702
    %v2704 = vpop.f32.mrb[0].mxu0
    %v2705 = vpop.f32.mrb[0].mxu0
    %v2706 = vadd.f32 %v2545, %v2705
    %v2707 = vpop.f32.mrb[0].mxu0
    %2708 = vmatprep.mubr.bf16.mxu0 %v1190
    %2709 = vmatmul.mubr.bf16.gmra.mrb[0].mxu0 %v1189
    %v2710 = vpop.f32.mrb[0].mxu0
    %v2711 = vadd.f32 %v2550, %v2710
    %v2712 = vpop.f32.mrb[0].mxu0
    %v2713 = vpop.f32.mrb[0].mxu0
    %v2714 = vadd.f32 %v2553, %v2713
    %v2715 = vpop.f32.mrb[0].mxu0
    %2716 = vmatprep.mubr.bf16.mxu0 %v1203
    %2717 = vmatmul.mubr.bf16.gmra.mrb[0].mxu0 %v1202
    %v2718 = vpop.f32.mrb[0].mxu0
    %v2719 = vadd.f32 %v2558, %v2718
    %v2720 = vpop.f32.mrb[0].mxu0
    %v2721 = vpop.f32.mrb[0].mxu0
    %v2722 = vadd.f32 %v2561, %v2721
    %v2723 = vpop.f32.mrb[0].mxu0
    %2724 = vmatprep.mubr.bf16.mxu0 %v1216
    %2725 = vmatmul.mubr.bf16.gmra.mrb[0].mxu0 %v1215
    %v2726 = vpop.f32.mrb[0].mxu0
    %v2727 = vadd.f32 %v2566, %v2726
    %v2728 = vpop.f32.mrb[0].mxu0
    %v2729 = vpop.f32.mrb[0].mxu0
    %v2730 = vadd.f32 %v2569, %v2729
    %v2731 = vpop.f32.mrb[0].mxu0
    %2732 = vmatprep.mubr.bf16.mxu0 %v1229
    %2733 = vmatmul.mubr.bf16.gmra.mrb[0].mxu0 %v1228
    %v2734 = vpop.f32.mrb[0].mxu0
    %v2735 = vadd.f32 %v2574, %v2734
    %v2736 = vpop.f32.mrb[0].mxu0
    %v2737 = vpop.f32.mrb[0].mxu0
    %v2738 = vadd.f32 %v2577, %v2737
    %v2739 = vpop.f32.mrb[0].mxu0
    %2740 = vmatprep.mubr.bf16.mxu0 %v1242
    %2741 = vmatmul.mubr.bf16.gmra.mrb[0].mxu0 %v1241
    %v2742 = vpop.f32.mrb[0].mxu0
    %v2743 = vadd.f32 %v2582, %v2742
    %v2744 = vpop.f32.mrb[0].mxu0
    %v2745 = vpop.f32.mrb[0].mxu0
    %v2746 = vadd.f32 %v2585, %v2745
    %v2747 = vpop.f32.mrb[0].mxu0
    %2748 = vmatprep.mubr.bf16.mxu0 %v1255
    %2749 = vmatmul.mubr.bf16.gmra.mrb[0].mxu0 %v1254
    %v2750 = vpop.f32.mrb[0].mxu0
    %v2751 = vadd.f32 %v2590, %v2750
    %v2752 = vpop.f32.mrb[0].mxu0
    %v2753 = vpop.f32.mrb[0].mxu0
    %v2754 = vadd.f32 %v2593, %v2753
    %v2755 = vpop.f32.mrb[0].mxu0
    %2756 = vmatprep.mubr.bf16.mxu0 %v1268
    %2757 = vmatmul.mubr.bf16.gmra.mrb[0].mxu0 %v1267
    %v2758 = vpop.f32.mrb[0].mxu0
    %v2759 = vadd.f32 %v2598, %v2758
    %v2760 = vpop.f32.mrb[0].mxu0
    %v2761 = vpop.f32.mrb[0].mxu0
    %v2762 = vadd.f32 %v2601, %v2761
    %v2763 = vpop.f32.mrb[0].mxu0
    %2764 = vmatprep.mubr.bf16.mxu0 %v1281
    %2765 = vmatmul.mubr.bf16.gmra.mrb[0].mxu0 %v1280
    %v2766 = vpop.f32.mrb[0].mxu0
    %v2767 = vadd.f32 %v2606, %v2766
    %v2768 = vpop.f32.mrb[0].mxu0
    %v2769 = vpop.f32.mrb[0].mxu0
    %v2770 = vadd.f32 %v2609, %v2769
    %v2771 = vpop.f32.mrb[0].mxu0
    %2772 = vmatprep.mubr.bf16.mxu0 %v1294
    %2773 = vmatmul.mubr.bf16.gmra.mrb[0].mxu0 %v1293
    %v2774 = vpop.f32.mrb[0].mxu0
    %v2775 = vadd.f32 %v2614, %v2774
    %v2776 = vpop.f32.mrb[0].mxu0
    %v2777 = vpop.f32.mrb[0].mxu0
    %v2778 = vadd.f32 %v2617, %v2777
    %v2779 = vpop.f32.mrb[0].mxu0
    %2780 = vmatprep.mubr.bf16.mxu0 %v1307
    %2781 = vmatmul.mubr.bf16.gmra.mrb[0].mxu0 %v1306
    %v2782 = vpop.f32.mrb[0].mxu0
    %v2783 = vadd.f32 %v2622, %v2782
    %v2784 = vpop.f32.mrb[0].mxu0
    %v2785 = vpop.f32.mrb[0].mxu0
    %v2786 = vadd.f32 %v2625, %v2785
    %v2787 = vpop.f32.mrb[0].mxu0
    %2788 = vdwg.mxu0
    %2789 = vmatprep.subr.bf16.mxu0 0
    %2790 = vmatpush1.bf16.msra.mxu0 %v2001
    %2791 = vmatprep.subr.bf16.mxu0 0
    %2792 = vmatpush1.bf16.msra.mxu0 %v2002
    %2793 = vmatprep.subr.bf16.mxu0 0
    %2794 = vmatpush1.bf16.msra.mxu0 %v2003
    %2795 = vmatprep.subr.bf16.mxu0 0
    %2796 = vmatpush1.bf16.msra.mxu0 %v2004
    %2797 = vmatprep.subr.bf16.mxu0 0
    %2798 = vmatpush1.bf16.msra.mxu0 %v2005
    %2799 = vmatprep.subr.bf16.mxu0 0
    %2800 = vmatpush1.bf16.msra.mxu0 %v2006
    %2801 = vmatprep.subr.bf16.mxu0 0
    %2802 = vmatpush1.bf16.msra.mxu0 %v2007
    %2803 = vmatprep.subr.bf16.mxu0 0
    %2804 = vmatpush1.bf16.msra.mxu0 %v2008
    %2805 = vmatprep.subr.bf16.mxu0 0
    %2806 = vmatpush1.bf16.msra.mxu0 %v2009
    %2807 = vmatprep.subr.bf16.mxu0 0
    %2808 = vmatpush1.bf16.msra.mxu0 %v2010
    %2809 = vmatprep.subr.bf16.mxu0 0
    %2810 = vmatpush1.bf16.msra.mxu0 %v2011
    %2811 = vmatprep.subr.bf16.mxu0 0
    %2812 = vmatpush1.bf16.msra.mxu0 %v2012
    %2813 = vmatprep.subr.bf16.mxu0 0
    %2814 = vmatpush1.bf16.msra.mxu0 %v2013
    %2815 = vmatprep.subr.bf16.mxu0 0
    %2816 = vmatpush1.bf16.msra.mxu0 %v2014
    %2817 = vmatprep.subr.bf16.mxu0 0
    %2818 = vmatpush1.bf16.msra.mxu0 %v2015
    %2819 = vmatprep.subr.bf16.mxu0 0
    %2820 = vmatpush1.bf16.msra.mxu0 %v2016
    %2821 = vmatprep.mubr.bf16.mxu0 %v1114
    %2822 = vmatmul.mubr.bf16.gmra.mrb[0].mxu0 %v1113
    %v2823 = vpop.f32.mrb[0].mxu0
    %v2824 = vadd.f32 %v2663, %v2823
    %v2825 = vpop.f32.mrb[0].mxu0
    %v2826 = vpop.f32.mrb[0].mxu0
    %v2827 = vadd.f32 %v2666, %v2826
    %v2828 = vpop.f32.mrb[0].mxu0
    %2829 = vmatprep.mubr.bf16.mxu0 %v1127
    %2830 = vmatmul.mubr.bf16.gmra.mrb[0].mxu0 %v1126
    %v2831 = vpop.f32.mrb[0].mxu0
    %v2832 = vadd.f32 %v2671, %v2831
    %v2833 = vpop.f32.mrb[0].mxu0
    %v2834 = vpop.f32.mrb[0].mxu0
    %v2835 = vadd.f32 %v2674, %v2834
    %v2836 = vpop.f32.mrb[0].mxu0
    %2837 = vmatprep.mubr.bf16.mxu0 %v1140
    %2838 = vmatmul.mubr.bf16.gmra.mrb[0].mxu0 %v1139
    %v2839 = vpop.f32.mrb[0].mxu0
    %v2840 = vadd.f32 %v2679, %v2839
    %v2841 = vpop.f32.mrb[0].mxu0
    %v2842 = vpop.f32.mrb[0].mxu0
    %v2843 = vadd.f32 %v2682, %v2842
    %v2844 = vpop.f32.mrb[0].mxu0
    %2845 = vmatprep.mubr.bf16.mxu0 %v1153
    %2846 = vmatmul.mubr.bf16.gmra.mrb[0].mxu0 %v1152
    %v2847 = vpop.f32.mrb[0].mxu0
    %v2848 = vadd.f32 %v2687, %v2847
    %v2849 = vpop.f32.mrb[0].mxu0
    %v2850 = vpop.f32.mrb[0].mxu0
    %v2851 = vadd.f32 %v2690, %v2850
    %v2852 = vpop.f32.mrb[0].mxu0
    %2853 = vmatprep.mubr.bf16.mxu0 %v1166
    %2854 = vmatmul.mubr.bf16.gmra.mrb[0].mxu0 %v1165
    %v2855 = vpop.f32.mrb[0].mxu0
    %v2856 = vadd.f32 %v2695, %v2855
    %v2857 = vpop.f32.mrb[0].mxu0
    %v2858 = vpop.f32.mrb[0].mxu0
    %v2859 = vadd.f32 %v2698, %v2858
    %v2860 = vpop.f32.mrb[0].mxu0
    %2861 = vmatprep.mubr.bf16.mxu0 %v1179
    %2862 = vmatmul.mubr.bf16.gmra.mrb[0].mxu0 %v1178
    %v2863 = vpop.f32.mrb[0].mxu0
    %v2864 = vadd.f32 %v2703, %v2863
    %v2865 = vpop.f32.mrb[0].mxu0
    %v2866 = vpop.f32.mrb[0].mxu0
    %v2867 = vadd.f32 %v2706, %v2866
    %v2868 = vpop.f32.mrb[0].mxu0
    %2869 = vmatprep.mubr.bf16.mxu0 %v1192
    %2870 = vmatmul.mubr.bf16.gmra.mrb[0].mxu0 %v1191
    %v2871 = vpop.f32.mrb[0].mxu0
    %v2872 = vadd.f32 %v2711, %v2871
    %v2873 = vpop.f32.mrb[0].mxu0
    %v2874 = vpop.f32.mrb[0].mxu0
    %v2875 = vadd.f32 %v2714, %v2874
    %v2876 = vpop.f32.mrb[0].mxu0
    %2877 = vmatprep.mubr.bf16.mxu0 %v1205
    %2878 = vmatmul.mubr.bf16.gmra.mrb[0].mxu0 %v1204
    %v2879 = vpop.f32.mrb[0].mxu0
    %v2880 = vadd.f32 %v2719, %v2879
    %v2881 = vpop.f32.mrb[0].mxu0
    %v2882 = vpop.f32.mrb[0].mxu0
    %v2883 = vadd.f32 %v2722, %v2882
    %v2884 = vpop.f32.mrb[0].mxu0
    %2885 = vmatprep.mubr.bf16.mxu0 %v1218
    %2886 = vmatmul.mubr.bf16.gmra.mrb[0].mxu0 %v1217
    %v2887 = vpop.f32.mrb[0].mxu0
    %v2888 = vadd.f32 %v2727, %v2887
    %v2889 = vpop.f32.mrb[0].mxu0
    %v2890 = vpop.f32.mrb[0].mxu0
    %v2891 = vadd.f32 %v2730, %v2890
    %v2892 = vpop.f32.mrb[0].mxu0
    %2893 = vmatprep.mubr.bf16.mxu0 %v1231
    %2894 = vmatmul.mubr.bf16.gmra.mrb[0].mxu0 %v1230
    %v2895 = vpop.f32.mrb[0].mxu0
    %v2896 = vadd.f32 %v2735, %v2895
    %v2897 = vpop.f32.mrb[0].mxu0
    %v2898 = vpop.f32.mrb[0].mxu0
    %v2899 = vadd.f32 %v2738, %v2898
    %v2900 = vpop.f32.mrb[0].mxu0
    %2901 = vmatprep.mubr.bf16.mxu0 %v1244
    %2902 = vmatmul.mubr.bf16.gmra.mrb[0].mxu0 %v1243
    %v2903 = vpop.f32.mrb[0].mxu0
    %v2904 = vadd.f32 %v2743, %v2903
    %v2905 = vpop.f32.mrb[0].mxu0
    %v2906 = vpop.f32.mrb[0].mxu0
    %v2907 = vadd.f32 %v2746, %v2906
    %v2908 = vpop.f32.mrb[0].mxu0
    %2909 = vmatprep.mubr.bf16.mxu0 %v1257
    %2910 = vmatmul.mubr.bf16.gmra.mrb[0].mxu0 %v1256
    %v2911 = vpop.f32.mrb[0].mxu0
    %v2912 = vadd.f32 %v2751, %v2911
    %v2913 = vpop.f32.mrb[0].mxu0
    %v2914 = vpop.f32.mrb[0].mxu0
    %v2915 = vadd.f32 %v2754, %v2914
    %v2916 = vpop.f32.mrb[0].mxu0
    %2917 = vmatprep.mubr.bf16.mxu0 %v1270
    %2918 = vmatmul.mubr.bf16.gmra.mrb[0].mxu0 %v1269
    %v2919 = vpop.f32.mrb[0].mxu0
    %v2920 = vadd.f32 %v2759, %v2919
    %v2921 = vpop.f32.mrb[0].mxu0
    %v2922 = vpop.f32.mrb[0].mxu0
    %v2923 = vadd.f32 %v2762, %v2922
    %v2924 = vpop.f32.mrb[0].mxu0
    %2925 = vmatprep.mubr.bf16.mxu0 %v1283
    %2926 = vmatmul.mubr.bf16.gmra.mrb[0].mxu0 %v1282
    %v2927 = vpop.f32.mrb[0].mxu0
    %v2928 = vadd.f32 %v2767, %v2927
    %v2929 = vpop.f32.mrb[0].mxu0
    %v2930 = vpop.f32.mrb[0].mxu0
    %v2931 = vadd.f32 %v2770, %v2930
    %v2932 = vpop.f32.mrb[0].mxu0
    %2933 = vmatprep.mubr.bf16.mxu0 %v1296
    %2934 = vmatmul.mubr.bf16.gmra.mrb[0].mxu0 %v1295
    %v2935 = vpop.f32.mrb[0].mxu0
    %v2936 = vadd.f32 %v2775, %v2935
    %v2937 = vpop.f32.mrb[0].mxu0
    %v2938 = vpop.f32.mrb[0].mxu0
    %v2939 = vadd.f32 %v2778, %v2938
    %v2940 = vpop.f32.mrb[0].mxu0
    %2941 = vmatprep.mubr.bf16.mxu0 %v1309
    %2942 = vmatmul.mubr.bf16.gmra.mrb[0].mxu0 %v1308
    %v2943 = vpop.f32.mrb[0].mxu0
    %v2944 = vadd.f32 %v2783, %v2943
    %v2945 = vpop.f32.mrb[0].mxu0
    %v2946 = vpop.f32.mrb[0].mxu0
    %v2947 = vadd.f32 %v2786, %v2946
    %v2948 = vpop.f32.mrb[0].mxu0
    %2949 = vdwg.mxu0
    %2950 = vmatprep.subr.bf16.mxu0 0
    %2951 = vmatpush1.bf16.msra.mxu0 %v2017
    %2952 = vmatprep.subr.bf16.mxu0 0
    %2953 = vmatpush1.bf16.msra.mxu0 %v2018
    %2954 = vmatprep.subr.bf16.mxu0 0
    %2955 = vmatpush1.bf16.msra.mxu0 %v2019
    %2956 = vmatprep.subr.bf16.mxu0 0
    %2957 = vmatpush1.bf16.msra.mxu0 %v2020
    %2958 = vmatprep.subr.bf16.mxu0 0
    %2959 = vmatpush1.bf16.msra.mxu0 %v2021
    %2960 = vmatprep.subr.bf16.mxu0 0
    %2961 = vmatpush1.bf16.msra.mxu0 %v2022
    %2962 = vmatprep.subr.bf16.mxu0 0
    %2963 = vmatpush1.bf16.msra.mxu0 %v2023
    %2964 = vmatprep.subr.bf16.mxu0 0
    %2965 = vmatpush1.bf16.msra.mxu0 %v2024
    %2966 = vmatprep.subr.bf16.mxu0 0
    %2967 = vmatpush1.bf16.msra.mxu0 %v2025
    %2968 = vmatprep.subr.bf16.mxu0 0
    %2969 = vmatpush1.bf16.msra.mxu0 %v2026
    %2970 = vmatprep.subr.bf16.mxu0 0
    %2971 = vmatpush1.bf16.msra.mxu0 %v2027
    %2972 = vmatprep.subr.bf16.mxu0 0
    %2973 = vmatpush1.bf16.msra.mxu0 %v2028
    %2974 = vmatprep.subr.bf16.mxu0 0
    %2975 = vmatpush1.bf16.msra.mxu0 %v2029
    %2976 = vmatprep.subr.bf16.mxu0 0
    %2977 = vmatpush1.bf16.msra.mxu0 %v2030
    %2978 = vmatprep.subr.bf16.mxu0 0
    %2979 = vmatpush1.bf16.msra.mxu0 %v2031
    %2980 = vmatprep.subr.bf16.mxu0 0
    %2981 = vmatpush1.bf16.msra.mxu0 %v2032
    %2982 = vmatprep.mubr.bf16.mxu0 %v1116
    %2983 = vmatmul.mubr.bf16.gmra.mrb[0].mxu0 %v1115
    %v2984 = vpop.f32.mrb[0].mxu0
    %v2985 = vadd.f32 %v2824, %v2984
    %v2986 = vpop.f32.mrb[0].mxu0
    %v2987 = vpop.f32.mrb[0].mxu0
    %v2988 = vadd.f32 %v2827, %v2987
    %v2989 = vpop.f32.mrb[0].mxu0
    %2990 = vmatprep.mubr.bf16.mxu0 %v1129
    %2991 = vmatmul.mubr.bf16.gmra.mrb[0].mxu0 %v1128
    %v2992 = vpop.f32.mrb[0].mxu0
    %v2993 = vadd.f32 %v2832, %v2992
    %v2994 = vpop.f32.mrb[0].mxu0
    %v2995 = vpop.f32.mrb[0].mxu0
    %v2996 = vadd.f32 %v2835, %v2995
    %v2997 = vpop.f32.mrb[0].mxu0
    %2998 = vmatprep.mubr.bf16.mxu0 %v1142
    %2999 = vmatmul.mubr.bf16.gmra.mrb[0].mxu0 %v1141
    %v3000 = vpop.f32.mrb[0].mxu0
    %v3001 = vadd.f32 %v2840, %v3000
    %v3002 = vpop.f32.mrb[0].mxu0
    %v3003 = vpop.f32.mrb[0].mxu0
    %v3004 = vadd.f32 %v2843, %v3003
    %v3005 = vpop.f32.mrb[0].mxu0
    %3006 = vmatprep.mubr.bf16.mxu0 %v1155
    %3007 = vmatmul.mubr.bf16.gmra.mrb[0].mxu0 %v1154
    %v3008 = vpop.f32.mrb[0].mxu0
    %v3009 = vadd.f32 %v2848, %v3008
    %v3010 = vpop.f32.mrb[0].mxu0
    %v3011 = vpop.f32.mrb[0].mxu0
    %v3012 = vadd.f32 %v2851, %v3011
    %v3013 = vpop.f32.mrb[0].mxu0
    %3014 = vmatprep.mubr.bf16.mxu0 %v1168
    %3015 = vmatmul.mubr.bf16.gmra.mrb[0].mxu0 %v1167
    %v3016 = vpop.f32.mrb[0].mxu0
    %v3017 = vadd.f32 %v2856, %v3016
    %v3018 = vpop.f32.mrb[0].mxu0
    %v3019 = vpop.f32.mrb[0].mxu0
    %v3020 = vadd.f32 %v2859, %v3019
    %v3021 = vpop.f32.mrb[0].mxu0
    %3022 = vmatprep.mubr.bf16.mxu0 %v1181
    %3023 = vmatmul.mubr.bf16.gmra.mrb[0].mxu0 %v1180
    %v3024 = vpop.f32.mrb[0].mxu0
    %v3025 = vadd.f32 %v2864, %v3024
    %v3026 = vpop.f32.mrb[0].mxu0
    %v3027 = vpop.f32.mrb[0].mxu0
    %v3028 = vadd.f32 %v2867, %v3027
    %v3029 = vpop.f32.mrb[0].mxu0
    %3030 = vmatprep.mubr.bf16.mxu0 %v1194
    %3031 = vmatmul.mubr.bf16.gmra.mrb[0].mxu0 %v1193
    %v3032 = vpop.f32.mrb[0].mxu0
    %v3033 = vadd.f32 %v2872, %v3032
    %v3034 = vpop.f32.mrb[0].mxu0
    %v3035 = vpop.f32.mrb[0].mxu0
    %v3036 = vadd.f32 %v2875, %v3035
    %v3037 = vpop.f32.mrb[0].mxu0
    %3038 = vmatprep.mubr.bf16.mxu0 %v1207
    %3039 = vmatmul.mubr.bf16.gmra.mrb[0].mxu0 %v1206
    %v3040 = vpop.f32.mrb[0].mxu0
    %v3041 = vadd.f32 %v2880, %v3040
    %v3042 = vpop.f32.mrb[0].mxu0
    %v3043 = vpop.f32.mrb[0].mxu0
    %v3044 = vadd.f32 %v2883, %v3043
    %v3045 = vpop.f32.mrb[0].mxu0
    %3046 = vmatprep.mubr.bf16.mxu0 %v1220
    %3047 = vmatmul.mubr.bf16.gmra.mrb[0].mxu0 %v1219
    %v3048 = vpop.f32.mrb[0].mxu0
    %v3049 = vadd.f32 %v2888, %v3048
    %v3050 = vpop.f32.mrb[0].mxu0
    %v3051 = vpop.f32.mrb[0].mxu0
    %v3052 = vadd.f32 %v2891, %v3051
    %v3053 = vpop.f32.mrb[0].mxu0
    %3054 = vmatprep.mubr.bf16.mxu0 %v1233
    %3055 = vmatmul.mubr.bf16.gmra.mrb[0].mxu0 %v1232
    %v3056 = vpop.f32.mrb[0].mxu0
    %v3057 = vadd.f32 %v2896, %v3056
    %v3058 = vpop.f32.mrb[0].mxu0
    %v3059 = vpop.f32.mrb[0].mxu0
    %v3060 = vadd.f32 %v2899, %v3059
    %v3061 = vpop.f32.mrb[0].mxu0
    %3062 = vmatprep.mubr.bf16.mxu0 %v1246
    %3063 = vmatmul.mubr.bf16.gmra.mrb[0].mxu0 %v1245
    %v3064 = vpop.f32.mrb[0].mxu0
    %v3065 = vadd.f32 %v2904, %v3064
    %v3066 = vpop.f32.mrb[0].mxu0
    %v3067 = vpop.f32.mrb[0].mxu0
    %v3068 = vadd.f32 %v2907, %v3067
    %v3069 = vpop.f32.mrb[0].mxu0
    %3070 = vmatprep.mubr.bf16.mxu0 %v1259
    %3071 = vmatmul.mubr.bf16.gmra.mrb[0].mxu0 %v1258
    %v3072 = vpop.f32.mrb[0].mxu0
    %v3073 = vadd.f32 %v2912, %v3072
    %v3074 = vpop.f32.mrb[0].mxu0
    %v3075 = vpop.f32.mrb[0].mxu0
    %v3076 = vadd.f32 %v2915, %v3075
    %v3077 = vpop.f32.mrb[0].mxu0
    %3078 = vmatprep.mubr.bf16.mxu0 %v1272
    %3079 = vmatmul.mubr.bf16.gmra.mrb[0].mxu0 %v1271
    %v3080 = vpop.f32.mrb[0].mxu0
    %v3081 = vadd.f32 %v2920, %v3080
    %v3082 = vpop.f32.mrb[0].mxu0
    %v3083 = vpop.f32.mrb[0].mxu0
    %v3084 = vadd.f32 %v2923, %v3083
    %v3085 = vpop.f32.mrb[0].mxu0
    %3086 = vmatprep.mubr.bf16.mxu0 %v1285
    %3087 = vmatmul.mubr.bf16.gmra.mrb[0].mxu0 %v1284
    %v3088 = vpop.f32.mrb[0].mxu0
    %v3089 = vadd.f32 %v2928, %v3088
    %v3090 = vpop.f32.mrb[0].mxu0
    %v3091 = vpop.f32.mrb[0].mxu0
    %v3092 = vadd.f32 %v2931, %v3091
    %v3093 = vpop.f32.mrb[0].mxu0
    %3094 = vmatprep.mubr.bf16.mxu0 %v1298
    %3095 = vmatmul.mubr.bf16.gmra.mrb[0].mxu0 %v1297
    %v3096 = vpop.f32.mrb[0].mxu0
    %v3097 = vadd.f32 %v2936, %v3096
    %v3098 = vpop.f32.mrb[0].mxu0
    %v3099 = vpop.f32.mrb[0].mxu0
    %v3100 = vadd.f32 %v2939, %v3099
    %v3101 = vpop.f32.mrb[0].mxu0
    %3102 = vmatprep.mubr.bf16.mxu0 %v1311
    %3103 = vmatmul.mubr.bf16.gmra.mrb[0].mxu0 %v1310
    %v3104 = vpop.f32.mrb[0].mxu0
    %v3105 = vadd.f32 %v2944, %v3104
    %v3106 = vpop.f32.mrb[0].mxu0
    %v3107 = vpop.f32.mrb[0].mxu0
    %v3108 = vadd.f32 %v2947, %v3107
    %v3109 = vpop.f32.mrb[0].mxu0
    %3110 = vdwg.mxu0
    %3111 = vmatprep.subr.bf16.mxu0 0
    %3112 = vmatpush1.bf16.msra.mxu0 %v2033
    %3113 = vmatprep.subr.bf16.mxu0 0
    %3114 = vmatpush1.bf16.msra.mxu0 %v2034
    %3115 = vmatprep.subr.bf16.mxu0 0
    %3116 = vmatpush1.bf16.msra.mxu0 %v2035
    %3117 = vmatprep.subr.bf16.mxu0 0
    %3118 = vmatpush1.bf16.msra.mxu0 %v2036
    %3119 = vmatprep.subr.bf16.mxu0 0
    %3120 = vmatpush1.bf16.msra.mxu0 %v2037
    %3121 = vmatprep.subr.bf16.mxu0 0
    %3122 = vmatpush1.bf16.msra.mxu0 %v2038
    %3123 = vmatprep.subr.bf16.mxu0 0
    %3124 = vmatpush1.bf16.msra.mxu0 %v2039
    %3125 = vmatprep.subr.bf16.mxu0 0
    %3126 = vmatpush1.bf16.msra.mxu0 %v2040
    %3127 = vmatprep.subr.bf16.mxu0 0
    %3128 = vmatpush1.bf16.msra.mxu0 0
    %3129 = vmatprep.subr.bf16.mxu0 0
    %3130 = vmatpush1.bf16.msra.mxu0 0
    %3131 = vmatprep.subr.bf16.mxu0 0
    %3132 = vmatpush1.bf16.msra.mxu0 0
    %3133 = vmatprep.subr.bf16.mxu0 0
    %3134 = vmatpush1.bf16.msra.mxu0 0
    %3135 = vmatprep.subr.bf16.mxu0 0
    %3136 = vmatpush1.bf16.msra.mxu0 0
    %3137 = vmatprep.subr.bf16.mxu0 0
    %3138 = vmatpush1.bf16.msra.mxu0 0
    %3139 = vmatprep.subr.bf16.mxu0 0
    %3140 = vmatpush1.bf16.msra.mxu0 0
    %3141 = vmatprep.subr.bf16.mxu0 0
    %3142 = vmatpush1.bf16.msra.mxu0 0
    %3143 = vmatprep.mubr.bf16.mxu0 0
    %3144 = vmatmul.mubr.bf16.gmra.mrb[0].mxu0 %v1117
    %v3145 = vpop.f32.mrb[0].mxu0
    %v3146 = vadd.f32 %v2985, %v3145
    %v3147 = vpop.f32.mrb[0].mxu0
    %v3148 = vpop.f32.mrb[0].mxu0
    %v3149 = vadd.f32 %v2988, %v3148
    %v3150 = vpop.f32.mrb[0].mxu0
    %3151 = vmatprep.mubr.bf16.mxu0 0
    %3152 = vmatmul.mubr.bf16.gmra.mrb[0].mxu0 %v1130
    %v3153 = vpop.f32.mrb[0].mxu0
    %v3154 = vadd.f32 %v2993, %v3153
    %v3155 = vpop.f32.mrb[0].mxu0
    %v3156 = vpop.f32.mrb[0].mxu0
    %v3157 = vadd.f32 %v2996, %v3156
    %v3158 = vpop.f32.mrb[0].mxu0
    %3159 = vmatprep.mubr.bf16.mxu0 0
    %3160 = vmatmul.mubr.bf16.gmra.mrb[0].mxu0 %v1143
    %v3161 = vpop.f32.mrb[0].mxu0
    %v3162 = vadd.f32 %v3001, %v3161
    %v3163 = vpop.f32.mrb[0].mxu0
    %v3164 = vpop.f32.mrb[0].mxu0
    %v3165 = vadd.f32 %v3004, %v3164
    %v3166 = vpop.f32.mrb[0].mxu0
    %3167 = vmatprep.mubr.bf16.mxu0 0
    %3168 = vmatmul.mubr.bf16.gmra.mrb[0].mxu0 %v1156
    %v3169 = vpop.f32.mrb[0].mxu0
    %v3170 = vadd.f32 %v3009, %v3169
    %v3171 = vpop.f32.mrb[0].mxu0
    %v3172 = vpop.f32.mrb[0].mxu0
    %v3173 = vadd.f32 %v3012, %v3172
    %v3174 = vpop.f32.mrb[0].mxu0
    %3175 = vmatprep.mubr.bf16.mxu0 0
    %3176 = vmatmul.mubr.bf16.gmra.mrb[0].mxu0 %v1169
    %v3177 = vpop.f32.mrb[0].mxu0
    %v3178 = vadd.f32 %v3017, %v3177
    %v3179 = vpop.f32.mrb[0].mxu0
    %v3180 = vpop.f32.mrb[0].mxu0
    %v3181 = vadd.f32 %v3020, %v3180
    %v3182 = vpop.f32.mrb[0].mxu0
    %3183 = vmatprep.mubr.bf16.mxu0 0
    %3184 = vmatmul.mubr.bf16.gmra.mrb[0].mxu0 %v1182
    %v3185 = vpop.f32.mrb[0].mxu0
    %v3186 = vadd.f32 %v3025, %v3185
    %v3187 = vpop.f32.mrb[0].mxu0
    %v3188 = vpop.f32.mrb[0].mxu0
    %v3189 = vadd.f32 %v3028, %v3188
    %v3190 = vpop.f32.mrb[0].mxu0
    %3191 = vmatprep.mubr.bf16.mxu0 0
    %3192 = vmatmul.mubr.bf16.gmra.mrb[0].mxu0 %v1195
    %v3193 = vpop.f32.mrb[0].mxu0
    %v3194 = vadd.f32 %v3033, %v3193
    %v3195 = vpop.f32.mrb[0].mxu0
    %v3196 = vpop.f32.mrb[0].mxu0
    %v3197 = vadd.f32 %v3036, %v3196
    %v3198 = vpop.f32.mrb[0].mxu0
    %3199 = vmatprep.mubr.bf16.mxu0 0
    %3200 = vmatmul.mubr.bf16.gmra.mrb[0].mxu0 %v1208
    %v3201 = vpop.f32.mrb[0].mxu0
    %v3202 = vadd.f32 %v3041, %v3201
    %v3203 = vpop.f32.mrb[0].mxu0
    %v3204 = vpop.f32.mrb[0].mxu0
    %v3205 = vadd.f32 %v3044, %v3204
    %v3206 = vpop.f32.mrb[0].mxu0
    %3207 = vmatprep.mubr.bf16.mxu0 0
    %3208 = vmatmul.mubr.bf16.gmra.mrb[0].mxu0 %v1221
    %v3209 = vpop.f32.mrb[0].mxu0
    %v3210 = vadd.f32 %v3049, %v3209
    %v3211 = vpop.f32.mrb[0].mxu0
    %v3212 = vpop.f32.mrb[0].mxu0
    %v3213 = vadd.f32 %v3052, %v3212
    %v3214 = vpop.f32.mrb[0].mxu0
    %3215 = vmatprep.mubr.bf16.mxu0 0
    %3216 = vmatmul.mubr.bf16.gmra.mrb[0].mxu0 %v1234
    %v3217 = vpop.f32.mrb[0].mxu0
    %v3218 = vadd.f32 %v3057, %v3217
    %v3219 = vpop.f32.mrb[0].mxu0
    %v3220 = vpop.f32.mrb[0].mxu0
    %v3221 = vadd.f32 %v3060, %v3220
    %v3222 = vpop.f32.mrb[0].mxu0
    %3223 = vmatprep.mubr.bf16.mxu0 0
    %3224 = vmatmul.mubr.bf16.gmra.mrb[0].mxu0 %v1247
    %v3225 = vpop.f32.mrb[0].mxu0
    %v3226 = vadd.f32 %v3065, %v3225
    %v3227 = vpop.f32.mrb[0].mxu0
    %v3228 = vpop.f32.mrb[0].mxu0
    %v3229 = vadd.f32 %v3068, %v3228
    %v3230 = vpop.f32.mrb[0].mxu0
    %3231 = vmatprep.mubr.bf16.mxu0 0
    %3232 = vmatmul.mubr.bf16.gmra.mrb[0].mxu0 %v1260
    %v3233 = vpop.f32.mrb[0].mxu0
    %v3234 = vadd.f32 %v3073, %v3233
    %v3235 = vpop.f32.mrb[0].mxu0
    %v3236 = vpop.f32.mrb[0].mxu0
    %v3237 = vadd.f32 %v3076, %v3236
    %v3238 = vpop.f32.mrb[0].mxu0
    %3239 = vmatprep.mubr.bf16.mxu0 0
    %3240 = vmatmul.mubr.bf16.gmra.mrb[0].mxu0 %v1273
    %v3241 = vpop.f32.mrb[0].mxu0
    %v3242 = vadd.f32 %v3081, %v3241
    %v3243 = vpop.f32.mrb[0].mxu0
    %v3244 = vpop.f32.mrb[0].mxu0
    %v3245 = vadd.f32 %v3084, %v3244
    %v3246 = vpop.f32.mrb[0].mxu0
    %3247 = vmatprep.mubr.bf16.mxu0 0
    %3248 = vmatmul.mubr.bf16.gmra.mrb[0].mxu0 %v1286
    %v3249 = vpop.f32.mrb[0].mxu0
    %v3250 = vadd.f32 %v3089, %v3249
    %v3251 = vpop.f32.mrb[0].mxu0
    %v3252 = vpop.f32.mrb[0].mxu0
    %v3253 = vadd.f32 %v3092, %v3252
    %v3254 = vpop.f32.mrb[0].mxu0
    %3255 = vmatprep.mubr.bf16.mxu0 0
    %3256 = vmatmul.mubr.bf16.gmra.mrb[0].mxu0 %v1299
    %v3257 = vpop.f32.mrb[0].mxu0
    %v3258 = vadd.f32 %v3097, %v3257
    %v3259 = vpop.f32.mrb[0].mxu0
    %v3260 = vpop.f32.mrb[0].mxu0
    %v3261 = vadd.f32 %v3100, %v3260
    %v3262 = vpop.f32.mrb[0].mxu0
    %3263 = vmatprep.mubr.bf16.mxu0 0
    %3264 = vmatmul.mubr.bf16.gmra.mrb[0].mxu0 %v1312
    %v3265 = vpop.f32.mrb[0].mxu0
    %v3266 = vadd.f32 %v3105, %v3265
    %v3267 = vpop.f32.mrb[0].mxu0
    %v3268 = vpop.f32.mrb[0].mxu0
    %v3269 = vadd.f32 %v3108, %v3268
    %v3270 = vpop.f32.mrb[0].mxu0
    %3271 = vdwg.mxu0
    %v3272 = vld [vmem:[%s2] sm:$0x1]
    %v3274 = vlaneseq
    %v3275 = vshrl.u32 %v3274, 7
    %v3276 = vsub.s32 0, %v3275
    %v3277 = vrot.slane %v3272, %v3276
    %v3279 = vmul.f32 %v3146, %v3277
    %v3280 = vmul.f32 %v3149, %v3277
    %v3281 = vmul.f32 %v3154, %v3277
    %v3282 = vmul.f32 %v3157, %v3277
    %v3283 = vmul.f32 %v3162, %v3277
    %v3284 = vmul.f32 %v3165, %v3277
    %v3285 = vmul.f32 %v3170, %v3277
    %v3286 = vmul.f32 %v3173, %v3277
    %v3287 = vmul.f32 %v3178, %v3277
    %v3288 = vmul.f32 %v3181, %v3277
    %v3289 = vmul.f32 %v3186, %v3277
    %v3290 = vmul.f32 %v3189, %v3277
    %v3291 = vmul.f32 %v3194, %v3277
    %v3292 = vmul.f32 %v3197, %v3277
    %v3293 = vmul.f32 %v3202, %v3277
    %v3294 = vmul.f32 %v3205, %v3277
    %v3295 = vmul.f32 %v3210, %v3277
    %v3296 = vmul.f32 %v3213, %v3277
    %v3297 = vmul.f32 %v3218, %v3277
    %v3298 = vmul.f32 %v3221, %v3277
    %v3299 = vmul.f32 %v3226, %v3277
    %v3300 = vmul.f32 %v3229, %v3277
    %v3301 = vmul.f32 %v3234, %v3277
    %v3302 = vmul.f32 %v3237, %v3277
    %v3303 = vmul.f32 %v3242, %v3277
    %v3304 = vmul.f32 %v3245, %v3277
    %v3305 = vmul.f32 %v3250, %v3277
    %v3306 = vmul.f32 %v3253, %v3277
    %v3307 = vmul.f32 %v3258, %v3277
    %v3308 = vmul.f32 %v3261, %v3277
    %v3309 = vmul.f32 %v3266, %v3277
    %v3310 = vmul.f32 %v3269, %v3277
    %v3311 = vld [vmem:[%s3] sm:$0x1]
    %v3313 = vlaneseq
    %v3314 = vshrl.u32 %v3313, 7
    %v3315 = vsub.s32 0, %v3314
    %v3316 = vrot.slane %v3311, %v3315
    %v3318 = vadd.f32 %v3279, %v3316
    %v3319 = vadd.f32 %v3280, %v3316
    %v3320 = vadd.f32 %v3281, %v3316
    %v3321 = vadd.f32 %v3282, %v3316
    %v3322 = vadd.f32 %v3283, %v3316
    %v3323 = vadd.f32 %v3284, %v3316
    %v3324 = vadd.f32 %v3285, %v3316
    %v3325 = vadd.f32 %v3286, %v3316
    %v3326 = vadd.f32 %v3287, %v3316
    %v3327 = vadd.f32 %v3288, %v3316
    %v3328 = vadd.f32 %v3289, %v3316
    %v3329 = vadd.f32 %v3290, %v3316
    %v3330 = vadd.f32 %v3291, %v3316
    %v3331 = vadd.f32 %v3292, %v3316
    %v3332 = vadd.f32 %v3293, %v3316
    %v3333 = vadd.f32 %v3294, %v3316
    %v3334 = vadd.f32 %v3295, %v3316
    %v3335 = vadd.f32 %v3296, %v3316
    %v3336 = vadd.f32 %v3297, %v3316
    %v3337 = vadd.f32 %v3298, %v3316
    %v3338 = vadd.f32 %v3299, %v3316
    %v3339 = vadd.f32 %v3300, %v3316
    %v3340 = vadd.f32 %v3301, %v3316
    %v3341 = vadd.f32 %v3302, %v3316
    %v3342 = vadd.f32 %v3303, %v3316
    %v3343 = vadd.f32 %v3304, %v3316
    %v3344 = vadd.f32 %v3305, %v3316
    %v3345 = vadd.f32 %v3306, %v3316
    %v3346 = vadd.f32 %v3307, %v3316
    %v3347 = vadd.f32 %v3308, %v3316
    %v3348 = vadd.f32 %v3309, %v3316
    %v3349 = vadd.f32 %v3310, %v3316
    %v3350 = vmax.f32 %v3318, 0.0
    %v3351 = vmax.f32 %v3319, 0.0
    %v3352 = vmax.f32 %v3320, 0.0
    %v3353 = vmax.f32 %v3321, 0.0
    %v3354 = vmax.f32 %v3322, 0.0
    %v3355 = vmax.f32 %v3323, 0.0
    %v3356 = vmax.f32 %v3324, 0.0
    %v3357 = vmax.f32 %v3325, 0.0
    %v3358 = vmax.f32 %v3326, 0.0
    %v3359 = vmax.f32 %v3327, 0.0
    %v3360 = vmax.f32 %v3328, 0.0
    %v3361 = vmax.f32 %v3329, 0.0
    %v3362 = vmax.f32 %v3330, 0.0
    %v3363 = vmax.f32 %v3331, 0.0
    %v3364 = vmax.f32 %v3332, 0.0
    %v3365 = vmax.f32 %v3333, 0.0
    %v3366 = vmax.f32 %v3334, 0.0
    %v3367 = vmax.f32 %v3335, 0.0
    %v3368 = vmax.f32 %v3336, 0.0
    %v3369 = vmax.f32 %v3337, 0.0
    %v3370 = vmax.f32 %v3338, 0.0
    %v3371 = vmax.f32 %v3339, 0.0
    %v3372 = vmax.f32 %v3340, 0.0
    %v3373 = vmax.f32 %v3341, 0.0
    %v3374 = vmax.f32 %v3342, 0.0
    %v3375 = vmax.f32 %v3343, 0.0
    %v3376 = vmax.f32 %v3344, 0.0
    %v3377 = vmax.f32 %v3345, 0.0
    %v3378 = vmax.f32 %v3346, 0.0
    %v3379 = vmax.f32 %v3347, 0.0
    %v3380 = vmax.f32 %v3348, 0.0
    %v3381 = vmax.f32 %v3349, 0.0
    %v3382 = vld [vmem:[#allocation2] sm:$0x3]
    %v3383 = vld [vmem:[%s4] sm:$0xf]
    %v3386 = vunpack.c.l.s4 1983009808
    %v3387 = vunpack.c.0.s8 %v3386
    %v3388 = vlaneseq
    %v3389 = vshrl.u32 %v3388, 7
    %v3390 = vsub.s32 %v3387, %v3389
    %v3391 = vrot.slane %v3383, %v3390
    %v3392 = vcombine.high %v3391, %v3391
    %3395 = vmatprep.subr.mxu0 0.0
    %3396 = vmatpush1.msra.mxu0 %v3350
    %3397 = vmatprep.subr.mxu0 0.0
    %3398 = vmatpush1.msra.mxu0 %v3351
    %3399 = vmatprep.subr.mxu0 0.0
    %3400 = vmatpush1.msra.mxu0 %v3352
    %3401 = vmatprep.subr.mxu0 0.0
    %3402 = vmatpush1.msra.mxu0 %v3353
    %3403 = vmatprep.subr.mxu0 0.0
    %3404 = vmatpush1.msra.mxu0 %v3354
    %3405 = vmatprep.subr.mxu0 0.0
    %3406 = vmatpush1.msra.mxu0 %v3355
    %3407 = vmatprep.subr.mxu0 0.0
    %3408 = vmatpush1.msra.mxu0 %v3356
    %3409 = vmatprep.subr.mxu0 0.0
    %3410 = vmatpush1.msra.mxu0 %v3357
    %3411 = vmatprep.subr.mxu0 0.0
    %3412 = vmatpush1.msra.mxu0 %v3358
    %3413 = vmatprep.subr.mxu0 0.0
    %3414 = vmatpush1.msra.mxu0 %v3359
    %3415 = vmatprep.subr.mxu0 0.0
    %3416 = vmatpush1.msra.mxu0 %v3360
    %3417 = vmatprep.subr.mxu0 0.0
    %3418 = vmatpush1.msra.mxu0 %v3361
    %3419 = vmatprep.subr.mxu0 0.0
    %3420 = vmatpush1.msra.mxu0 %v3362
    %3421 = vmatprep.subr.mxu0 0.0
    %3422 = vmatpush1.msra.mxu0 %v3363
    %3423 = vmatprep.subr.mxu0 0.0
    %3424 = vmatpush1.msra.mxu0 %v3364
    %3425 = vmatprep.subr.mxu0 0.0
    %3426 = vmatpush1.msra.mxu0 %v3365
    %3427 = vmatprep.subr.mxu0 0.0
    %3428 = vmatpush1.msra.mxu0 %v3366
    %3429 = vmatprep.subr.mxu0 0.0
    %3430 = vmatpush1.msra.mxu0 %v3367
    %3431 = vmatprep.subr.mxu0 0.0
    %3432 = vmatpush1.msra.mxu0 %v3368
    %3433 = vmatprep.subr.mxu0 0.0
    %3434 = vmatpush1.msra.mxu0 %v3369
    %3435 = vmatprep.subr.mxu0 0.0
    %3436 = vmatpush1.msra.mxu0 %v3370
    %3437 = vmatprep.subr.mxu0 0.0
    %3438 = vmatpush1.msra.mxu0 %v3371
    %3439 = vmatprep.subr.mxu0 0.0
    %3440 = vmatpush1.msra.mxu0 %v3372
    %3441 = vmatprep.subr.mxu0 0.0
    %3442 = vmatpush1.msra.mxu0 %v3373
    %3443 = vmatprep.subr.mxu0 0.0
    %3444 = vmatpush1.msra.mxu0 %v3374
    %3445 = vmatprep.subr.mxu0 0.0
    %3446 = vmatpush1.msra.mxu0 %v3375
    %3447 = vmatprep.subr.mxu0 0.0
    %3448 = vmatpush1.msra.mxu0 %v3376
    %3449 = vmatprep.subr.mxu0 0.0
    %3450 = vmatpush1.msra.mxu0 %v3377
    %3451 = vmatprep.subr.mxu0 0.0
    %3452 = vmatpush1.msra.mxu0 %v3378
    %3453 = vmatprep.subr.mxu0 0.0
    %3454 = vmatpush1.msra.mxu0 %v3379
    %3455 = vmatprep.subr.mxu0 0.0
    %3456 = vmatpush1.msra.mxu0 %v3380
    %3457 = vmatprep.subr.mxu0 0.0
    %3458 = vmatpush1.msra.mxu0 %v3381
    %3459 = vmatprep.mubr.f32.mxu0 %v3392
    %3460 = vmatmul.mubr.f32.gmra.mrb[0].mxu0 %v3391
    %v3461 = vpop.f32.mrb[0].mxu0
    %v3462 = vadd.f32 0.0, %v3461
    %v3463 = vpop.f32.mrb[0].mxu0
    %3464 = vdwg.mxu0
    %v3465 = vadd.f32 %v3382, %v3462
    %3466 = vst [vmem:[#allocation2] sm:$0x3] %v3465
    // Predicated region
    $region34: #{bcnn_forward.5} parent=1 // pred_check
      %p3467 = pneg %p28
    $region35: #{bcnn_forward.5} parent=1 // pred_check_branch
      %3469 = sbr.rel (%p3467) target = $region37
    $region36: #{bcnn_forward.5} parent=1 // pred_region
      %v3470 = vld [vmem:[#allocation2] sm:$0x3]
      %v3471 = vld [vmem:[%s5] sm:$0xff]
      %v3472 = vld [vmem:[%s5 + $0x8] sm:$0xff]
      %v3473 = vld [vmem:[%s5 + $0x10] sm:$0xff]
      %v3474 = vld [vmem:[%s5 + $0x18] sm:$0xff]
      %v3475 = vld [vmem:[%s5 + $0x20] sm:$0xff]
      %v3476 = vld [vmem:[%s5 + $0x28] sm:$0xff]
      %v3477 = vld [vmem:[%s5 + $0x30] sm:$0xff]
      %v3478 = vld [vmem:[%s5 + $0x38] sm:$0xff]
      %v3479 = vld [vmem:[%s5 + $0x40] sm:$0xff]
      %v3480 = vld [vmem:[%s5 + $0x48] sm:$0xff]
      %v3481 = vld [vmem:[%s5 + $0x50] sm:$0xff]
      %v3482 = vld [vmem:[%s5 + $0x58] sm:$0xff]
      %v3483 = vld [vmem:[%s5 + $0x60] sm:$0xff]
      %v3484 = vld [vmem:[%s5 + $0x68] sm:$0xff]
      %v3485 = vld [vmem:[%s5 + $0x70] sm:$0xff]
      %v3486 = vld [vmem:[%s5 + $0x78] sm:$0xff]
      %v3487 = vld [vmem:[%s6] sm:$0x1]
      %v3489 = vlaneseq
      %v3490 = vshrl.u32 %v3489, 7
      %v3491 = vsub.s32 0, %v3490
      %v3492 = vrot.slane %v3487, %v3491
      %3494 = vmatprep.subr.mxu0 0.0
      %3495 = vmatpush1.msra.mxu0 %v3471
      %3496 = vmatprep.subr.mxu0 0.0
      %3497 = vmatpush1.msra.mxu0 %v3472
      %3498 = vmatprep.subr.mxu0 0.0
      %3499 = vmatpush1.msra.mxu0 %v3473
      %3500 = vmatprep.subr.mxu0 0.0
      %3501 = vmatpush1.msra.mxu0 %v3474
      %3502 = vmatprep.subr.mxu0 0.0
      %3503 = vmatpush1.msra.mxu0 %v3475
      %3504 = vmatprep.subr.mxu0 0.0
      %3505 = vmatpush1.msra.mxu0 %v3476
      %3506 = vmatprep.subr.mxu0 0.0
      %3507 = vmatpush1.msra.mxu0 %v3477
      %3508 = vmatprep.subr.mxu0 0.0
      %3509 = vmatpush1.msra.mxu0 %v3478
      %3510 = vmatprep.subr.mxu0 0.0
      %3511 = vmatpush1.msra.mxu0 %v3479
      %3512 = vmatprep.subr.mxu0 0.0
      %3513 = vmatpush1.msra.mxu0 %v3480
      %3514 = vmatprep.subr.mxu0 0.0
      %3515 = vmatpush1.msra.mxu0 %v3481
      %3516 = vmatprep.subr.mxu0 0.0
      %3517 = vmatpush1.msra.mxu0 %v3482
      %3518 = vmatprep.subr.mxu0 0.0
      %3519 = vmatpush1.msra.mxu0 %v3483
      %3520 = vmatprep.subr.mxu0 0.0
      %3521 = vmatpush1.msra.mxu0 %v3484
      %3522 = vmatprep.subr.mxu0 0.0
      %3523 = vmatpush1.msra.mxu0 %v3485
      %3524 = vmatprep.subr.mxu0 0.0
      %3525 = vmatpush1.msra.mxu0 %v3486
      %3526 = vmatprep.subr.mxu0 0.0
      %3527 = vmatpush1.msra.mxu0 0.0
      %3528 = vmatprep.subr.mxu0 0.0
      %3529 = vmatpush1.msra.mxu0 0.0
      %3530 = vmatprep.subr.mxu0 0.0
      %3531 = vmatpush1.msra.mxu0 0.0
      %3532 = vmatprep.subr.mxu0 0.0
      %3533 = vmatpush1.msra.mxu0 0.0
      %3534 = vmatprep.subr.mxu0 0.0
      %3535 = vmatpush1.msra.mxu0 0.0
      %3536 = vmatprep.subr.mxu0 0.0
      %3537 = vmatpush1.msra.mxu0 0.0
      %3538 = vmatprep.subr.mxu0 0.0
      %3539 = vmatpush1.msra.mxu0 0.0
      %3540 = vmatprep.subr.mxu0 0.0
      %3541 = vmatpush1.msra.mxu0 0.0
      %3542 = vmatprep.subr.mxu0 0.0
      %3543 = vmatpush1.msra.mxu0 0.0
      %3544 = vmatprep.subr.mxu0 0.0
      %3545 = vmatpush1.msra.mxu0 0.0
      %3546 = vmatprep.subr.mxu0 0.0
      %3547 = vmatpush1.msra.mxu0 0.0
      %3548 = vmatprep.subr.mxu0 0.0
      %3549 = vmatpush1.msra.mxu0 0.0
      %3550 = vmatprep.subr.mxu0 0.0
      %3551 = vmatpush1.msra.mxu0 0.0
      %3552 = vmatprep.subr.mxu0 0.0
      %3553 = vmatpush1.msra.mxu0 0.0
      %3554 = vmatprep.subr.mxu0 0.0
      %3555 = vmatpush1.msra.mxu0 0.0
      %3556 = vmatprep.subr.mxu0 0.0
      %3557 = vmatpush1.msra.mxu0 0.0
      %3558 = vmatprep.mubr.f32.mxu0 0.0
      %3559 = vmatmul.mubr.f32.gmra.mrb[0].mxu0 %v3470
      %v3560 = vpop.f32.mrb[0].mxu0
      %v3561 = vadd.f32 %v3492, %v3560
      %v3562 = vpop.f32.mrb[0].mxu0
      %3563 = vdwg.mxu0
      %vm3564 = vcmask 9216
      %3565 = vst.msk [vmem:[#allocation3] sm:$0x3] %vm3564, %v3561
    $region37: #{bcnn_forward.5} parent=1 // pred_fallthru
      _
    // Predicated region
    $region38: #{bcnn_forward.5} parent=1 // pred_check
      _
    $region39: #{bcnn_forward.5} parent=1 // pred_check_branch
      %3567 = sbr.rel (0) target = $region41
    $region40: #{bcnn_forward.5} parent=1 // pred_region
      %s3569 = ssub.s32 32, 32
      %3570 = vsyncadd [#allocation4], %s3569
      %s3572 = sshll.u32 [#allocation3], 4
      %s3573 = int_to_ptr.vmem [resolvable:$true] %s3572
      %3575 = dma.vmem_to_hbm [thread:$0]  %s3573, 32, %s7, [#allocation4]
    $region41: #{bcnn_forward.5} parent=1 // pred_fallthru
      _
    // Predicated region
    $region42: #{bcnn_forward.5} parent=1 // pred_check
      _
    $region43: #{bcnn_forward.5} parent=1 // pred_check_branch
      %3577 = sbr.rel (0) target = $region45
    $region44: #{bcnn_forward.5} parent=1 // pred_region
      %3578 = dma.done [#allocation4], 32
    $region45: #{bcnn_forward.5} parent=1 // pred_fallthru
      _
    %3579 = vsyncpa [#allocation4], 1

</llo_original>
